<compile_context>
chip_gen: v5e
topology: v5e:2x2
jax: 0.10.0
libtpu: 0.0.40
codegen_flags: <defaults>
</compile_context>

<pallas_src>
import jax
import jax.numpy as jnp
from jax.experimental import pallas as pl
from jax.experimental.pallas import tpu as pltpu


# ----------------------------------------------------------------------------
# Small helpers
# ----------------------------------------------------------------------------
def _round_up(x, m):
    return ((x + m - 1) // m) * m


def _elu(x):
    # ELU(alpha=1): x if x > 0 else exp(x) - 1.  Clamp the exp argument so the
    # unselected branch never produces inf.
    return jnp.where(x > 0.0, x, jnp.exp(jnp.minimum(x, 0.0)) - 1.0)


# ----------------------------------------------------------------------------
# Fused MLP kernel: reward = fc4(elu(fc3(elu(fc2(elu(fc1([s, r])))))))
# All matmuls run on the MXU with bf16 inputs and f32 accumulation.
# ----------------------------------------------------------------------------
def _reward_mlp_kernel(x_ref,
                       w1_ref, b1_ref,
                       w2_ref, b2_ref,
                       w3_ref, b3_ref,
                       w4_ref, b4_ref,
                       o_ref):
    h = _elu(jnp.dot(x_ref[...], w1_ref[...], preferred_element_type=jnp.float32)
             + b1_ref[...]).astype(w2_ref.dtype)
    h = _elu(jnp.dot(h, w2_ref[...], preferred_element_type=jnp.float32)
             + b2_ref[...]).astype(w3_ref.dtype)
    h = _elu(jnp.dot(h, w3_ref[...], preferred_element_type=jnp.float32)
             + b3_ref[...]).astype(w4_ref.dtype)
    # fc4 is padded to 128 output columns (column 0 is the real reward) so the
    # final store is lane-dense / unmasked.
    o_ref[...] = (jnp.dot(h, w4_ref[...], preferred_element_type=jnp.float32)
                  + b4_ref[...]).astype(o_ref.dtype)


# ----------------------------------------------------------------------------
# One-time weight staging (call OUTSIDE the jitted forward).
# ----------------------------------------------------------------------------
def prepare_params(params, *, compute_dtype=jnp.bfloat16):
    """Pre-split/cast/pad the PyTorch-style params once.

    - fc1 weight stays stacked in concat order, K padded to a multiple of 128.
    - Hidden dim padded 400 -> 512 with zeros (exact: ELU(0)=0, zero weights).
    - fc4 padded to 128 output columns for a lane-dense output store.
    - Weights bf16 (MXU inputs), biases f32 (added to the f32 accumulator).
    """
    w1 = jnp.asarray(params["w1"], jnp.float32)      # (K, H)
    K, H = w1.shape
    Kp = _round_up(K, 128)
    Hp = _round_up(H, 128)
    NOUT = 128

    def pad2(a, rows, cols):
        return jnp.pad(a, ((0, rows - a.shape[0]), (0, cols - a.shape[1])))

    f32 = jnp.float32
    return {
        "w1": pad2(w1, Kp, Hp).astype(compute_dtype),                         # (Kp, Hp)
        "b1": pad2(params["b1"].reshape(1, H).astype(f32), 1, Hp),            # (1, Hp)
        "w2": pad2(params["w2"].astype(f32), Hp, Hp).astype(compute_dtype),   # (Hp, Hp)
        "b2": pad2(params["b2"].reshape(1, H).astype(f32), 1, Hp),
        "w3": pad2(params["w3"].astype(f32), Hp, Hp).astype(compute_dtype),
        "b3": pad2(params["b3"].reshape(1, H).astype(f32), 1, Hp),
        "w4": pad2(params["w4"].astype(f32), Hp, NOUT).astype(compute_dtype), # (Hp, 128)
        "b4": pad2(params["b4"].reshape(1, 1).astype(f32), 1, NOUT),          # (1, 128)
    }


# ----------------------------------------------------------------------------
# Batch-tile policy (review): 16-row grain (bf16 packs 16 sublanes/vreg),
# small padding, >= 2 grid tiles whenever there is enough work so v7x's second
# TensorCore gets a shard; cap 512 keeps v5e's single vector-store slot happy.
# ----------------------------------------------------------------------------
def _choose_batch_tile(B, *, cap=512, grain=16):
    Bp = _round_up(max(B, grain), grain)
    if Bp <= 2 * grain:                      # tiny batch: one tile, no blowup
        return Bp, Bp
    n_tiles = max(2, -(-Bp // cap))          # >=2 tiles, each <= cap (approx)
    bm = _round_up(-(-Bp // n_tiles), grain)
    return bm, bm * n_tiles


# ----------------------------------------------------------------------------
# Forward
# ----------------------------------------------------------------------------
def reward_forward(state, rnn_hidden, staged, *, compute_dtype=jnp.bfloat16):
    """Pallas-backed RewardModel forward.

    state: (B, Ds) f32, rnn_hidden: (B, Dr) f32, staged: prepare_params(...).
    Returns (B, 1) f32 reward.
    """
    B, sd = state.shape
    B2, rd = rnn_hidden.shape
    assert B == B2, (B, B2)
    Kp, Hp = staged["w1"].shape
    NOUT = staged["w4"].shape[1]

    bm, Bp = _choose_batch_tile(B)

    # Cheap per-call input staging: concat + cast + pad (bytes << weight bytes).
    x = jnp.concatenate([state, rnn_hidden], axis=1).astype(compute_dtype)
    x = jnp.pad(x, ((0, Bp - B), (0, Kp - (sd + rd))))

    # Resident (constant-index) block for weights/biases: DMA'd once.
    full = lambda shape: pl.BlockSpec(shape, lambda i: (0, 0))

    out = pl.pallas_call(
        _reward_mlp_kernel,
        out_shape=jax.ShapeDtypeStruct((Bp, NOUT), jnp.float32),
        grid_spec=pltpu.PrefetchScalarGridSpec(
            num_scalar_prefetch=0,
            grid=(Bp // bm,),
            in_specs=[
                pl.BlockSpec((bm, Kp), lambda i: (i, 0)),   # [state|rnn] tile
                full((Kp, Hp)), full((1, Hp)),              # fc1
                full((Hp, Hp)), full((1, Hp)),              # fc2
                full((Hp, Hp)), full((1, Hp)),              # fc3
                full((Hp, NOUT)), full((1, NOUT)),          # fc4 (lane-padded)
            ],
            out_specs=pl.BlockSpec((bm, NOUT), lambda i: (i, 0)),
        ),
        compiler_params=pltpu.CompilerParams(
            dimension_semantics=("parallel",),     # batch tiles -> megacore/2-TC
            vmem_limit_bytes=32 * 1024 * 1024,     # portable (v7x: 64 MiB phys)
        ),
    )(x, staged["w1"], staged["b1"], staged["w2"], staged["b2"],
      staged["w3"], staged["b3"], staged["w4"], staged["b4"])

    return out[:B, :1]


# ----------------------------------------------------------------------------
# Deterministic PyTorch-style parameter init (uniform +-1/sqrt(fan_in)).
# Weights stored as (fan_in, fan_out) for x @ W.
# ----------------------------------------------------------------------------
def init_params(key, state_dim, rnn_hidden_dim, hidden_dim=400):
    def linear(k, fan_in, fan_out):
        kw, kb = jax.random.split(k)
        bound = 1.0 / jnp.sqrt(fan_in)
        w_pt = jax.random.uniform(kw, (fan_out, fan_in), jnp.float32, -bound, bound)
        b = jax.random.uniform(kb, (fan_out,), jnp.float32, -bound, bound)
        return jnp.transpose(w_pt), b

    k1, k2, k3, k4 = jax.random.split(key, 4)
    w1, b1 = linear(k1, state_dim + rnn_hidden_dim, hidden_dim)
    w2, b2 = linear(k2, hidden_dim, hidden_dim)
    w3, b3 = linear(k3, hidden_dim, hidden_dim)
    w4, b4 = linear(k4, hidden_dim, 1)
    return dict(w1=w1, b1=b1, w2=w2, b2=b2, w3=w3, b3=b3, w4=w4, b4=b4)


def reference_forward(state, rnn_hidden, params):
    """Pure-JAX f32 reference matching the PyTorch module."""
    x = jnp.concatenate([state, rnn_hidden], axis=1)
    h = jax.nn.elu(x @ params["w1"] + params["b1"])
    h = jax.nn.elu(h @ params["w2"] + params["b2"])
    h = jax.nn.elu(h @ params["w3"] + params["b3"])
    return h @ params["w4"] + params["b4"].reshape(1, 1)


if __name__ == "__main__":
    key = jax.random.PRNGKey(0)
    kp, ks, kr = jax.random.split(key, 3)

    B, state_dim, rnn_hidden_dim, hidden_dim = 64, 30, 200, 400
    params = init_params(kp, state_dim, rnn_hidden_dim, hidden_dim)
    staged = prepare_params(params)                 # one-time, outside jit
    state = jax.random.normal(ks, (B, state_dim), jnp.float32)
    rnn_hidden = jax.random.normal(kr, (B, rnn_hidden_dim), jnp.float32)

    fwd = jax.jit(reward_forward)
    out = jax.block_until_ready(fwd(state, rnn_hidden, staged))

    assert out.shape == (B, 1), out.shape
    assert bool(jnp.all(jnp.isfinite(out)))

    ref = reference_forward(state, rnn_hidden, params)
    max_err = float(jnp.max(jnp.abs(out - ref)))
    assert max_err < 5e-2, f"max abs err {max_err}"  # bf16 MXU inputs, f32 accumulation

    print("KERNEL_OK")
</pallas_src>

<mosaic_0001>
module attributes {stable_mosaic.version = 11 : i64} {
  func.func @_reward_mlp_kernel(%arg0: i32, %arg1: memref<32x256xbf16, #tpu.memory_space<vmem>>, %arg2: memref<256x512xbf16, #tpu.memory_space<vmem>>, %arg3: memref<1x512xf32, #tpu.memory_space<vmem>>, %arg4: memref<512x512xbf16, #tpu.memory_space<vmem>>, %arg5: memref<1x512xf32, #tpu.memory_space<vmem>>, %arg6: memref<512x512xbf16, #tpu.memory_space<vmem>>, %arg7: memref<1x512xf32, #tpu.memory_space<vmem>>, %arg8: memref<512x128xbf16, #tpu.memory_space<vmem>>, %arg9: memref<1x128xf32, #tpu.memory_space<vmem>>, %arg10: memref<32x128xf32, #tpu.memory_space<vmem>>) attributes {dimension_semantics = [#tpu.dimension_semantics<parallel>], iteration_bounds = array<i64: 2>, scalar_prefetch = 0 : i64, scratch_operands = 0 : i64, tpu.core_type = #tpu.core_type<tc>, window_params = [{transform_indices = @transform_0, window_bounds = array<i64: 32, 256>}, {pipeline_mode = #tpu.pipeline_mode<synchronous>, transform_indices = @transform_1, window_bounds = array<i64: 256, 512>}, {pipeline_mode = #tpu.pipeline_mode<synchronous>, transform_indices = @transform_2, window_bounds = array<i64: 1, 512>}, {pipeline_mode = #tpu.pipeline_mode<synchronous>, transform_indices = @transform_3, window_bounds = array<i64: 512, 512>}, {pipeline_mode = #tpu.pipeline_mode<synchronous>, transform_indices = @transform_4, window_bounds = array<i64: 1, 512>}, {pipeline_mode = #tpu.pipeline_mode<synchronous>, transform_indices = @transform_5, window_bounds = array<i64: 512, 512>}, {pipeline_mode = #tpu.pipeline_mode<synchronous>, transform_indices = @transform_6, window_bounds = array<i64: 1, 512>}, {pipeline_mode = #tpu.pipeline_mode<synchronous>, transform_indices = @transform_7, window_bounds = array<i64: 512, 128>}, {pipeline_mode = #tpu.pipeline_mode<synchronous>, transform_indices = @transform_8, window_bounds = array<i64: 1, 128>}, {transform_indices = @transform_9, window_bounds = array<i64: 32, 128>}]} {
    %c0 = arith.constant 0 : index
    %c0_0 = arith.constant 0 : index
    %0 = vector.load %arg1[%c0, %c0_0] : memref<32x256xbf16, #tpu.memory_space<vmem>>, vector<32x256xbf16>
    %c0_1 = arith.constant 0 : index
    %c0_2 = arith.constant 0 : index
    %1 = vector.load %arg2[%c0_1, %c0_2] : memref<256x512xbf16, #tpu.memory_space<vmem>>, vector<256x512xbf16>
    %cst = arith.constant dense<0.000000e+00> : vector<32x512xf32>
    %2 = tpu.matmul %0, %1, %cst {dimension_numbers = #tpu.dot_dimension_numbers<[1], [0], [0], [1], [0, 0, 1, 1], [], []>} : vector<32x256xbf16>, vector<256x512xbf16>, vector<32x512xf32> -> vector<32x512xf32>
    %c0_3 = arith.constant 0 : index
    %c0_4 = arith.constant 0 : index
    %3 = vector.load %arg3[%c0_3, %c0_4] : memref<1x512xf32, #tpu.memory_space<vmem>>, vector<1x512xf32>
    %4 = vector.broadcast %3 : vector<1x512xf32> to vector<32x512xf32>
    %5 = arith.addf %2, %4 : vector<32x512xf32>
    %cst_5 = arith.constant 0.000000e+00 : f32
    %6 = vector.broadcast %cst_5 : f32 to vector<32x512xf32>
    %7 = arith.cmpf ogt, %5, %6 : vector<32x512xf32>
    %cst_6 = arith.constant 0.000000e+00 : f32
    %8 = vector.broadcast %cst_6 : f32 to vector<32x512xf32>
    %9 = arith.minimumf %5, %8 : vector<32x512xf32>
    %10 = math.exp %9 : vector<32x512xf32>
    %cst_7 = arith.constant 1.000000e+00 : f32
    %11 = vector.broadcast %cst_7 : f32 to vector<32x512xf32>
    %12 = arith.subf %10, %11 : vector<32x512xf32>
    %13 = arith.select %7, %5, %12 : vector<32x512xi1>, vector<32x512xf32>
    %14 = arith.truncf %13 : vector<32x512xf32> to vector<32x512xbf16>
    %c0_8 = arith.constant 0 : index
    %c0_9 = arith.constant 0 : index
    %15 = vector.load %arg4[%c0_8, %c0_9] : memref<512x512xbf16, #tpu.memory_space<vmem>>, vector<512x512xbf16>
    %cst_10 = arith.constant dense<0.000000e+00> : vector<32x512xf32>
    %16 = tpu.matmul %14, %15, %cst_10 {dimension_numbers = #tpu.dot_dimension_numbers<[1], [0], [0], [1], [0, 0, 1, 1], [], []>} : vector<32x512xbf16>, vector<512x512xbf16>, vector<32x512xf32> -> vector<32x512xf32>
    %c0_11 = arith.constant 0 : index
    %c0_12 = arith.constant 0 : index
    %17 = vector.load %arg5[%c0_11, %c0_12] : memref<1x512xf32, #tpu.memory_space<vmem>>, vector<1x512xf32>
    %18 = vector.broadcast %17 : vector<1x512xf32> to vector<32x512xf32>
    %19 = arith.addf %16, %18 : vector<32x512xf32>
    %cst_13 = arith.constant 0.000000e+00 : f32
    %20 = vector.broadcast %cst_13 : f32 to vector<32x512xf32>
    %21 = arith.cmpf ogt, %19, %20 : vector<32x512xf32>
    %cst_14 = arith.constant 0.000000e+00 : f32
    %22 = vector.broadcast %cst_14 : f32 to vector<32x512xf32>
    %23 = arith.minimumf %19, %22 : vector<32x512xf32>
    %24 = math.exp %23 : vector<32x512xf32>
    %cst_15 = arith.constant 1.000000e+00 : f32
    %25 = vector.broadcast %cst_15 : f32 to vector<32x512xf32>
    %26 = arith.subf %24, %25 : vector<32x512xf32>
    %27 = arith.select %21, %19, %26 : vector<32x512xi1>, vector<32x512xf32>
    %28 = arith.truncf %27 : vector<32x512xf32> to vector<32x512xbf16>
    %c0_16 = arith.constant 0 : index
    %c0_17 = arith.constant 0 : index
    %29 = vector.load %arg6[%c0_16, %c0_17] : memref<512x512xbf16, #tpu.memory_space<vmem>>, vector<512x512xbf16>
    %cst_18 = arith.constant dense<0.000000e+00> : vector<32x512xf32>
    %30 = tpu.matmul %28, %29, %cst_18 {dimension_numbers = #tpu.dot_dimension_numbers<[1], [0], [0], [1], [0, 0, 1, 1], [], []>} : vector<32x512xbf16>, vector<512x512xbf16>, vector<32x512xf32> -> vector<32x512xf32>
    %c0_19 = arith.constant 0 : index
    %c0_20 = arith.constant 0 : index
    %31 = vector.load %arg7[%c0_19, %c0_20] : memref<1x512xf32, #tpu.memory_space<vmem>>, vector<1x512xf32>
    %32 = vector.broadcast %31 : vector<1x512xf32> to vector<32x512xf32>
    %33 = arith.addf %30, %32 : vector<32x512xf32>
    %cst_21 = arith.constant 0.000000e+00 : f32
    %34 = vector.broadcast %cst_21 : f32 to vector<32x512xf32>
    %35 = arith.cmpf ogt, %33, %34 : vector<32x512xf32>
    %cst_22 = arith.constant 0.000000e+00 : f32
    %36 = vector.broadcast %cst_22 : f32 to vector<32x512xf32>
    %37 = arith.minimumf %33, %36 : vector<32x512xf32>
    %38 = math.exp %37 : vector<32x512xf32>
    %cst_23 = arith.constant 1.000000e+00 : f32
    %39 = vector.broadcast %cst_23 : f32 to vector<32x512xf32>
    %40 = arith.subf %38, %39 : vector<32x512xf32>
    %41 = arith.select %35, %33, %40 : vector<32x512xi1>, vector<32x512xf32>
    %42 = arith.truncf %41 : vector<32x512xf32> to vector<32x512xbf16>
    %c0_24 = arith.constant 0 : index
    %c0_25 = arith.constant 0 : index
    %43 = vector.load %arg8[%c0_24, %c0_25] : memref<512x128xbf16, #tpu.memory_space<vmem>>, vector<512x128xbf16>
    %cst_26 = arith.constant dense<0.000000e+00> : vector<32x128xf32>
    %44 = tpu.matmul %42, %43, %cst_26 {dimension_numbers = #tpu.dot_dimension_numbers<[1], [0], [0], [1], [0, 0, 1, 1], [], []>} : vector<32x512xbf16>, vector<512x128xbf16>, vector<32x128xf32> -> vector<32x128xf32>
    %c0_27 = arith.constant 0 : index
    %c0_28 = arith.constant 0 : index
    %45 = vector.load %arg9[%c0_27, %c0_28] : memref<1x128xf32, #tpu.memory_space<vmem>>, vector<1x128xf32>
    %46 = vector.broadcast %45 : vector<1x128xf32> to vector<32x128xf32>
    %47 = arith.addf %44, %46 : vector<32x128xf32>
    %c0_29 = arith.constant 0 : index
    %c0_30 = arith.constant 0 : index
    %48 = vector.load %arg10[%c0_29, %c0_30] : memref<32x128xf32, #tpu.memory_space<vmem>>, vector<32x128xf32>
    tpu.vector_store %arg10[%c0_29, %c0_30], %47 {strides = array<i32>} : memref<32x128xf32, #tpu.memory_space<vmem>>, vector<32x128xf32>,
    return
  }
  func.func @transform_0(%arg0: i32) -> (i32, i32) {
    %c0_i32 = arith.constant 0 : i32
    %c0_i32_0 = arith.constant 0 : i32
    return %arg0, %c0_i32 : i32, i32
  }
  func.func @transform_1(%arg0: i32) -> (i32, i32) {
    %c0_i32 = arith.constant 0 : i32
    %c0_i32_0 = arith.constant 0 : i32
    %c0_i32_1 = arith.constant 0 : i32
    return %c0_i32, %c0_i32_0 : i32, i32
  }
  func.func @transform_2(%arg0: i32) -> (i32, i32) {
    %c0_i32 = arith.constant 0 : i32
    %c0_i32_0 = arith.constant 0 : i32
    %c0_i32_1 = arith.constant 0 : i32
    return %c0_i32, %c0_i32_0 : i32, i32
  }
  func.func @transform_3(%arg0: i32) -> (i32, i32) {
    %c0_i32 = arith.constant 0 : i32
    %c0_i32_0 = arith.constant 0 : i32
    %c0_i32_1 = arith.constant 0 : i32
    return %c0_i32, %c0_i32_0 : i32, i32
  }
  func.func @transform_4(%arg0: i32) -> (i32, i32) {
    %c0_i32 = arith.constant 0 : i32
    %c0_i32_0 = arith.constant 0 : i32
    %c0_i32_1 = arith.constant 0 : i32
    return %c0_i32, %c0_i32_0 : i32, i32
  }
  func.func @transform_5(%arg0: i32) -> (i32, i32) {
    %c0_i32 = arith.constant 0 : i32
    %c0_i32_0 = arith.constant 0 : i32
    %c0_i32_1 = arith.constant 0 : i32
    return %c0_i32, %c0_i32_0 : i32, i32
  }
  func.func @transform_6(%arg0: i32) -> (i32, i32) {
    %c0_i32 = arith.constant 0 : i32
    %c0_i32_0 = arith.constant 0 : i32
    %c0_i32_1 = arith.constant 0 : i32
    return %c0_i32, %c0_i32_0 : i32, i32
  }
  func.func @transform_7(%arg0: i32) -> (i32, i32) {
    %c0_i32 = arith.constant 0 : i32
    %c0_i32_0 = arith.constant 0 : i32
    %c0_i32_1 = arith.constant 0 : i32
    return %c0_i32, %c0_i32_0 : i32, i32
  }
  func.func @transform_8(%arg0: i32) -> (i32, i32) {
    %c0_i32 = arith.constant 0 : i32
    %c0_i32_0 = arith.constant 0 : i32
    %c0_i32_1 = arith.constant 0 : i32
    return %c0_i32, %c0_i32_0 : i32, i32
  }
  func.func @transform_9(%arg0: i32) -> (i32, i32) {
    %c0_i32 = arith.constant 0 : i32
    %c0_i32_0 = arith.constant 0 : i32
    return %arg0, %c0_i32 : i32, i32
  }
}

</mosaic_0001>

<llo_original>
// kernel: reward_forward.1
$region0: #{reward_forward.1}
  #allocation0 [shape = 'u32[]', space=smem, size = 0x4, offset = 0x4, fixed_abs, tag = 'smem constant byte address 0x4 - core index']
  #allocation1 [shape = 'u32[72,128]{1,0:T(1,128)}', space=vmem, size = 0x9000, scoped, tag = 'internal scratch']
  %s0 = inlined_call_operand.vmem [shape: bf16[64,256], index: 0, kind: input, shape index: {}]
  %s1 = inlined_call_operand.hbm [shape: bf16[256,512], index: 1, kind: input, shape index: {}]
  %s2 = inlined_call_operand.vmem [shape: f32[1,512], index: 2, kind: input, shape index: {}]
  %s3 = inlined_call_operand.hbm [shape: bf16[512,512], index: 3, kind: input, shape index: {}]
  %s4 = inlined_call_operand.vmem [shape: f32[1,512], index: 4, kind: input, shape index: {}]
  %s5 = inlined_call_operand.hbm [shape: bf16[512,512], index: 5, kind: input, shape index: {}]
  %s6 = inlined_call_operand.vmem [shape: f32[1,512], index: 6, kind: input, shape index: {}]
  %s7 = inlined_call_operand.vmem [shape: bf16[512,128], index: 7, kind: input, shape index: {}]
  %s8 = inlined_call_operand.vmem [shape: f32[1,128], index: 8, kind: input, shape index: {}]
  %s9 = inlined_call_operand.vmem [shape: f32[64,128], index: 9, kind: output, shape index: {}]
  %s10 = sld [smem:[#allocation0]]
  $region81: #{reward_forward.1} parent=0
    _
  %s12 = ssub.s32 1, %s10
  %s13 = scalar_select 0, %s12, %s10
  $region1: #{reward_forward.1} parent=0
    #allocation2 [shape = 'u8[262144]{0}', space=vmem, size = 0x40000, scoped, tag = 'input window, operand 1, single buffered']
    #allocation3 [shape = 's32[2]{0}', space=sflag, size = 0x8, scoped, tag = 'scoped memory for reward_forward.1']
    #allocation4 [shape = 'u8[524288]{0}', space=vmem, size = 0x80000, scoped, tag = 'input window, operand 3, single buffered']
    #allocation5 [shape = 's32[1]{0}', space=sflag, size = 0x4, scoped, tag = 'scoped memory for reward_forward.1']
    #allocation6 [shape = 'u8[524288]{0}', space=vmem, size = 0x80000, scoped, tag = 'input window, operand 5, single buffered']
    %14 = vsyncpa [#allocation3], 0
    %15 = vsyncpa [#allocation5], 0
    loop: start=0, step=1, limit=4
    $region2: #{reward_forward.1} parent=1 // loop_pre_header
      _
    $region3: #{reward_forward.1} parent=1 // loop_header
      %s17 = sphi 0, %s21
      %p18 = scmp.ge.s32.totalorder %s17, 4
      %s27 = sphi 0, %s29
      %s30 = sphi 0, %s27
      %s31 = sphi 0, %s30
      %s47 = sphi 0, %s31
      %s51 = sphi 0, %s51
      %s53 = sphi 0, %s51
      %s54 = sphi 0, %s53
      %s68 = sphi 0, %s54
      %s72 = sphi 0, %s72
      %s74 = sphi 0, %s72
      %s75 = sphi 0, %s74
      %s89 = sphi 0, %s75
      %s93 = sphi 0, %s93
      %s95 = sphi 0, %s93
      %s96 = sphi 0, %s95
      %s110 = sphi 0, %s96
      %s114 = sphi 0, %s114
      %s116 = sphi 0, %s114
      %s117 = sphi 0, %s116
      %s131 = sphi 0, %s117
      %s135 = sphi 0, %s135
      %s137 = sphi 0, %s135
      %s138 = sphi 0, %s137
      %s152 = sphi 0, %s138
      %s156 = sphi 0, %s156
      %s158 = sphi 0, %s156
      %s159 = sphi 0, %s158
      %s173 = sphi 0, %s159
      %s177 = sphi 0, %s177
      %s179 = sphi 0, %s177
      %s180 = sphi 0, %s179
      %s194 = sphi 0, %s180
      %s198 = sphi 0, %s198
      %s200 = sphi 0, %s198
      %s201 = sphi 0, %s200
      %s215 = sphi 0, %s201
      %s221 = sphi 0, %s223
      %s224 = sphi 0, %s221
      %s225 = sphi 0, %s224
      %s241 = sphi 0, %s225
    $region4: #{reward_forward.1} parent=1 // loop_header_branch
      %20 = sbr.rel (%p18) target = $region8
    $region5: #{reward_forward.1} parent=1 // loop_body
      %s22 = ssub.s32 %s17, 1
      %s23 = ssub.s32 %s17, 2
      %s24 = sadd.s32 %s17, 1
      %s25 = ssub.s32 %s17, %s24
      %p26 = scmp.eq.s32.totalorder %s25, 0
      %s28 = sadd.s32 %s27, 1
      %s29 = scalar_select %p26, %s27, %s28
      %p32 = pneg %p26
      %p33 = scmp.eq.s32.totalorder %s17, 1
      %p34 = por %p32, %p33
      %p35 = scmp.ne.s32.totalorder %s27, %s30
      %p36 = scmp.eq.s32.totalorder %s17, 0
      %p37 = por %p35, %p36
      %p38 = scmp.ne.s32.totalorder %s27, %s30
      %p39 = scmp.eq.s32.totalorder %s22, 1
      %p40 = por %p38, %p39
      %p41 = scmp.ne.s32.totalorder %s30, %s31
      %p42 = scmp.eq.s32.totalorder %s22, 0
      %p43 = por %p41, %p42
      %p44 = scmp.ne.s32.totalorder %s30, %s31
      %p45 = scmp.eq.s32.totalorder %s23, 1
      %p46 = por %p44, %p45
      %p48 = scmp.ne.s32.totalorder %s31, %s47
      %p49 = scmp.eq.s32.totalorder %s23, 0
      %p50 = por %p48, %p49
      %s52 = sadd.s32 %s51, 1
      %p55 = scmp.eq.s32.totalorder %s17, 1
      %p56 = scmp.ne.s32.totalorder %s51, %s53
      %p57 = scmp.eq.s32.totalorder %s17, 0
      %p58 = por %p56, %p57
      %p59 = scmp.ne.s32.totalorder %s51, %s53
      %p60 = scmp.eq.s32.totalorder %s22, 1
      %p61 = por %p59, %p60
      %p62 = scmp.ne.s32.totalorder %s53, %s54
      %p63 = scmp.eq.s32.totalorder %s22, 0
      %p64 = por %p62, %p63
      %p65 = scmp.ne.s32.totalorder %s53, %s54
      %p66 = scmp.eq.s32.totalorder %s23, 1
      %p67 = por %p65, %p66
      %p69 = scmp.ne.s32.totalorder %s54, %s68
      %p70 = scmp.eq.s32.totalorder %s23, 0
      %p71 = por %p69, %p70
      %s73 = sadd.s32 %s72, 1
      %p76 = scmp.eq.s32.totalorder %s17, 1
      %p77 = scmp.ne.s32.totalorder %s72, %s74
      %p78 = scmp.eq.s32.totalorder %s17, 0
      %p79 = por %p77, %p78
      %p80 = scmp.ne.s32.totalorder %s72, %s74
      %p81 = scmp.eq.s32.totalorder %s22, 1
      %p82 = por %p80, %p81
      %p83 = scmp.ne.s32.totalorder %s74, %s75
      %p84 = scmp.eq.s32.totalorder %s22, 0
      %p85 = por %p83, %p84
      %p86 = scmp.ne.s32.totalorder %s74, %s75
      %p87 = scmp.eq.s32.totalorder %s23, 1
      %p88 = por %p86, %p87
      %p90 = scmp.ne.s32.totalorder %s75, %s89
      %p91 = scmp.eq.s32.totalorder %s23, 0
      %p92 = por %p90, %p91
      %s94 = sadd.s32 %s93, 1
      %p97 = scmp.eq.s32.totalorder %s17, 1
      %p98 = scmp.ne.s32.totalorder %s93, %s95
      %p99 = scmp.eq.s32.totalorder %s17, 0
      %p100 = por %p98, %p99
      %p101 = scmp.ne.s32.totalorder %s93, %s95
      %p102 = scmp.eq.s32.totalorder %s22, 1
      %p103 = por %p101, %p102
      %p104 = scmp.ne.s32.totalorder %s95, %s96
      %p105 = scmp.eq.s32.totalorder %s22, 0
      %p106 = por %p104, %p105
      %p107 = scmp.ne.s32.totalorder %s95, %s96
      %p108 = scmp.eq.s32.totalorder %s23, 1
      %p109 = por %p107, %p108
      %p111 = scmp.ne.s32.totalorder %s96, %s110
      %p112 = scmp.eq.s32.totalorder %s23, 0
      %p113 = por %p111, %p112
      %s115 = sadd.s32 %s114, 1
      %p118 = scmp.eq.s32.totalorder %s17, 1
      %p119 = scmp.ne.s32.totalorder %s114, %s116
      %p120 = scmp.eq.s32.totalorder %s17, 0
      %p121 = por %p119, %p120
      %p122 = scmp.ne.s32.totalorder %s114, %s116
      %p123 = scmp.eq.s32.totalorder %s22, 1
      %p124 = por %p122, %p123
      %p125 = scmp.ne.s32.totalorder %s116, %s117
      %p126 = scmp.eq.s32.totalorder %s22, 0
      %p127 = por %p125, %p126
      %p128 = scmp.ne.s32.totalorder %s116, %s117
      %p129 = scmp.eq.s32.totalorder %s23, 1
      %p130 = por %p128, %p129
      %p132 = scmp.ne.s32.totalorder %s117, %s131
      %p133 = scmp.eq.s32.totalorder %s23, 0
      %p134 = por %p132, %p133
      %s136 = sadd.s32 %s135, 1
      %p139 = scmp.eq.s32.totalorder %s17, 1
      %p140 = scmp.ne.s32.totalorder %s135, %s137
      %p141 = scmp.eq.s32.totalorder %s17, 0
      %p142 = por %p140, %p141
      %p143 = scmp.ne.s32.totalorder %s135, %s137
      %p144 = scmp.eq.s32.totalorder %s22, 1
      %p145 = por %p143, %p144
      %p146 = scmp.ne.s32.totalorder %s137, %s138
      %p147 = scmp.eq.s32.totalorder %s22, 0
      %p148 = por %p146, %p147
      %p149 = scmp.ne.s32.totalorder %s137, %s138
      %p150 = scmp.eq.s32.totalorder %s23, 1
      %p151 = por %p149, %p150
      %p153 = scmp.ne.s32.totalorder %s138, %s152
      %p154 = scmp.eq.s32.totalorder %s23, 0
      %p155 = por %p153, %p154
      %s157 = sadd.s32 %s156, 1
      %p160 = scmp.eq.s32.totalorder %s17, 1
      %p161 = scmp.ne.s32.totalorder %s156, %s158
      %p162 = scmp.eq.s32.totalorder %s17, 0
      %p163 = por %p161, %p162
      %p164 = scmp.ne.s32.totalorder %s156, %s158
      %p165 = scmp.eq.s32.totalorder %s22, 1
      %p166 = por %p164, %p165
      %p167 = scmp.ne.s32.totalorder %s158, %s159
      %p168 = scmp.eq.s32.totalorder %s22, 0
      %p169 = por %p167, %p168
      %p170 = scmp.ne.s32.totalorder %s158, %s159
      %p171 = scmp.eq.s32.totalorder %s23, 1
      %p172 = por %p170, %p171
      %p174 = scmp.ne.s32.totalorder %s159, %s173
      %p175 = scmp.eq.s32.totalorder %s23, 0
      %p176 = por %p174, %p175
      %s178 = sadd.s32 %s177, 1
      %p181 = scmp.eq.s32.totalorder %s17, 1
      %p182 = scmp.ne.s32.totalorder %s177, %s179
      %p183 = scmp.eq.s32.totalorder %s17, 0
      %p184 = por %p182, %p183
      %p185 = scmp.ne.s32.totalorder %s177, %s179
      %p186 = scmp.eq.s32.totalorder %s22, 1
      %p187 = por %p185, %p186
      %p188 = scmp.ne.s32.totalorder %s179, %s180
      %p189 = scmp.eq.s32.totalorder %s22, 0
      %p190 = por %p188, %p189
      %p191 = scmp.ne.s32.totalorder %s179, %s180
      %p192 = scmp.eq.s32.totalorder %s23, 1
      %p193 = por %p191, %p192
      %p195 = scmp.ne.s32.totalorder %s180, %s194
      %p196 = scmp.eq.s32.totalorder %s23, 0
      %p197 = por %p195, %p196
      %s199 = sadd.s32 %s198, 1
      %p202 = scmp.eq.s32.totalorder %s17, 1
      %p203 = scmp.ne.s32.totalorder %s198, %s200
      %p204 = scmp.eq.s32.totalorder %s17, 0
      %p205 = por %p203, %p204
      %p206 = scmp.ne.s32.totalorder %s198, %s200
      %p207 = scmp.eq.s32.totalorder %s22, 1
      %p208 = por %p206, %p207
      %p209 = scmp.ne.s32.totalorder %s200, %s201
      %p210 = scmp.eq.s32.totalorder %s22, 0
      %p211 = por %p209, %p210
      %p212 = scmp.ne.s32.totalorder %s200, %s201
      %p213 = scmp.eq.s32.totalorder %s23, 1
      %p214 = por %p212, %p213
      %p216 = scmp.ne.s32.totalorder %s201, %s215
      %p217 = scmp.eq.s32.totalorder %s23, 0
      %p218 = por %p216, %p217
      %s219 = ssub.s32 %s17, %s24
      %p220 = scmp.eq.s32.totalorder %s219, 0
      %s222 = sadd.s32 %s221, 1
      %s223 = scalar_select %p220, %s221, %s222
      %p226 = pneg %p220
      %p227 = scmp.eq.s32.totalorder %s17, 1
      %p228 = por %p226, %p227
      %p229 = scmp.ne.s32.totalorder %s221, %s224
      %p230 = scmp.eq.s32.totalorder %s17, 0
      %p231 = por %p229, %p230
      %p232 = scmp.ne.s32.totalorder %s221, %s224
      %p233 = scmp.eq.s32.totalorder %s22, 1
      %p234 = por %p232, %p233
      %p235 = scmp.ne.s32.totalorder %s224, %s225
      %p236 = scmp.eq.s32.totalorder %s22, 0
      %p237 = por %p235, %p236
      %p238 = scmp.ne.s32.totalorder %s224, %s225
      %p239 = scmp.eq.s32.totalorder %s23, 1
      %p240 = por %p238, %p239
      %p242 = scmp.ne.s32.totalorder %s225, %s241
      %p243 = scmp.eq.s32.totalorder %s23, 0
      %p244 = por %p242, %p243
      %p245 = scmp.le.s32.totalorder 1, %s17
      %p246 = scmp.lt.s32.totalorder %s17, 3
      %p247 = pnand %p245, %p246
      %p248 = pneg %p247
      // Predicated region
      $region9: #{reward_forward.1} parent=5 // pred_check
        _
      $region10: #{reward_forward.1} parent=5 // pred_check_branch
        %250 = sbr.rel (%p247) target = $region12
      $region11: #{reward_forward.1} parent=5 // pred_region
        %s251 = ssub.s32 %s17, 1
        // Predicated region
        $region13: #{reward_forward.1} parent=11 // pred_check
          %p252 = pneg %p64
        $region14: #{reward_forward.1} parent=11 // pred_check_branch
          %254 = sbr.rel (%p252) target = $region16
        $region15: #{reward_forward.1} parent=11 // pred_region
          %256 = vsyncadd [#allocation3], 0
          %s257 = sshll.u32 %s1, 4
          %s258 = int_to_ptr.hbm [resolvable:$true] %s257
          %s259 = sshll.u32 [#allocation2], 4
          %s260 = int_to_ptr.vmem [resolvable:$true] %s259
          %265 = dma.hbm_to_vmem [thread:$0]  %s258, 8192, %s260, [#allocation3], 256, 256, 16
        $region16: #{reward_forward.1} parent=11 // pred_fallthru
          _
        // Predicated region
        $region17: #{reward_forward.1} parent=11 // pred_check
          %p266 = pneg %p85
        $region18: #{reward_forward.1} parent=11 // pred_check_branch
          %268 = sbr.rel (%p266) target = $region20
        $region19: #{reward_forward.1} parent=11 // pred_region
          _
        $region20: #{reward_forward.1} parent=11 // pred_fallthru
          _
        // Predicated region
        $region21: #{reward_forward.1} parent=11 // pred_check
          %p269 = pneg %p106
        $region22: #{reward_forward.1} parent=11 // pred_check_branch
          %271 = sbr.rel (%p269) target = $region24
        $region23: #{reward_forward.1} parent=11 // pred_region
          %273 = vsyncadd [#allocation5], 0
          %s274 = sshll.u32 %s3, 4
          %s275 = int_to_ptr.hbm [resolvable:$true] %s274
          %s276 = sshll.u32 [#allocation4], 4
          %s277 = int_to_ptr.vmem [resolvable:$true] %s276
          %282 = dma.hbm_to_vmem [thread:$0]  %s275, 16384, %s277, [#allocation5], 256, 256, 16
        $region24: #{reward_forward.1} parent=11 // pred_fallthru
          _
        // Predicated region
        $region25: #{reward_forward.1} parent=11 // pred_check
          %p283 = pneg %p127
        $region26: #{reward_forward.1} parent=11 // pred_check_branch
          %285 = sbr.rel (%p283) target = $region28
        $region27: #{reward_forward.1} parent=11 // pred_region
          _
        $region28: #{reward_forward.1} parent=11 // pred_fallthru
          _
        // Predicated region
        $region29: #{reward_forward.1} parent=11 // pred_check
          %p286 = pneg %p148
        $region30: #{reward_forward.1} parent=11 // pred_check_branch
          %288 = sbr.rel (%p286) target = $region32
        $region31: #{reward_forward.1} parent=11 // pred_region
          %290 = vsyncadd [#allocation5], 0
          %s291 = sshll.u32 %s5, 4
          %s292 = int_to_ptr.hbm [resolvable:$true] %s291
          %s293 = sshll.u32 [#allocation6], 4
          %s294 = int_to_ptr.vmem [resolvable:$true] %s293
          %299 = dma.hbm_to_vmem [thread:$0]  %s292, 16384, %s294, [#allocation5], 256, 256, 16
        $region32: #{reward_forward.1} parent=11 // pred_fallthru
          _
        // Predicated region
        $region33: #{reward_forward.1} parent=11 // pred_check
          %p300 = pneg %p169
        $region34: #{reward_forward.1} parent=11 // pred_check_branch
          %302 = sbr.rel (%p300) target = $region36
        $region35: #{reward_forward.1} parent=11 // pred_region
          _
        $region36: #{reward_forward.1} parent=11 // pred_fallthru
          _
        // Predicated region
        $region37: #{reward_forward.1} parent=11 // pred_check
          %p303 = pneg %p190
        $region38: #{reward_forward.1} parent=11 // pred_check_branch
          %305 = sbr.rel (%p303) target = $region40
        $region39: #{reward_forward.1} parent=11 // pred_region
          _
        $region40: #{reward_forward.1} parent=11 // pred_fallthru
          _
        // Predicated region
        $region41: #{reward_forward.1} parent=11 // pred_check
          %p306 = pneg %p211
        $region42: #{reward_forward.1} parent=11 // pred_check_branch
          %308 = sbr.rel (%p306) target = $region44
        $region43: #{reward_forward.1} parent=11 // pred_region
          _
        $region44: #{reward_forward.1} parent=11 // pred_fallthru
          _
      $region12: #{reward_forward.1} parent=5 // pred_fallthru
        _
      %p309 = scmp.lt.s32.totalorder %s17, 2
      // Predicated region
      $region45: #{reward_forward.1} parent=5 // pred_check
        %p310 = pneg %p309
      $region46: #{reward_forward.1} parent=5 // pred_check_branch
        %312 = sbr.rel (%p310) target = $region48
      $region47: #{reward_forward.1} parent=5 // pred_region
        // Predicated region
        $region49: #{reward_forward.1} parent=47 // pred_check
          %p313 = pneg %p37
        $region50: #{reward_forward.1} parent=47 // pred_check_branch
          %315 = sbr.rel (%p313) target = $region52
        $region51: #{reward_forward.1} parent=47 // pred_region
          %s316 = smul.u32 4, %s17
          %p317 = scmp.lt.s32.totalorder %s316, 7
          %s318 = scalar_select %p317, %s316, 7
          %s319 = smul.addr %s318, 2
          %s320 = smul.addr %s319, 4
          %s321 = scalar_lea.vmem %s0, %s320
          %s322 = smul.u32 4, %s17
        $region52: #{reward_forward.1} parent=47 // pred_fallthru
          _
      $region48: #{reward_forward.1} parent=5 // pred_fallthru
        _
      %p323 = scmp.le.s32.totalorder 1, %s17
      %p324 = scmp.lt.s32.totalorder %s17, 3
      %p325 = pnand %p323, %p324
      %p326 = pneg %p325
      // Predicated region
      $region53: #{reward_forward.1} parent=5 // pred_check
        _
      $region54: #{reward_forward.1} parent=5 // pred_check_branch
        %328 = sbr.rel (%p325) target = $region56
      $region55: #{reward_forward.1} parent=5 // pred_region
        %s329 = ssub.s32 %s17, 1
        // Predicated region
        $region57: #{reward_forward.1} parent=55 // pred_check
          %p330 = pneg %p64
        $region58: #{reward_forward.1} parent=55 // pred_check_branch
          %332 = sbr.rel (%p330) target = $region60
        $region59: #{reward_forward.1} parent=55 // pred_region
          %334 = dma.done [#allocation3], 8192
        $region60: #{reward_forward.1} parent=55 // pred_fallthru
          _
        // Predicated region
        $region61: #{reward_forward.1} parent=55 // pred_check
          %p335 = pneg %p106
        $region62: #{reward_forward.1} parent=55 // pred_check_branch
          %337 = sbr.rel (%p335) target = $region64
        $region63: #{reward_forward.1} parent=55 // pred_region
          %339 = dma.done [#allocation5], 16384
        $region64: #{reward_forward.1} parent=55 // pred_fallthru
          _
        // Predicated region
        $region65: #{reward_forward.1} parent=55 // pred_check
          %p340 = pneg %p148
        $region66: #{reward_forward.1} parent=55 // pred_check_branch
          %342 = sbr.rel (%p340) target = $region68
        $region67: #{reward_forward.1} parent=55 // pred_region
          %344 = dma.done [#allocation5], 16384
        $region68: #{reward_forward.1} parent=55 // pred_fallthru
          _
        %s345 = smul.u32 4, %s22
        %p346 = scmp.lt.s32.totalorder %s345, 7
        %s347 = scalar_select %p346, %s345, 7
        %s348 = smul.addr %s347, 2
        %s349 = smul.addr %s348, 4
        %s350 = scalar_lea.vmem %s0, %s349
        %p351 = pneg %p43
        %p352 = pneg %p40
        %p353 = pneg %p64
        %p354 = pneg %p61
        %p355 = pneg %p85
        %p356 = pneg %p82
        %p357 = pneg %p106
        %p358 = pneg %p103
        %p359 = pneg %p127
        %p360 = pneg %p124
        %p361 = pneg %p148
        %p362 = pneg %p145
        %p363 = pneg %p169
        %p364 = pneg %p166
        %p365 = pneg %p190
        %p366 = pneg %p187
        %p367 = pneg %p211
        %p368 = pneg %p208
        %p369 = pneg %p237
        %p370 = pneg %p234
        %s371 = smul.u32 4, %s22
        %p372 = scmp.lt.s32.totalorder %s371, 7
        %s373 = scalar_select %p372, %s371, 7
        %s374 = smul.addr %s373, 8
        %s375 = scalar_lea.vmem %s9, %s374
        %s376 = smul.u32 4, %s22
        %p377 = scmp.lt.s32.totalorder %s376, 7
        %s378 = scalar_select %p377, %s376, 7
        %s379 = smul.addr %s378, 2
        %s380 = smul.addr %s379, 4
        %s381 = scalar_lea.vmem %s0, %s380
        %s382 = smul.u32 4, %s22
        %s383 = smul.u32 4, %s22
        %p384 = scmp.lt.s32.totalorder %s383, 7
        %s385 = scalar_select %p384, %s383, 7
        %s386 = smul.addr %s385, 8
        %s387 = scalar_lea.vmem %s9, %s386
        %s388 = smul.u32 4, %s22
        %v389 = vld [vmem:[%s381] sm:$0xff]
        %v390 = vld [vmem:[%s381 + $0x8] sm:$0xff]
        %v391 = vld [vmem:[%s381 + $0x10] sm:$0xff]
        %v392 = vld [vmem:[%s381 + $0x18] sm:$0xff]
        %v393 = vld [vmem:[#allocation2] sm:$0xff]
        %v394 = vld [vmem:[#allocation2 + $0x8] sm:$0xff]
        %v395 = vld [vmem:[#allocation2 + $0x10] sm:$0xff]
        %v396 = vld [vmem:[#allocation2 + $0x18] sm:$0xff]
        %v397 = vld [vmem:[#allocation2 + $0x20] sm:$0xff]
        %v398 = vld [vmem:[#allocation2 + $0x28] sm:$0xff]
        %v399 = vld [vmem:[#allocation2 + $0x30] sm:$0xff]
        %v400 = vld [vmem:[#allocation2 + $0x38] sm:$0xff]
        %v401 = vld [vmem:[#allocation2 + $0x40] sm:$0xff]
        %v402 = vld [vmem:[#allocation2 + $0x48] sm:$0xff]
        %v403 = vld [vmem:[#allocation2 + $0x50] sm:$0xff]
        %v404 = vld [vmem:[#allocation2 + $0x58] sm:$0xff]
        %v405 = vld [vmem:[#allocation2 + $0x60] sm:$0xff]
        %v406 = vld [vmem:[#allocation2 + $0x68] sm:$0xff]
        %v407 = vld [vmem:[#allocation2 + $0x70] sm:$0xff]
        %v408 = vld [vmem:[#allocation2 + $0x78] sm:$0xff]
        %v409 = vld [vmem:[#allocation2 + $0x80] sm:$0xff]
        %v410 = vld [vmem:[#allocation2 + $0x88] sm:$0xff]
        %v411 = vld [vmem:[#allocation2 + $0x90] sm:$0xff]
        %v412 = vld [vmem:[#allocation2 + $0x98] sm:$0xff]
        %v413 = vld [vmem:[#allocation2 + $0xa0] sm:$0xff]
        %v414 = vld [vmem:[#allocation2 + $0xa8] sm:$0xff]
        %v415 = vld [vmem:[#allocation2 + $0xb0] sm:$0xff]
        %v416 = vld [vmem:[#allocation2 + $0xb8] sm:$0xff]
        %v417 = vld [vmem:[#allocation2 + $0xc0] sm:$0xff]
        %v418 = vld [vmem:[#allocation2 + $0xc8] sm:$0xff]
        %v419 = vld [vmem:[#allocation2 + $0xd0] sm:$0xff]
        %v420 = vld [vmem:[#allocation2 + $0xd8] sm:$0xff]
        %v421 = vld [vmem:[#allocation2 + $0xe0] sm:$0xff]
        %v422 = vld [vmem:[#allocation2 + $0xe8] sm:$0xff]
        %v423 = vld [vmem:[#allocation2 + $0xf0] sm:$0xff]
        %v424 = vld [vmem:[#allocation2 + $0xf8] sm:$0xff]
        %v425 = vld [vmem:[#allocation2 + $0x100] sm:$0xff]
        %v426 = vld [vmem:[#allocation2 + $0x108] sm:$0xff]
        %v427 = vld [vmem:[#allocation2 + $0x110] sm:$0xff]
        %v428 = vld [vmem:[#allocation2 + $0x118] sm:$0xff]
        %v429 = vld [vmem:[#allocation2 + $0x120] sm:$0xff]
        %v430 = vld [vmem:[#allocation2 + $0x128] sm:$0xff]
        %v431 = vld [vmem:[#allocation2 + $0x130] sm:$0xff]
        %v432 = vld [vmem:[#allocation2 + $0x138] sm:$0xff]
        %v433 = vld [vmem:[#allocation2 + $0x140] sm:$0xff]
        %v434 = vld [vmem:[#allocation2 + $0x148] sm:$0xff]
        %v435 = vld [vmem:[#allocation2 + $0x150] sm:$0xff]
        %v436 = vld [vmem:[#allocation2 + $0x158] sm:$0xff]
        %v437 = vld [vmem:[#allocation2 + $0x160] sm:$0xff]
        %v438 = vld [vmem:[#allocation2 + $0x168] sm:$0xff]
        %v439 = vld [vmem:[#allocation2 + $0x170] sm:$0xff]
        %v440 = vld [vmem:[#allocation2 + $0x178] sm:$0xff]
        %v441 = vld [vmem:[#allocation2 + $0x180] sm:$0xff]
        %v442 = vld [vmem:[#allocation2 + $0x188] sm:$0xff]
        %v443 = vld [vmem:[#allocation2 + $0x190] sm:$0xff]
        %v444 = vld [vmem:[#allocation2 + $0x198] sm:$0xff]
        %v445 = vld [vmem:[#allocation2 + $0x1a0] sm:$0xff]
        %v446 = vld [vmem:[#allocation2 + $0x1a8] sm:$0xff]
        %v447 = vld [vmem:[#allocation2 + $0x1b0] sm:$0xff]
        %v448 = vld [vmem:[#allocation2 + $0x1b8] sm:$0xff]
        %v449 = vld [vmem:[#allocation2 + $0x1c0] sm:$0xff]
        %v450 = vld [vmem:[#allocation2 + $0x1c8] sm:$0xff]
        %v451 = vld [vmem:[#allocation2 + $0x1d0] sm:$0xff]
        %v452 = vld [vmem:[#allocation2 + $0x1d8] sm:$0xff]
        %v453 = vld [vmem:[#allocation2 + $0x1e0] sm:$0xff]
        %v454 = vld [vmem:[#allocation2 + $0x1e8] sm:$0xff]
        %v455 = vld [vmem:[#allocation2 + $0x1f0] sm:$0xff]
        %v456 = vld [vmem:[#allocation2 + $0x1f8] sm:$0xff]
        %v457 = vld [vmem:[%s2] sm:$0xf]
        %v459 = vperm.slane %v457, 0
        %v460 = vperm.slane %v457, 1
        %v461 = vperm.slane %v457, 2
        %v462 = vperm.slane %v457, 3
        %v471 = vunpack.c.l.b16 %v389
        %v472 = vunpack.c.h.b16 %v389
        %v473 = vunpack.c.l.b16 %v390
        %v474 = vunpack.c.h.b16 %v390
        %v475 = vunpack.c.l.b16 %v391
        %v476 = vunpack.c.h.b16 %v391
        %v477 = vunpack.c.l.b16 %v392
        %v478 = vunpack.c.h.b16 %v392
        %v479 = vpack.c.b16 %v473, %v471
        %v480 = vpack.c.b16 %v474, %v472
        %v481 = vpack.c.b16 %v477, %v475
        %v482 = vpack.c.b16 %v478, %v476
        %v551 = vunpack.c.l.b16 %v393
        %v552 = vunpack.c.h.b16 %v393
        %v553 = vunpack.c.l.b16 %v394
        %v554 = vunpack.c.h.b16 %v394
        %v555 = vunpack.c.l.b16 %v395
        %v556 = vunpack.c.h.b16 %v395
        %v557 = vunpack.c.l.b16 %v396
        %v558 = vunpack.c.h.b16 %v396
        %v559 = vunpack.c.l.b16 %v397
        %v560 = vunpack.c.h.b16 %v397
        %v561 = vunpack.c.l.b16 %v398
        %v562 = vunpack.c.h.b16 %v398
        %v563 = vunpack.c.l.b16 %v399
        %v564 = vunpack.c.h.b16 %v399
        %v565 = vunpack.c.l.b16 %v400
        %v566 = vunpack.c.h.b16 %v400
        %v567 = vunpack.c.l.b16 %v401
        %v568 = vunpack.c.h.b16 %v401
        %v569 = vunpack.c.l.b16 %v402
        %v570 = vunpack.c.h.b16 %v402
        %v571 = vunpack.c.l.b16 %v403
        %v572 = vunpack.c.h.b16 %v403
        %v573 = vunpack.c.l.b16 %v404
        %v574 = vunpack.c.h.b16 %v404
        %v575 = vunpack.c.l.b16 %v405
        %v576 = vunpack.c.h.b16 %v405
        %v577 = vunpack.c.l.b16 %v406
        %v578 = vunpack.c.h.b16 %v406
        %v579 = vunpack.c.l.b16 %v407
        %v580 = vunpack.c.h.b16 %v407
        %v581 = vunpack.c.l.b16 %v408
        %v582 = vunpack.c.h.b16 %v408
        %v583 = vunpack.c.l.b16 %v409
        %v584 = vunpack.c.h.b16 %v409
        %v585 = vunpack.c.l.b16 %v410
        %v586 = vunpack.c.h.b16 %v410
        %v587 = vunpack.c.l.b16 %v411
        %v588 = vunpack.c.h.b16 %v411
        %v589 = vunpack.c.l.b16 %v412
        %v590 = vunpack.c.h.b16 %v412
        %v591 = vunpack.c.l.b16 %v413
        %v592 = vunpack.c.h.b16 %v413
        %v593 = vunpack.c.l.b16 %v414
        %v594 = vunpack.c.h.b16 %v414
        %v595 = vunpack.c.l.b16 %v415
        %v596 = vunpack.c.h.b16 %v415
        %v597 = vunpack.c.l.b16 %v416
        %v598 = vunpack.c.h.b16 %v416
        %v599 = vunpack.c.l.b16 %v417
        %v600 = vunpack.c.h.b16 %v417
        %v601 = vunpack.c.l.b16 %v418
        %v602 = vunpack.c.h.b16 %v418
        %v603 = vunpack.c.l.b16 %v419
        %v604 = vunpack.c.h.b16 %v419
        %v605 = vunpack.c.l.b16 %v420
        %v606 = vunpack.c.h.b16 %v420
        %v607 = vunpack.c.l.b16 %v421
        %v608 = vunpack.c.h.b16 %v421
        %v609 = vunpack.c.l.b16 %v422
        %v610 = vunpack.c.h.b16 %v422
        %v611 = vunpack.c.l.b16 %v423
        %v612 = vunpack.c.h.b16 %v423
        %v613 = vunpack.c.l.b16 %v424
        %v614 = vunpack.c.h.b16 %v424
        %v615 = vunpack.c.l.b16 %v425
        %v616 = vunpack.c.h.b16 %v425
        %v617 = vunpack.c.l.b16 %v426
        %v618 = vunpack.c.h.b16 %v426
        %v619 = vunpack.c.l.b16 %v427
        %v620 = vunpack.c.h.b16 %v427
        %v621 = vunpack.c.l.b16 %v428
        %v622 = vunpack.c.h.b16 %v428
        %v623 = vunpack.c.l.b16 %v429
        %v624 = vunpack.c.h.b16 %v429
        %v625 = vunpack.c.l.b16 %v430
        %v626 = vunpack.c.h.b16 %v430
        %v627 = vunpack.c.l.b16 %v431
        %v628 = vunpack.c.h.b16 %v431
        %v629 = vunpack.c.l.b16 %v432
        %v630 = vunpack.c.h.b16 %v432
        %v631 = vunpack.c.l.b16 %v433
        %v632 = vunpack.c.h.b16 %v433
        %v633 = vunpack.c.l.b16 %v434
        %v634 = vunpack.c.h.b16 %v434
        %v635 = vunpack.c.l.b16 %v435
        %v636 = vunpack.c.h.b16 %v435
        %v637 = vunpack.c.l.b16 %v436
        %v638 = vunpack.c.h.b16 %v436
        %v639 = vunpack.c.l.b16 %v437
        %v640 = vunpack.c.h.b16 %v437
        %v641 = vunpack.c.l.b16 %v438
        %v642 = vunpack.c.h.b16 %v438
        %v643 = vunpack.c.l.b16 %v439
        %v644 = vunpack.c.h.b16 %v439
        %v645 = vunpack.c.l.b16 %v440
        %v646 = vunpack.c.h.b16 %v440
        %v647 = vunpack.c.l.b16 %v441
        %v648 = vunpack.c.h.b16 %v441
        %v649 = vunpack.c.l.b16 %v442
        %v650 = vunpack.c.h.b16 %v442
        %v651 = vunpack.c.l.b16 %v443
        %v652 = vunpack.c.h.b16 %v443
        %v653 = vunpack.c.l.b16 %v444
        %v654 = vunpack.c.h.b16 %v444
        %v655 = vunpack.c.l.b16 %v445
        %v656 = vunpack.c.h.b16 %v445
        %v657 = vunpack.c.l.b16 %v446
        %v658 = vunpack.c.h.b16 %v446
        %v659 = vunpack.c.l.b16 %v447
        %v660 = vunpack.c.h.b16 %v447
        %v661 = vunpack.c.l.b16 %v448
        %v662 = vunpack.c.h.b16 %v448
        %v663 = vunpack.c.l.b16 %v449
        %v664 = vunpack.c.h.b16 %v449
        %v665 = vunpack.c.l.b16 %v450
        %v666 = vunpack.c.h.b16 %v450
        %v667 = vunpack.c.l.b16 %v451
        %v668 = vunpack.c.h.b16 %v451
        %v669 = vunpack.c.l.b16 %v452
        %v670 = vunpack.c.h.b16 %v452
        %v671 = vunpack.c.l.b16 %v453
        %v672 = vunpack.c.h.b16 %v453
        %v673 = vunpack.c.l.b16 %v454
        %v674 = vunpack.c.h.b16 %v454
        %v675 = vunpack.c.l.b16 %v455
        %v676 = vunpack.c.h.b16 %v455
        %v677 = vunpack.c.l.b16 %v456
        %v678 = vunpack.c.h.b16 %v456
        %v679 = vpack.c.b16 %v555, %v551
        %v680 = vpack.c.b16 %v556, %v552
        %v681 = vpack.c.b16 %v557, %v553
        %v682 = vpack.c.b16 %v558, %v554
        %v683 = vpack.c.b16 %v563, %v559
        %v684 = vpack.c.b16 %v564, %v560
        %v685 = vpack.c.b16 %v565, %v561
        %v686 = vpack.c.b16 %v566, %v562
        %v687 = vpack.c.b16 %v571, %v567
        %v688 = vpack.c.b16 %v572, %v568
        %v689 = vpack.c.b16 %v573, %v569
        %v690 = vpack.c.b16 %v574, %v570
        %v691 = vpack.c.b16 %v579, %v575
        %v692 = vpack.c.b16 %v580, %v576
        %v693 = vpack.c.b16 %v581, %v577
        %v694 = vpack.c.b16 %v582, %v578
        %v695 = vpack.c.b16 %v587, %v583
        %v696 = vpack.c.b16 %v588, %v584
        %v697 = vpack.c.b16 %v589, %v585
        %v698 = vpack.c.b16 %v590, %v586
        %v699 = vpack.c.b16 %v595, %v591
        %v700 = vpack.c.b16 %v596, %v592
        %v701 = vpack.c.b16 %v597, %v593
        %v702 = vpack.c.b16 %v598, %v594
        %v703 = vpack.c.b16 %v603, %v599
        %v704 = vpack.c.b16 %v604, %v600
        %v705 = vpack.c.b16 %v605, %v601
        %v706 = vpack.c.b16 %v606, %v602
        %v707 = vpack.c.b16 %v611, %v607
        %v708 = vpack.c.b16 %v612, %v608
        %v709 = vpack.c.b16 %v613, %v609
        %v710 = vpack.c.b16 %v614, %v610
        %v711 = vpack.c.b16 %v619, %v615
        %v712 = vpack.c.b16 %v620, %v616
        %v713 = vpack.c.b16 %v621, %v617
        %v714 = vpack.c.b16 %v622, %v618
        %v715 = vpack.c.b16 %v627, %v623
        %v716 = vpack.c.b16 %v628, %v624
        %v717 = vpack.c.b16 %v629, %v625
        %v718 = vpack.c.b16 %v630, %v626
        %v719 = vpack.c.b16 %v635, %v631
        %v720 = vpack.c.b16 %v636, %v632
        %v721 = vpack.c.b16 %v637, %v633
        %v722 = vpack.c.b16 %v638, %v634
        %v723 = vpack.c.b16 %v643, %v639
        %v724 = vpack.c.b16 %v644, %v640
        %v725 = vpack.c.b16 %v645, %v641
        %v726 = vpack.c.b16 %v646, %v642
        %v727 = vpack.c.b16 %v651, %v647
        %v728 = vpack.c.b16 %v652, %v648
        %v729 = vpack.c.b16 %v653, %v649
        %v730 = vpack.c.b16 %v654, %v650
        %v731 = vpack.c.b16 %v659, %v655
        %v732 = vpack.c.b16 %v660, %v656
        %v733 = vpack.c.b16 %v661, %v657
        %v734 = vpack.c.b16 %v662, %v658
        %v735 = vpack.c.b16 %v667, %v663
        %v736 = vpack.c.b16 %v668, %v664
        %v737 = vpack.c.b16 %v669, %v665
        %v738 = vpack.c.b16 %v670, %v666
        %v739 = vpack.c.b16 %v675, %v671
        %v740 = vpack.c.b16 %v676, %v672
        %v741 = vpack.c.b16 %v677, %v673
        %v742 = vpack.c.b16 %v678, %v674
        %807 = vmatpush.bf16.msra.mxu0 %v707
        %808 = vmatpush.bf16.msra.mxu0 %v703
        %809 = vmatpush.bf16.msra.mxu0 %v699
        %810 = vmatpush.bf16.msra.mxu0 %v695
        %811 = vmatpush.bf16.msra.mxu0 %v691
        %812 = vmatpush.bf16.msra.mxu0 %v687
        %813 = vmatpush.bf16.msra.mxu0 %v683
        %814 = vmatpush.bf16.msra.mxu0 %v679
        %815 = vmatmul.bf16.gmra.mxu0 %v479
        %v816 = vpop.f32.mrf.mxu0
        %v817 = vadd.f32 %v459, %v816
        %v818 = vpop.f32.mrf.mxu0
        %v819 = vadd.f32 %v459, %v818
        %820 = vmatmul.bf16.gmra.mxu0 %v481
        %v821 = vpop.f32.mrf.mxu0
        %v822 = vadd.f32 %v459, %v821
        %v823 = vpop.f32.mrf.mxu0
        %v824 = vadd.f32 %v459, %v823
        %825 = vdwg.mxu0
        %826 = vmatpush.bf16.msra.mxu0 %v739
        %827 = vmatpush.bf16.msra.mxu0 %v735
        %828 = vmatpush.bf16.msra.mxu0 %v731
        %829 = vmatpush.bf16.msra.mxu0 %v727
        %830 = vmatpush.bf16.msra.mxu0 %v723
        %831 = vmatpush.bf16.msra.mxu0 %v719
        %832 = vmatpush.bf16.msra.mxu0 %v715
        %833 = vmatpush.bf16.msra.mxu0 %v711
        %834 = vmatmul.bf16.gmra.mxu0 %v480
        %v835 = vpop.f32.mrf.mxu0
        %v836 = vadd.f32 %v817, %v835
        %v837 = vpop.f32.mrf.mxu0
        %v838 = vadd.f32 %v819, %v837
        %839 = vmatmul.bf16.gmra.mxu0 %v482
        %v840 = vpop.f32.mrf.mxu0
        %v841 = vadd.f32 %v822, %v840
        %v842 = vpop.f32.mrf.mxu0
        %v843 = vadd.f32 %v824, %v842
        %844 = vdwg.mxu0
        %845 = vmatpush.bf16.msra.mxu0 %v708
        %846 = vmatpush.bf16.msra.mxu0 %v704
        %847 = vmatpush.bf16.msra.mxu0 %v700
        %848 = vmatpush.bf16.msra.mxu0 %v696
        %849 = vmatpush.bf16.msra.mxu0 %v692
        %850 = vmatpush.bf16.msra.mxu0 %v688
        %851 = vmatpush.bf16.msra.mxu0 %v684
        %852 = vmatpush.bf16.msra.mxu0 %v680
        %853 = vmatmul.bf16.gmra.mxu0 %v479
        %v854 = vpop.f32.mrf.mxu0
        %v855 = vadd.f32 %v460, %v854
        %v856 = vpop.f32.mrf.mxu0
        %v857 = vadd.f32 %v460, %v856
        %858 = vmatmul.bf16.gmra.mxu0 %v481
        %v859 = vpop.f32.mrf.mxu0
        %v860 = vadd.f32 %v460, %v859
        %v861 = vpop.f32.mrf.mxu0
        %v862 = vadd.f32 %v460, %v861
        %863 = vdwg.mxu0
        %864 = vmatpush.bf16.msra.mxu0 %v740
        %865 = vmatpush.bf16.msra.mxu0 %v736
        %866 = vmatpush.bf16.msra.mxu0 %v732
        %867 = vmatpush.bf16.msra.mxu0 %v728
        %868 = vmatpush.bf16.msra.mxu0 %v724
        %869 = vmatpush.bf16.msra.mxu0 %v720
        %870 = vmatpush.bf16.msra.mxu0 %v716
        %871 = vmatpush.bf16.msra.mxu0 %v712
        %872 = vmatmul.bf16.gmra.mxu0 %v480
        %v873 = vpop.f32.mrf.mxu0
        %v874 = vadd.f32 %v855, %v873
        %v875 = vpop.f32.mrf.mxu0
        %v876 = vadd.f32 %v857, %v875
        %877 = vmatmul.bf16.gmra.mxu0 %v482
        %v878 = vpop.f32.mrf.mxu0
        %v879 = vadd.f32 %v860, %v878
        %v880 = vpop.f32.mrf.mxu0
        %v881 = vadd.f32 %v862, %v880
        %882 = vdwg.mxu0
        %883 = vmatpush.bf16.msra.mxu0 %v709
        %884 = vmatpush.bf16.msra.mxu0 %v705
        %885 = vmatpush.bf16.msra.mxu0 %v701
        %886 = vmatpush.bf16.msra.mxu0 %v697
        %887 = vmatpush.bf16.msra.mxu0 %v693
        %888 = vmatpush.bf16.msra.mxu0 %v689
        %889 = vmatpush.bf16.msra.mxu0 %v685
        %890 = vmatpush.bf16.msra.mxu0 %v681
        %891 = vmatmul.bf16.gmra.mxu0 %v479
        %v892 = vpop.f32.mrf.mxu0
        %v893 = vadd.f32 %v461, %v892
        %v894 = vpop.f32.mrf.mxu0
        %v895 = vadd.f32 %v461, %v894
        %896 = vmatmul.bf16.gmra.mxu0 %v481
        %v897 = vpop.f32.mrf.mxu0
        %v898 = vadd.f32 %v461, %v897
        %v899 = vpop.f32.mrf.mxu0
        %v900 = vadd.f32 %v461, %v899
        %901 = vdwg.mxu0
        %902 = vmatpush.bf16.msra.mxu0 %v741
        %903 = vmatpush.bf16.msra.mxu0 %v737
        %904 = vmatpush.bf16.msra.mxu0 %v733
        %905 = vmatpush.bf16.msra.mxu0 %v729
        %906 = vmatpush.bf16.msra.mxu0 %v725
        %907 = vmatpush.bf16.msra.mxu0 %v721
        %908 = vmatpush.bf16.msra.mxu0 %v717
        %909 = vmatpush.bf16.msra.mxu0 %v713
        %910 = vmatmul.bf16.gmra.mxu0 %v480
        %v911 = vpop.f32.mrf.mxu0
        %v912 = vadd.f32 %v893, %v911
        %v913 = vpop.f32.mrf.mxu0
        %v914 = vadd.f32 %v895, %v913
        %915 = vmatmul.bf16.gmra.mxu0 %v482
        %v916 = vpop.f32.mrf.mxu0
        %v917 = vadd.f32 %v898, %v916
        %v918 = vpop.f32.mrf.mxu0
        %v919 = vadd.f32 %v900, %v918
        %920 = vdwg.mxu0
        %921 = vmatpush.bf16.msra.mxu0 %v710
        %922 = vmatpush.bf16.msra.mxu0 %v706
        %923 = vmatpush.bf16.msra.mxu0 %v702
        %924 = vmatpush.bf16.msra.mxu0 %v698
        %925 = vmatpush.bf16.msra.mxu0 %v694
        %926 = vmatpush.bf16.msra.mxu0 %v690
        %927 = vmatpush.bf16.msra.mxu0 %v686
        %928 = vmatpush.bf16.msra.mxu0 %v682
        %929 = vmatmul.bf16.gmra.mxu0 %v479
        %v930 = vpop.f32.mrf.mxu0
        %v931 = vadd.f32 %v462, %v930
        %v932 = vpop.f32.mrf.mxu0
        %v933 = vadd.f32 %v462, %v932
        %934 = vmatmul.bf16.gmra.mxu0 %v481
        %v935 = vpop.f32.mrf.mxu0
        %v936 = vadd.f32 %v462, %v935
        %v937 = vpop.f32.mrf.mxu0
        %v938 = vadd.f32 %v462, %v937
        %939 = vdwg.mxu0
        %940 = vmatpush.bf16.msra.mxu0 %v742
        %941 = vmatpush.bf16.msra.mxu0 %v738
        %942 = vmatpush.bf16.msra.mxu0 %v734
        %943 = vmatpush.bf16.msra.mxu0 %v730
        %944 = vmatpush.bf16.msra.mxu0 %v726
        %945 = vmatpush.bf16.msra.mxu0 %v722
        %946 = vmatpush.bf16.msra.mxu0 %v718
        %947 = vmatpush.bf16.msra.mxu0 %v714
        %948 = vmatmul.bf16.gmra.mxu0 %v480
        %v949 = vpop.f32.mrf.mxu0
        %v950 = vadd.f32 %v931, %v949
        %v951 = vpop.f32.mrf.mxu0
        %v952 = vadd.f32 %v933, %v951
        %953 = vmatmul.bf16.gmra.mxu0 %v482
        %v954 = vpop.f32.mrf.mxu0
        %v955 = vadd.f32 %v936, %v954
        %v956 = vpop.f32.mrf.mxu0
        %v957 = vadd.f32 %v938, %v956
        %958 = vdwg.mxu0
        %vm959 = vcmp.gt.f32.partialorder %v836, 0.0
        %vm960 = vcmp.gt.f32.partialorder %v874, 0.0
        %vm961 = vcmp.gt.f32.partialorder %v912, 0.0
        %vm962 = vcmp.gt.f32.partialorder %v950, 0.0
        %vm963 = vcmp.gt.f32.partialorder %v838, 0.0
        %vm964 = vcmp.gt.f32.partialorder %v876, 0.0
        %vm965 = vcmp.gt.f32.partialorder %v914, 0.0
        %vm966 = vcmp.gt.f32.partialorder %v952, 0.0
        %vm967 = vcmp.gt.f32.partialorder %v841, 0.0
        %vm968 = vcmp.gt.f32.partialorder %v879, 0.0
        %vm969 = vcmp.gt.f32.partialorder %v917, 0.0
        %vm970 = vcmp.gt.f32.partialorder %v955, 0.0
        %vm971 = vcmp.gt.f32.partialorder %v843, 0.0
        %vm972 = vcmp.gt.f32.partialorder %v881, 0.0
        %vm973 = vcmp.gt.f32.partialorder %v919, 0.0
        %vm974 = vcmp.gt.f32.partialorder %v957, 0.0
        %v975 = vmin.f32 %v836, 0.0
        %v976 = vmin.f32 %v874, 0.0
        %v977 = vmin.f32 %v912, 0.0
        %v978 = vmin.f32 %v950, 0.0
        %v979 = vmin.f32 %v838, 0.0
        %v980 = vmin.f32 %v876, 0.0
        %v981 = vmin.f32 %v914, 0.0
        %v982 = vmin.f32 %v952, 0.0
        %v983 = vmin.f32 %v841, 0.0
        %v984 = vmin.f32 %v879, 0.0
        %v985 = vmin.f32 %v917, 0.0
        %v986 = vmin.f32 %v955, 0.0
        %v987 = vmin.f32 %v843, 0.0
        %v988 = vmin.f32 %v881, 0.0
        %v989 = vmin.f32 %v919, 0.0
        %v990 = vmin.f32 %v957, 0.0
        %v991 = vmul.f32 %v975, 1.442695
        %v992 = vpow.pop %v991
        %v993 = vmul.f32 %v976, 1.442695
        %v994 = vpow.pop %v993
        %v995 = vmul.f32 %v977, 1.442695
        %v996 = vpow.pop %v995
        %v997 = vmul.f32 %v978, 1.442695
        %v998 = vpow.pop %v997
        %v999 = vmul.f32 %v979, 1.442695
        %v1000 = vpow.pop %v999
        %v1001 = vmul.f32 %v980, 1.442695
        %v1002 = vpow.pop %v1001
        %v1003 = vmul.f32 %v981, 1.442695
        %v1004 = vpow.pop %v1003
        %v1005 = vmul.f32 %v982, 1.442695
        %v1006 = vpow.pop %v1005
        %v1007 = vmul.f32 %v983, 1.442695
        %v1008 = vpow.pop %v1007
        %v1009 = vmul.f32 %v984, 1.442695
        %v1010 = vpow.pop %v1009
        %v1011 = vmul.f32 %v985, 1.442695
        %v1012 = vpow.pop %v1011
        %v1013 = vmul.f32 %v986, 1.442695
        %v1014 = vpow.pop %v1013
        %v1015 = vmul.f32 %v987, 1.442695
        %v1016 = vpow.pop %v1015
        %v1017 = vmul.f32 %v988, 1.442695
        %v1018 = vpow.pop %v1017
        %v1019 = vmul.f32 %v989, 1.442695
        %v1020 = vpow.pop %v1019
        %v1021 = vmul.f32 %v990, 1.442695
        %v1022 = vpow.pop %v1021
        %v1023 = vsub.f32 %v992, 1.0
        %v1024 = vsub.f32 %v994, 1.0
        %v1025 = vsub.f32 %v996, 1.0
        %v1026 = vsub.f32 %v998, 1.0
        %v1027 = vsub.f32 %v1000, 1.0
        %v1028 = vsub.f32 %v1002, 1.0
        %v1029 = vsub.f32 %v1004, 1.0
        %v1030 = vsub.f32 %v1006, 1.0
        %v1031 = vsub.f32 %v1008, 1.0
        %v1032 = vsub.f32 %v1010, 1.0
        %v1033 = vsub.f32 %v1012, 1.0
        %v1034 = vsub.f32 %v1014, 1.0
        %v1035 = vsub.f32 %v1016, 1.0
        %v1036 = vsub.f32 %v1018, 1.0
        %v1037 = vsub.f32 %v1020, 1.0
        %v1038 = vsub.f32 %v1022, 1.0
        %v1039 = vsel %vm959, %v836, %v1023
        %v1040 = vsel %vm960, %v874, %v1024
        %v1041 = vsel %vm961, %v912, %v1025
        %v1042 = vsel %vm962, %v950, %v1026
        %v1043 = vsel %vm963, %v838, %v1027
        %v1044 = vsel %vm964, %v876, %v1028
        %v1045 = vsel %vm965, %v914, %v1029
        %v1046 = vsel %vm966, %v952, %v1030
        %v1047 = vsel %vm967, %v841, %v1031
        %v1048 = vsel %vm968, %v879, %v1032
        %v1049 = vsel %vm969, %v917, %v1033
        %v1050 = vsel %vm970, %v955, %v1034
        %v1051 = vsel %vm971, %v843, %v1035
        %v1052 = vsel %vm972, %v881, %v1036
        %v1053 = vsel %vm973, %v919, %v1037
        %v1054 = vsel %vm974, %v957, %v1038
        %v1055 = vpack.c.bf16 %v1043, %v1039
        %v1056 = vpack.c.bf16 %v1044, %v1040
        %v1057 = vpack.c.bf16 %v1045, %v1041
        %v1058 = vpack.c.bf16 %v1046, %v1042
        %v1059 = vpack.c.bf16 %v1051, %v1047
        %v1060 = vpack.c.bf16 %v1052, %v1048
        %v1061 = vpack.c.bf16 %v1053, %v1049
        %v1062 = vpack.c.bf16 %v1054, %v1050
        %v1063 = vld [vmem:[#allocation4] sm:$0xff]
        %v1064 = vld [vmem:[#allocation4 + $0x8] sm:$0xff]
        %v1065 = vld [vmem:[#allocation4 + $0x10] sm:$0xff]
        %v1066 = vld [vmem:[#allocation4 + $0x18] sm:$0xff]
        %v1067 = vld [vmem:[#allocation4 + $0x20] sm:$0xff]
        %v1068 = vld [vmem:[#allocation4 + $0x28] sm:$0xff]
        %v1069 = vld [vmem:[#allocation4 + $0x30] sm:$0xff]
        %v1070 = vld [vmem:[#allocation4 + $0x38] sm:$0xff]
        %v1071 = vld [vmem:[#allocation4 + $0x40] sm:$0xff]
        %v1072 = vld [vmem:[#allocation4 + $0x48] sm:$0xff]
        %v1073 = vld [vmem:[#allocation4 + $0x50] sm:$0xff]
        %v1074 = vld [vmem:[#allocation4 + $0x58] sm:$0xff]
        %v1075 = vld [vmem:[#allocation4 + $0x60] sm:$0xff]
        %v1076 = vld [vmem:[#allocation4 + $0x68] sm:$0xff]
        %v1077 = vld [vmem:[#allocation4 + $0x70] sm:$0xff]
        %v1078 = vld [vmem:[#allocation4 + $0x78] sm:$0xff]
        %v1079 = vld [vmem:[#allocation4 + $0x80] sm:$0xff]
        %v1080 = vld [vmem:[#allocation4 + $0x88] sm:$0xff]
        %v1081 = vld [vmem:[#allocation4 + $0x90] sm:$0xff]
        %v1082 = vld [vmem:[#allocation4 + $0x98] sm:$0xff]
        %v1083 = vld [vmem:[#allocation4 + $0xa0] sm:$0xff]
        %v1084 = vld [vmem:[#allocation4 + $0xa8] sm:$0xff]
        %v1085 = vld [vmem:[#allocation4 + $0xb0] sm:$0xff]
        %v1086 = vld [vmem:[#allocation4 + $0xb8] sm:$0xff]
        %v1087 = vld [vmem:[#allocation4 + $0xc0] sm:$0xff]
        %v1088 = vld [vmem:[#allocation4 + $0xc8] sm:$0xff]
        %v1089 = vld [vmem:[#allocation4 + $0xd0] sm:$0xff]
        %v1090 = vld [vmem:[#allocation4 + $0xd8] sm:$0xff]
        %v1091 = vld [vmem:[#allocation4 + $0xe0] sm:$0xff]
        %v1092 = vld [vmem:[#allocation4 + $0xe8] sm:$0xff]
        %v1093 = vld [vmem:[#allocation4 + $0xf0] sm:$0xff]
        %v1094 = vld [vmem:[#allocation4 + $0xf8] sm:$0xff]
        %v1095 = vld [vmem:[#allocation4 + $0x100] sm:$0xff]
        %v1096 = vld [vmem:[#allocation4 + $0x108] sm:$0xff]
        %v1097 = vld [vmem:[#allocation4 + $0x110] sm:$0xff]
        %v1098 = vld [vmem:[#allocation4 + $0x118] sm:$0xff]
        %v1099 = vld [vmem:[#allocation4 + $0x120] sm:$0xff]
        %v1100 = vld [vmem:[#allocation4 + $0x128] sm:$0xff]
        %v1101 = vld [vmem:[#allocation4 + $0x130] sm:$0xff]
        %v1102 = vld [vmem:[#allocation4 + $0x138] sm:$0xff]
        %v1103 = vld [vmem:[#allocation4 + $0x140] sm:$0xff]
        %v1104 = vld [vmem:[#allocation4 + $0x148] sm:$0xff]
        %v1105 = vld [vmem:[#allocation4 + $0x150] sm:$0xff]
        %v1106 = vld [vmem:[#allocation4 + $0x158] sm:$0xff]
        %v1107 = vld [vmem:[#allocation4 + $0x160] sm:$0xff]
        %v1108 = vld [vmem:[#allocation4 + $0x168] sm:$0xff]
        %v1109 = vld [vmem:[#allocation4 + $0x170] sm:$0xff]
        %v1110 = vld [vmem:[#allocation4 + $0x178] sm:$0xff]
        %v1111 = vld [vmem:[#allocation4 + $0x180] sm:$0xff]
        %v1112 = vld [vmem:[#allocation4 + $0x188] sm:$0xff]
        %v1113 = vld [vmem:[#allocation4 + $0x190] sm:$0xff]
        %v1114 = vld [vmem:[#allocation4 + $0x198] sm:$0xff]
        %v1115 = vld [vmem:[#allocation4 + $0x1a0] sm:$0xff]
        %v1116 = vld [vmem:[#allocation4 + $0x1a8] sm:$0xff]
        %v1117 = vld [vmem:[#allocation4 + $0x1b0] sm:$0xff]
        %v1118 = vld [vmem:[#allocation4 + $0x1b8] sm:$0xff]
        %v1119 = vld [vmem:[#allocation4 + $0x1c0] sm:$0xff]
        %v1120 = vld [vmem:[#allocation4 + $0x1c8] sm:$0xff]
        %v1121 = vld [vmem:[#allocation4 + $0x1d0] sm:$0xff]
        %v1122 = vld [vmem:[#allocation4 + $0x1d8] sm:$0xff]
        %v1123 = vld [vmem:[#allocation4 + $0x1e0] sm:$0xff]
        %v1124 = vld [vmem:[#allocation4 + $0x1e8] sm:$0xff]
        %v1125 = vld [vmem:[#allocation4 + $0x1f0] sm:$0xff]
        %v1126 = vld [vmem:[#allocation4 + $0x1f8] sm:$0xff]
        %v1127 = vld [vmem:[#allocation4 + $0x200] sm:$0xff]
        %v1128 = vld [vmem:[#allocation4 + $0x208] sm:$0xff]
        %v1129 = vld [vmem:[#allocation4 + $0x210] sm:$0xff]
        %v1130 = vld [vmem:[#allocation4 + $0x218] sm:$0xff]
        %v1131 = vld [vmem:[#allocation4 + $0x220] sm:$0xff]
        %v1132 = vld [vmem:[#allocation4 + $0x228] sm:$0xff]
        %v1133 = vld [vmem:[#allocation4 + $0x230] sm:$0xff]
        %v1134 = vld [vmem:[#allocation4 + $0x238] sm:$0xff]
        %v1135 = vld [vmem:[#allocation4 + $0x240] sm:$0xff]
        %v1136 = vld [vmem:[#allocation4 + $0x248] sm:$0xff]
        %v1137 = vld [vmem:[#allocation4 + $0x250] sm:$0xff]
        %v1138 = vld [vmem:[#allocation4 + $0x258] sm:$0xff]
        %v1139 = vld [vmem:[#allocation4 + $0x260] sm:$0xff]
        %v1140 = vld [vmem:[#allocation4 + $0x268] sm:$0xff]
        %v1141 = vld [vmem:[#allocation4 + $0x270] sm:$0xff]
        %v1142 = vld [vmem:[#allocation4 + $0x278] sm:$0xff]
        %v1143 = vld [vmem:[#allocation4 + $0x280] sm:$0xff]
        %v1144 = vld [vmem:[#allocation4 + $0x288] sm:$0xff]
        %v1145 = vld [vmem:[#allocation4 + $0x290] sm:$0xff]
        %v1146 = vld [vmem:[#allocation4 + $0x298] sm:$0xff]
        %v1147 = vld [vmem:[#allocation4 + $0x2a0] sm:$0xff]
        %v1148 = vld [vmem:[#allocation4 + $0x2a8] sm:$0xff]
        %v1149 = vld [vmem:[#allocation4 + $0x2b0] sm:$0xff]
        %v1150 = vld [vmem:[#allocation4 + $0x2b8] sm:$0xff]
        %v1151 = vld [vmem:[#allocation4 + $0x2c0] sm:$0xff]
        %v1152 = vld [vmem:[#allocation4 + $0x2c8] sm:$0xff]
        %v1153 = vld [vmem:[#allocation4 + $0x2d0] sm:$0xff]
        %v1154 = vld [vmem:[#allocation4 + $0x2d8] sm:$0xff]
        %v1155 = vld [vmem:[#allocation4 + $0x2e0] sm:$0xff]
        %v1156 = vld [vmem:[#allocation4 + $0x2e8] sm:$0xff]
        %v1157 = vld [vmem:[#allocation4 + $0x2f0] sm:$0xff]
        %v1158 = vld [vmem:[#allocation4 + $0x2f8] sm:$0xff]
        %v1159 = vld [vmem:[#allocation4 + $0x300] sm:$0xff]
        %v1160 = vld [vmem:[#allocation4 + $0x308] sm:$0xff]
        %v1161 = vld [vmem:[#allocation4 + $0x310] sm:$0xff]
        %v1162 = vld [vmem:[#allocation4 + $0x318] sm:$0xff]
        %v1163 = vld [vmem:[#allocation4 + $0x320] sm:$0xff]
        %v1164 = vld [vmem:[#allocation4 + $0x328] sm:$0xff]
        %v1165 = vld [vmem:[#allocation4 + $0x330] sm:$0xff]
        %v1166 = vld [vmem:[#allocation4 + $0x338] sm:$0xff]
        %v1167 = vld [vmem:[#allocation4 + $0x340] sm:$0xff]
        %v1168 = vld [vmem:[#allocation4 + $0x348] sm:$0xff]
        %v1169 = vld [vmem:[#allocation4 + $0x350] sm:$0xff]
        %v1170 = vld [vmem:[#allocation4 + $0x358] sm:$0xff]
        %v1171 = vld [vmem:[#allocation4 + $0x360] sm:$0xff]
        %v1172 = vld [vmem:[#allocation4 + $0x368] sm:$0xff]
        %v1173 = vld [vmem:[#allocation4 + $0x370] sm:$0xff]
        %v1174 = vld [vmem:[#allocation4 + $0x378] sm:$0xff]
        %v1175 = vld [vmem:[#allocation4 + $0x380] sm:$0xff]
        %v1176 = vld [vmem:[#allocation4 + $0x388] sm:$0xff]
        %v1177 = vld [vmem:[#allocation4 + $0x390] sm:$0xff]
        %v1178 = vld [vmem:[#allocation4 + $0x398] sm:$0xff]
        %v1179 = vld [vmem:[#allocation4 + $0x3a0] sm:$0xff]
        %v1180 = vld [vmem:[#allocation4 + $0x3a8] sm:$0xff]
        %v1181 = vld [vmem:[#allocation4 + $0x3b0] sm:$0xff]
        %v1182 = vld [vmem:[#allocation4 + $0x3b8] sm:$0xff]
        %v1183 = vld [vmem:[#allocation4 + $0x3c0] sm:$0xff]
        %v1184 = vld [vmem:[#allocation4 + $0x3c8] sm:$0xff]
        %v1185 = vld [vmem:[#allocation4 + $0x3d0] sm:$0xff]
        %v1186 = vld [vmem:[#allocation4 + $0x3d8] sm:$0xff]
        %v1187 = vld [vmem:[#allocation4 + $0x3e0] sm:$0xff]
        %v1188 = vld [vmem:[#allocation4 + $0x3e8] sm:$0xff]
        %v1189 = vld [vmem:[#allocation4 + $0x3f0] sm:$0xff]
        %v1190 = vld [vmem:[#allocation4 + $0x3f8] sm:$0xff]
        %v1191 = vld [vmem:[%s4] sm:$0xf]
        %v1193 = vperm.slane %v1191, 0
        %v1194 = vperm.slane %v1191, 1
        %v1195 = vperm.slane %v1191, 2
        %v1196 = vperm.slane %v1191, 3
        %v1329 = vunpack.c.l.b16 %v1063
        %v1330 = vunpack.c.h.b16 %v1063
        %v1331 = vunpack.c.l.b16 %v1064
        %v1332 = vunpack.c.h.b16 %v1064
        %v1333 = vunpack.c.l.b16 %v1065
        %v1334 = vunpack.c.h.b16 %v1065
        %v1335 = vunpack.c.l.b16 %v1066
        %v1336 = vunpack.c.h.b16 %v1066
        %v1337 = vunpack.c.l.b16 %v1067
        %v1338 = vunpack.c.h.b16 %v1067
        %v1339 = vunpack.c.l.b16 %v1068
        %v1340 = vunpack.c.h.b16 %v1068
        %v1341 = vunpack.c.l.b16 %v1069
        %v1342 = vunpack.c.h.b16 %v1069
        %v1343 = vunpack.c.l.b16 %v1070
        %v1344 = vunpack.c.h.b16 %v1070
        %v1345 = vunpack.c.l.b16 %v1071
        %v1346 = vunpack.c.h.b16 %v1071
        %v1347 = vunpack.c.l.b16 %v1072
        %v1348 = vunpack.c.h.b16 %v1072
        %v1349 = vunpack.c.l.b16 %v1073
        %v1350 = vunpack.c.h.b16 %v1073
        %v1351 = vunpack.c.l.b16 %v1074
        %v1352 = vunpack.c.h.b16 %v1074
        %v1353 = vunpack.c.l.b16 %v1075
        %v1354 = vunpack.c.h.b16 %v1075
        %v1355 = vunpack.c.l.b16 %v1076
        %v1356 = vunpack.c.h.b16 %v1076
        %v1357 = vunpack.c.l.b16 %v1077
        %v1358 = vunpack.c.h.b16 %v1077
        %v1359 = vunpack.c.l.b16 %v1078
        %v1360 = vunpack.c.h.b16 %v1078
        %v1361 = vunpack.c.l.b16 %v1079
        %v1362 = vunpack.c.h.b16 %v1079
        %v1363 = vunpack.c.l.b16 %v1080
        %v1364 = vunpack.c.h.b16 %v1080
        %v1365 = vunpack.c.l.b16 %v1081
        %v1366 = vunpack.c.h.b16 %v1081
        %v1367 = vunpack.c.l.b16 %v1082
        %v1368 = vunpack.c.h.b16 %v1082
        %v1369 = vunpack.c.l.b16 %v1083
        %v1370 = vunpack.c.h.b16 %v1083
        %v1371 = vunpack.c.l.b16 %v1084
        %v1372 = vunpack.c.h.b16 %v1084
        %v1373 = vunpack.c.l.b16 %v1085
        %v1374 = vunpack.c.h.b16 %v1085
        %v1375 = vunpack.c.l.b16 %v1086
        %v1376 = vunpack.c.h.b16 %v1086
        %v1377 = vunpack.c.l.b16 %v1087
        %v1378 = vunpack.c.h.b16 %v1087
        %v1379 = vunpack.c.l.b16 %v1088
        %v1380 = vunpack.c.h.b16 %v1088
        %v1381 = vunpack.c.l.b16 %v1089
        %v1382 = vunpack.c.h.b16 %v1089
        %v1383 = vunpack.c.l.b16 %v1090
        %v1384 = vunpack.c.h.b16 %v1090
        %v1385 = vunpack.c.l.b16 %v1091
        %v1386 = vunpack.c.h.b16 %v1091
        %v1387 = vunpack.c.l.b16 %v1092
        %v1388 = vunpack.c.h.b16 %v1092
        %v1389 = vunpack.c.l.b16 %v1093
        %v1390 = vunpack.c.h.b16 %v1093
        %v1391 = vunpack.c.l.b16 %v1094
        %v1392 = vunpack.c.h.b16 %v1094
        %v1393 = vunpack.c.l.b16 %v1095
        %v1394 = vunpack.c.h.b16 %v1095
        %v1395 = vunpack.c.l.b16 %v1096
        %v1396 = vunpack.c.h.b16 %v1096
        %v1397 = vunpack.c.l.b16 %v1097
        %v1398 = vunpack.c.h.b16 %v1097
        %v1399 = vunpack.c.l.b16 %v1098
        %v1400 = vunpack.c.h.b16 %v1098
        %v1401 = vunpack.c.l.b16 %v1099
        %v1402 = vunpack.c.h.b16 %v1099
        %v1403 = vunpack.c.l.b16 %v1100
        %v1404 = vunpack.c.h.b16 %v1100
        %v1405 = vunpack.c.l.b16 %v1101
        %v1406 = vunpack.c.h.b16 %v1101
        %v1407 = vunpack.c.l.b16 %v1102
        %v1408 = vunpack.c.h.b16 %v1102
        %v1409 = vunpack.c.l.b16 %v1103
        %v1410 = vunpack.c.h.b16 %v1103
        %v1411 = vunpack.c.l.b16 %v1104
        %v1412 = vunpack.c.h.b16 %v1104
        %v1413 = vunpack.c.l.b16 %v1105
        %v1414 = vunpack.c.h.b16 %v1105
        %v1415 = vunpack.c.l.b16 %v1106
        %v1416 = vunpack.c.h.b16 %v1106
        %v1417 = vunpack.c.l.b16 %v1107
        %v1418 = vunpack.c.h.b16 %v1107
        %v1419 = vunpack.c.l.b16 %v1108
        %v1420 = vunpack.c.h.b16 %v1108
        %v1421 = vunpack.c.l.b16 %v1109
        %v1422 = vunpack.c.h.b16 %v1109
        %v1423 = vunpack.c.l.b16 %v1110
        %v1424 = vunpack.c.h.b16 %v1110
        %v1425 = vunpack.c.l.b16 %v1111
        %v1426 = vunpack.c.h.b16 %v1111
        %v1427 = vunpack.c.l.b16 %v1112
        %v1428 = vunpack.c.h.b16 %v1112
        %v1429 = vunpack.c.l.b16 %v1113
        %v1430 = vunpack.c.h.b16 %v1113
        %v1431 = vunpack.c.l.b16 %v1114
        %v1432 = vunpack.c.h.b16 %v1114
        %v1433 = vunpack.c.l.b16 %v1115
        %v1434 = vunpack.c.h.b16 %v1115
        %v1435 = vunpack.c.l.b16 %v1116
        %v1436 = vunpack.c.h.b16 %v1116
        %v1437 = vunpack.c.l.b16 %v1117
        %v1438 = vunpack.c.h.b16 %v1117
        %v1439 = vunpack.c.l.b16 %v1118
        %v1440 = vunpack.c.h.b16 %v1118
        %v1441 = vunpack.c.l.b16 %v1119
        %v1442 = vunpack.c.h.b16 %v1119
        %v1443 = vunpack.c.l.b16 %v1120
        %v1444 = vunpack.c.h.b16 %v1120
        %v1445 = vunpack.c.l.b16 %v1121
        %v1446 = vunpack.c.h.b16 %v1121
        %v1447 = vunpack.c.l.b16 %v1122
        %v1448 = vunpack.c.h.b16 %v1122
        %v1449 = vunpack.c.l.b16 %v1123
        %v1450 = vunpack.c.h.b16 %v1123
        %v1451 = vunpack.c.l.b16 %v1124
        %v1452 = vunpack.c.h.b16 %v1124
        %v1453 = vunpack.c.l.b16 %v1125
        %v1454 = vunpack.c.h.b16 %v1125
        %v1455 = vunpack.c.l.b16 %v1126
        %v1456 = vunpack.c.h.b16 %v1126
        %v1457 = vunpack.c.l.b16 %v1127
        %v1458 = vunpack.c.h.b16 %v1127
        %v1459 = vunpack.c.l.b16 %v1128
        %v1460 = vunpack.c.h.b16 %v1128
        %v1461 = vunpack.c.l.b16 %v1129
        %v1462 = vunpack.c.h.b16 %v1129
        %v1463 = vunpack.c.l.b16 %v1130
        %v1464 = vunpack.c.h.b16 %v1130
        %v1465 = vunpack.c.l.b16 %v1131
        %v1466 = vunpack.c.h.b16 %v1131
        %v1467 = vunpack.c.l.b16 %v1132
        %v1468 = vunpack.c.h.b16 %v1132
        %v1469 = vunpack.c.l.b16 %v1133
        %v1470 = vunpack.c.h.b16 %v1133
        %v1471 = vunpack.c.l.b16 %v1134
        %v1472 = vunpack.c.h.b16 %v1134
        %v1473 = vunpack.c.l.b16 %v1135
        %v1474 = vunpack.c.h.b16 %v1135
        %v1475 = vunpack.c.l.b16 %v1136
        %v1476 = vunpack.c.h.b16 %v1136
        %v1477 = vunpack.c.l.b16 %v1137
        %v1478 = vunpack.c.h.b16 %v1137
        %v1479 = vunpack.c.l.b16 %v1138
        %v1480 = vunpack.c.h.b16 %v1138
        %v1481 = vunpack.c.l.b16 %v1139
        %v1482 = vunpack.c.h.b16 %v1139
        %v1483 = vunpack.c.l.b16 %v1140
        %v1484 = vunpack.c.h.b16 %v1140
        %v1485 = vunpack.c.l.b16 %v1141
        %v1486 = vunpack.c.h.b16 %v1141
        %v1487 = vunpack.c.l.b16 %v1142
        %v1488 = vunpack.c.h.b16 %v1142
        %v1489 = vunpack.c.l.b16 %v1143
        %v1490 = vunpack.c.h.b16 %v1143
        %v1491 = vunpack.c.l.b16 %v1144
        %v1492 = vunpack.c.h.b16 %v1144
        %v1493 = vunpack.c.l.b16 %v1145
        %v1494 = vunpack.c.h.b16 %v1145
        %v1495 = vunpack.c.l.b16 %v1146
        %v1496 = vunpack.c.h.b16 %v1146
        %v1497 = vunpack.c.l.b16 %v1147
        %v1498 = vunpack.c.h.b16 %v1147
        %v1499 = vunpack.c.l.b16 %v1148
        %v1500 = vunpack.c.h.b16 %v1148
        %v1501 = vunpack.c.l.b16 %v1149
        %v1502 = vunpack.c.h.b16 %v1149
        %v1503 = vunpack.c.l.b16 %v1150
        %v1504 = vunpack.c.h.b16 %v1150
        %v1505 = vunpack.c.l.b16 %v1151
        %v1506 = vunpack.c.h.b16 %v1151
        %v1507 = vunpack.c.l.b16 %v1152
        %v1508 = vunpack.c.h.b16 %v1152
        %v1509 = vunpack.c.l.b16 %v1153
        %v1510 = vunpack.c.h.b16 %v1153
        %v1511 = vunpack.c.l.b16 %v1154
        %v1512 = vunpack.c.h.b16 %v1154
        %v1513 = vunpack.c.l.b16 %v1155
        %v1514 = vunpack.c.h.b16 %v1155
        %v1515 = vunpack.c.l.b16 %v1156
        %v1516 = vunpack.c.h.b16 %v1156
        %v1517 = vunpack.c.l.b16 %v1157
        %v1518 = vunpack.c.h.b16 %v1157
        %v1519 = vunpack.c.l.b16 %v1158
        %v1520 = vunpack.c.h.b16 %v1158
        %v1521 = vunpack.c.l.b16 %v1159
        %v1522 = vunpack.c.h.b16 %v1159
        %v1523 = vunpack.c.l.b16 %v1160
        %v1524 = vunpack.c.h.b16 %v1160
        %v1525 = vunpack.c.l.b16 %v1161
        %v1526 = vunpack.c.h.b16 %v1161
        %v1527 = vunpack.c.l.b16 %v1162
        %v1528 = vunpack.c.h.b16 %v1162
        %v1529 = vunpack.c.l.b16 %v1163
        %v1530 = vunpack.c.h.b16 %v1163
        %v1531 = vunpack.c.l.b16 %v1164
        %v1532 = vunpack.c.h.b16 %v1164
        %v1533 = vunpack.c.l.b16 %v1165
        %v1534 = vunpack.c.h.b16 %v1165
        %v1535 = vunpack.c.l.b16 %v1166
        %v1536 = vunpack.c.h.b16 %v1166
        %v1537 = vunpack.c.l.b16 %v1167
        %v1538 = vunpack.c.h.b16 %v1167
        %v1539 = vunpack.c.l.b16 %v1168
        %v1540 = vunpack.c.h.b16 %v1168
        %v1541 = vunpack.c.l.b16 %v1169
        %v1542 = vunpack.c.h.b16 %v1169
        %v1543 = vunpack.c.l.b16 %v1170
        %v1544 = vunpack.c.h.b16 %v1170
        %v1545 = vunpack.c.l.b16 %v1171
        %v1546 = vunpack.c.h.b16 %v1171
        %v1547 = vunpack.c.l.b16 %v1172
        %v1548 = vunpack.c.h.b16 %v1172
        %v1549 = vunpack.c.l.b16 %v1173
        %v1550 = vunpack.c.h.b16 %v1173
        %v1551 = vunpack.c.l.b16 %v1174
        %v1552 = vunpack.c.h.b16 %v1174
        %v1553 = vunpack.c.l.b16 %v1175
        %v1554 = vunpack.c.h.b16 %v1175
        %v1555 = vunpack.c.l.b16 %v1176
        %v1556 = vunpack.c.h.b16 %v1176
        %v1557 = vunpack.c.l.b16 %v1177
        %v1558 = vunpack.c.h.b16 %v1177
        %v1559 = vunpack.c.l.b16 %v1178
        %v1560 = vunpack.c.h.b16 %v1178
        %v1561 = vunpack.c.l.b16 %v1179
        %v1562 = vunpack.c.h.b16 %v1179
        %v1563 = vunpack.c.l.b16 %v1180
        %v1564 = vunpack.c.h.b16 %v1180
        %v1565 = vunpack.c.l.b16 %v1181
        %v1566 = vunpack.c.h.b16 %v1181
        %v1567 = vunpack.c.l.b16 %v1182
        %v1568 = vunpack.c.h.b16 %v1182
        %v1569 = vunpack.c.l.b16 %v1183
        %v1570 = vunpack.c.h.b16 %v1183
        %v1571 = vunpack.c.l.b16 %v1184
        %v1572 = vunpack.c.h.b16 %v1184
        %v1573 = vunpack.c.l.b16 %v1185
        %v1574 = vunpack.c.h.b16 %v1185
        %v1575 = vunpack.c.l.b16 %v1186
        %v1576 = vunpack.c.h.b16 %v1186
        %v1577 = vunpack.c.l.b16 %v1187
        %v1578 = vunpack.c.h.b16 %v1187
        %v1579 = vunpack.c.l.b16 %v1188
        %v1580 = vunpack.c.h.b16 %v1188
        %v1581 = vunpack.c.l.b16 %v1189
        %v1582 = vunpack.c.h.b16 %v1189
        %v1583 = vunpack.c.l.b16 %v1190
        %v1584 = vunpack.c.h.b16 %v1190
        %v1585 = vpack.c.b16 %v1333, %v1329
        %v1586 = vpack.c.b16 %v1334, %v1330
        %v1587 = vpack.c.b16 %v1335, %v1331
        %v1588 = vpack.c.b16 %v1336, %v1332
        %v1589 = vpack.c.b16 %v1341, %v1337
        %v1590 = vpack.c.b16 %v1342, %v1338
        %v1591 = vpack.c.b16 %v1343, %v1339
        %v1592 = vpack.c.b16 %v1344, %v1340
        %v1593 = vpack.c.b16 %v1349, %v1345
        %v1594 = vpack.c.b16 %v1350, %v1346
        %v1595 = vpack.c.b16 %v1351, %v1347
        %v1596 = vpack.c.b16 %v1352, %v1348
        %v1597 = vpack.c.b16 %v1357, %v1353
        %v1598 = vpack.c.b16 %v1358, %v1354
        %v1599 = vpack.c.b16 %v1359, %v1355
        %v1600 = vpack.c.b16 %v1360, %v1356
        %v1601 = vpack.c.b16 %v1365, %v1361
        %v1602 = vpack.c.b16 %v1366, %v1362
        %v1603 = vpack.c.b16 %v1367, %v1363
        %v1604 = vpack.c.b16 %v1368, %v1364
        %v1605 = vpack.c.b16 %v1373, %v1369
        %v1606 = vpack.c.b16 %v1374, %v1370
        %v1607 = vpack.c.b16 %v1375, %v1371
        %v1608 = vpack.c.b16 %v1376, %v1372
        %v1609 = vpack.c.b16 %v1381, %v1377
        %v1610 = vpack.c.b16 %v1382, %v1378
        %v1611 = vpack.c.b16 %v1383, %v1379
        %v1612 = vpack.c.b16 %v1384, %v1380
        %v1613 = vpack.c.b16 %v1389, %v1385
        %v1614 = vpack.c.b16 %v1390, %v1386
        %v1615 = vpack.c.b16 %v1391, %v1387
        %v1616 = vpack.c.b16 %v1392, %v1388
        %v1617 = vpack.c.b16 %v1397, %v1393
        %v1618 = vpack.c.b16 %v1398, %v1394
        %v1619 = vpack.c.b16 %v1399, %v1395
        %v1620 = vpack.c.b16 %v1400, %v1396
        %v1621 = vpack.c.b16 %v1405, %v1401
        %v1622 = vpack.c.b16 %v1406, %v1402
        %v1623 = vpack.c.b16 %v1407, %v1403
        %v1624 = vpack.c.b16 %v1408, %v1404
        %v1625 = vpack.c.b16 %v1413, %v1409
        %v1626 = vpack.c.b16 %v1414, %v1410
        %v1627 = vpack.c.b16 %v1415, %v1411
        %v1628 = vpack.c.b16 %v1416, %v1412
        %v1629 = vpack.c.b16 %v1421, %v1417
        %v1630 = vpack.c.b16 %v1422, %v1418
        %v1631 = vpack.c.b16 %v1423, %v1419
        %v1632 = vpack.c.b16 %v1424, %v1420
        %v1633 = vpack.c.b16 %v1429, %v1425
        %v1634 = vpack.c.b16 %v1430, %v1426
        %v1635 = vpack.c.b16 %v1431, %v1427
        %v1636 = vpack.c.b16 %v1432, %v1428
        %v1637 = vpack.c.b16 %v1437, %v1433
        %v1638 = vpack.c.b16 %v1438, %v1434
        %v1639 = vpack.c.b16 %v1439, %v1435
        %v1640 = vpack.c.b16 %v1440, %v1436
        %v1641 = vpack.c.b16 %v1445, %v1441
        %v1642 = vpack.c.b16 %v1446, %v1442
        %v1643 = vpack.c.b16 %v1447, %v1443
        %v1644 = vpack.c.b16 %v1448, %v1444
        %v1645 = vpack.c.b16 %v1453, %v1449
        %v1646 = vpack.c.b16 %v1454, %v1450
        %v1647 = vpack.c.b16 %v1455, %v1451
        %v1648 = vpack.c.b16 %v1456, %v1452
        %v1649 = vpack.c.b16 %v1461, %v1457
        %v1650 = vpack.c.b16 %v1462, %v1458
        %v1651 = vpack.c.b16 %v1463, %v1459
        %v1652 = vpack.c.b16 %v1464, %v1460
        %v1653 = vpack.c.b16 %v1469, %v1465
        %v1654 = vpack.c.b16 %v1470, %v1466
        %v1655 = vpack.c.b16 %v1471, %v1467
        %v1656 = vpack.c.b16 %v1472, %v1468
        %v1657 = vpack.c.b16 %v1477, %v1473
        %v1658 = vpack.c.b16 %v1478, %v1474
        %v1659 = vpack.c.b16 %v1479, %v1475
        %v1660 = vpack.c.b16 %v1480, %v1476
        %v1661 = vpack.c.b16 %v1485, %v1481
        %v1662 = vpack.c.b16 %v1486, %v1482
        %v1663 = vpack.c.b16 %v1487, %v1483
        %v1664 = vpack.c.b16 %v1488, %v1484
        %v1665 = vpack.c.b16 %v1493, %v1489
        %v1666 = vpack.c.b16 %v1494, %v1490
        %v1667 = vpack.c.b16 %v1495, %v1491
        %v1668 = vpack.c.b16 %v1496, %v1492
        %v1669 = vpack.c.b16 %v1501, %v1497
        %v1670 = vpack.c.b16 %v1502, %v1498
        %v1671 = vpack.c.b16 %v1503, %v1499
        %v1672 = vpack.c.b16 %v1504, %v1500
        %v1673 = vpack.c.b16 %v1509, %v1505
        %v1674 = vpack.c.b16 %v1510, %v1506
        %v1675 = vpack.c.b16 %v1511, %v1507
        %v1676 = vpack.c.b16 %v1512, %v1508
        %v1677 = vpack.c.b16 %v1517, %v1513
        %v1678 = vpack.c.b16 %v1518, %v1514
        %v1679 = vpack.c.b16 %v1519, %v1515
        %v1680 = vpack.c.b16 %v1520, %v1516
        %v1681 = vpack.c.b16 %v1525, %v1521
        %v1682 = vpack.c.b16 %v1526, %v1522
        %v1683 = vpack.c.b16 %v1527, %v1523
        %v1684 = vpack.c.b16 %v1528, %v1524
        %v1685 = vpack.c.b16 %v1533, %v1529
        %v1686 = vpack.c.b16 %v1534, %v1530
        %v1687 = vpack.c.b16 %v1535, %v1531
        %v1688 = vpack.c.b16 %v1536, %v1532
        %v1689 = vpack.c.b16 %v1541, %v1537
        %v1690 = vpack.c.b16 %v1542, %v1538
        %v1691 = vpack.c.b16 %v1543, %v1539
        %v1692 = vpack.c.b16 %v1544, %v1540
        %v1693 = vpack.c.b16 %v1549, %v1545
        %v1694 = vpack.c.b16 %v1550, %v1546
        %v1695 = vpack.c.b16 %v1551, %v1547
        %v1696 = vpack.c.b16 %v1552, %v1548
        %v1697 = vpack.c.b16 %v1557, %v1553
        %v1698 = vpack.c.b16 %v1558, %v1554
        %v1699 = vpack.c.b16 %v1559, %v1555
        %v1700 = vpack.c.b16 %v1560, %v1556
        %v1701 = vpack.c.b16 %v1565, %v1561
        %v1702 = vpack.c.b16 %v1566, %v1562
        %v1703 = vpack.c.b16 %v1567, %v1563
        %v1704 = vpack.c.b16 %v1568, %v1564
        %v1705 = vpack.c.b16 %v1573, %v1569
        %v1706 = vpack.c.b16 %v1574, %v1570
        %v1707 = vpack.c.b16 %v1575, %v1571
        %v1708 = vpack.c.b16 %v1576, %v1572
        %v1709 = vpack.c.b16 %v1581, %v1577
        %v1710 = vpack.c.b16 %v1582, %v1578
        %v1711 = vpack.c.b16 %v1583, %v1579
        %v1712 = vpack.c.b16 %v1584, %v1580
        %1841 = vmatpush.bf16.msra.mxu0 %v1613
        %1842 = vmatpush.bf16.msra.mxu0 %v1609
        %1843 = vmatpush.bf16.msra.mxu0 %v1605
        %1844 = vmatpush.bf16.msra.mxu0 %v1601
        %1845 = vmatpush.bf16.msra.mxu0 %v1597
        %1846 = vmatpush.bf16.msra.mxu0 %v1593
        %1847 = vmatpush.bf16.msra.mxu0 %v1589
        %1848 = vmatpush.bf16.msra.mxu0 %v1585
        %1849 = vmatmul.bf16.gmra.mxu0 %v1055
        %v1850 = vpop.f32.mrf.mxu0
        %v1851 = vadd.f32 %v1193, %v1850
        %v1852 = vpop.f32.mrf.mxu0
        %v1853 = vadd.f32 %v1193, %v1852
        %1854 = vmatmul.bf16.gmra.mxu0 %v1059
        %v1855 = vpop.f32.mrf.mxu0
        %v1856 = vadd.f32 %v1193, %v1855
        %v1857 = vpop.f32.mrf.mxu0
        %v1858 = vadd.f32 %v1193, %v1857
        %1859 = vdwg.mxu0
        %1860 = vmatpush.bf16.msra.mxu0 %v1645
        %1861 = vmatpush.bf16.msra.mxu0 %v1641
        %1862 = vmatpush.bf16.msra.mxu0 %v1637
        %1863 = vmatpush.bf16.msra.mxu0 %v1633
        %1864 = vmatpush.bf16.msra.mxu0 %v1629
        %1865 = vmatpush.bf16.msra.mxu0 %v1625
        %1866 = vmatpush.bf16.msra.mxu0 %v1621
        %1867 = vmatpush.bf16.msra.mxu0 %v1617
        %1868 = vmatmul.bf16.gmra.mxu0 %v1056
        %v1869 = vpop.f32.mrf.mxu0
        %v1870 = vadd.f32 %v1851, %v1869
        %v1871 = vpop.f32.mrf.mxu0
        %v1872 = vadd.f32 %v1853, %v1871
        %1873 = vmatmul.bf16.gmra.mxu0 %v1060
        %v1874 = vpop.f32.mrf.mxu0
        %v1875 = vadd.f32 %v1856, %v1874
        %v1876 = vpop.f32.mrf.mxu0
        %v1877 = vadd.f32 %v1858, %v1876
        %1878 = vdwg.mxu0
        %1879 = vmatpush.bf16.msra.mxu0 %v1677
        %1880 = vmatpush.bf16.msra.mxu0 %v1673
        %1881 = vmatpush.bf16.msra.mxu0 %v1669
        %1882 = vmatpush.bf16.msra.mxu0 %v1665
        %1883 = vmatpush.bf16.msra.mxu0 %v1661
        %1884 = vmatpush.bf16.msra.mxu0 %v1657
        %1885 = vmatpush.bf16.msra.mxu0 %v1653
        %1886 = vmatpush.bf16.msra.mxu0 %v1649
        %1887 = vmatmul.bf16.gmra.mxu0 %v1057
        %v1888 = vpop.f32.mrf.mxu0
        %v1889 = vadd.f32 %v1870, %v1888
        %v1890 = vpop.f32.mrf.mxu0
        %v1891 = vadd.f32 %v1872, %v1890
        %1892 = vmatmul.bf16.gmra.mxu0 %v1061
        %v1893 = vpop.f32.mrf.mxu0
        %v1894 = vadd.f32 %v1875, %v1893
        %v1895 = vpop.f32.mrf.mxu0
        %v1896 = vadd.f32 %v1877, %v1895
        %1897 = vdwg.mxu0
        %1898 = vmatpush.bf16.msra.mxu0 %v1709
        %1899 = vmatpush.bf16.msra.mxu0 %v1705
        %1900 = vmatpush.bf16.msra.mxu0 %v1701
        %1901 = vmatpush.bf16.msra.mxu0 %v1697
        %1902 = vmatpush.bf16.msra.mxu0 %v1693
        %1903 = vmatpush.bf16.msra.mxu0 %v1689
        %1904 = vmatpush.bf16.msra.mxu0 %v1685
        %1905 = vmatpush.bf16.msra.mxu0 %v1681
        %1906 = vmatmul.bf16.gmra.mxu0 %v1058
        %v1907 = vpop.f32.mrf.mxu0
        %v1908 = vadd.f32 %v1889, %v1907
        %v1909 = vpop.f32.mrf.mxu0
        %v1910 = vadd.f32 %v1891, %v1909
        %1911 = vmatmul.bf16.gmra.mxu0 %v1062
        %v1912 = vpop.f32.mrf.mxu0
        %v1913 = vadd.f32 %v1894, %v1912
        %v1914 = vpop.f32.mrf.mxu0
        %v1915 = vadd.f32 %v1896, %v1914
        %1916 = vdwg.mxu0
        %1917 = vmatpush.bf16.msra.mxu0 %v1614
        %1918 = vmatpush.bf16.msra.mxu0 %v1610
        %1919 = vmatpush.bf16.msra.mxu0 %v1606
        %1920 = vmatpush.bf16.msra.mxu0 %v1602
        %1921 = vmatpush.bf16.msra.mxu0 %v1598
        %1922 = vmatpush.bf16.msra.mxu0 %v1594
        %1923 = vmatpush.bf16.msra.mxu0 %v1590
        %1924 = vmatpush.bf16.msra.mxu0 %v1586
        %1925 = vmatmul.bf16.gmra.mxu0 %v1055
        %v1926 = vpop.f32.mrf.mxu0
        %v1927 = vadd.f32 %v1194, %v1926
        %v1928 = vpop.f32.mrf.mxu0
        %v1929 = vadd.f32 %v1194, %v1928
        %1930 = vmatmul.bf16.gmra.mxu0 %v1059
        %v1931 = vpop.f32.mrf.mxu0
        %v1932 = vadd.f32 %v1194, %v1931
        %v1933 = vpop.f32.mrf.mxu0
        %v1934 = vadd.f32 %v1194, %v1933
        %1935 = vdwg.mxu0
        %1936 = vmatpush.bf16.msra.mxu0 %v1646
        %1937 = vmatpush.bf16.msra.mxu0 %v1642
        %1938 = vmatpush.bf16.msra.mxu0 %v1638
        %1939 = vmatpush.bf16.msra.mxu0 %v1634
        %1940 = vmatpush.bf16.msra.mxu0 %v1630
        %1941 = vmatpush.bf16.msra.mxu0 %v1626
        %1942 = vmatpush.bf16.msra.mxu0 %v1622
        %1943 = vmatpush.bf16.msra.mxu0 %v1618
        %1944 = vmatmul.bf16.gmra.mxu0 %v1056
        %v1945 = vpop.f32.mrf.mxu0
        %v1946 = vadd.f32 %v1927, %v1945
        %v1947 = vpop.f32.mrf.mxu0
        %v1948 = vadd.f32 %v1929, %v1947
        %1949 = vmatmul.bf16.gmra.mxu0 %v1060
        %v1950 = vpop.f32.mrf.mxu0
        %v1951 = vadd.f32 %v1932, %v1950
        %v1952 = vpop.f32.mrf.mxu0
        %v1953 = vadd.f32 %v1934, %v1952
        %1954 = vdwg.mxu0
        %1955 = vmatpush.bf16.msra.mxu0 %v1678
        %1956 = vmatpush.bf16.msra.mxu0 %v1674
        %1957 = vmatpush.bf16.msra.mxu0 %v1670
        %1958 = vmatpush.bf16.msra.mxu0 %v1666
        %1959 = vmatpush.bf16.msra.mxu0 %v1662
        %1960 = vmatpush.bf16.msra.mxu0 %v1658
        %1961 = vmatpush.bf16.msra.mxu0 %v1654
        %1962 = vmatpush.bf16.msra.mxu0 %v1650
        %1963 = vmatmul.bf16.gmra.mxu0 %v1057
        %v1964 = vpop.f32.mrf.mxu0
        %v1965 = vadd.f32 %v1946, %v1964
        %v1966 = vpop.f32.mrf.mxu0
        %v1967 = vadd.f32 %v1948, %v1966
        %1968 = vmatmul.bf16.gmra.mxu0 %v1061
        %v1969 = vpop.f32.mrf.mxu0
        %v1970 = vadd.f32 %v1951, %v1969
        %v1971 = vpop.f32.mrf.mxu0
        %v1972 = vadd.f32 %v1953, %v1971
        %1973 = vdwg.mxu0
        %1974 = vmatpush.bf16.msra.mxu0 %v1710
        %1975 = vmatpush.bf16.msra.mxu0 %v1706
        %1976 = vmatpush.bf16.msra.mxu0 %v1702
        %1977 = vmatpush.bf16.msra.mxu0 %v1698
        %1978 = vmatpush.bf16.msra.mxu0 %v1694
        %1979 = vmatpush.bf16.msra.mxu0 %v1690
        %1980 = vmatpush.bf16.msra.mxu0 %v1686
        %1981 = vmatpush.bf16.msra.mxu0 %v1682
        %1982 = vmatmul.bf16.gmra.mxu0 %v1058
        %v1983 = vpop.f32.mrf.mxu0
        %v1984 = vadd.f32 %v1965, %v1983
        %v1985 = vpop.f32.mrf.mxu0
        %v1986 = vadd.f32 %v1967, %v1985
        %1987 = vmatmul.bf16.gmra.mxu0 %v1062
        %v1988 = vpop.f32.mrf.mxu0
        %v1989 = vadd.f32 %v1970, %v1988
        %v1990 = vpop.f32.mrf.mxu0
        %v1991 = vadd.f32 %v1972, %v1990
        %1992 = vdwg.mxu0
        %1993 = vmatpush.bf16.msra.mxu0 %v1615
        %1994 = vmatpush.bf16.msra.mxu0 %v1611
        %1995 = vmatpush.bf16.msra.mxu0 %v1607
        %1996 = vmatpush.bf16.msra.mxu0 %v1603
        %1997 = vmatpush.bf16.msra.mxu0 %v1599
        %1998 = vmatpush.bf16.msra.mxu0 %v1595
        %1999 = vmatpush.bf16.msra.mxu0 %v1591
        %2000 = vmatpush.bf16.msra.mxu0 %v1587
        %2001 = vmatmul.bf16.gmra.mxu0 %v1055
        %v2002 = vpop.f32.mrf.mxu0
        %v2003 = vadd.f32 %v1195, %v2002
        %v2004 = vpop.f32.mrf.mxu0
        %v2005 = vadd.f32 %v1195, %v2004
        %2006 = vmatmul.bf16.gmra.mxu0 %v1059
        %v2007 = vpop.f32.mrf.mxu0
        %v2008 = vadd.f32 %v1195, %v2007
        %v2009 = vpop.f32.mrf.mxu0
        %v2010 = vadd.f32 %v1195, %v2009
        %2011 = vdwg.mxu0
        %2012 = vmatpush.bf16.msra.mxu0 %v1647
        %2013 = vmatpush.bf16.msra.mxu0 %v1643
        %2014 = vmatpush.bf16.msra.mxu0 %v1639
        %2015 = vmatpush.bf16.msra.mxu0 %v1635
        %2016 = vmatpush.bf16.msra.mxu0 %v1631
        %2017 = vmatpush.bf16.msra.mxu0 %v1627
        %2018 = vmatpush.bf16.msra.mxu0 %v1623
        %2019 = vmatpush.bf16.msra.mxu0 %v1619
        %2020 = vmatmul.bf16.gmra.mxu0 %v1056
        %v2021 = vpop.f32.mrf.mxu0
        %v2022 = vadd.f32 %v2003, %v2021
        %v2023 = vpop.f32.mrf.mxu0
        %v2024 = vadd.f32 %v2005, %v2023
        %2025 = vmatmul.bf16.gmra.mxu0 %v1060
        %v2026 = vpop.f32.mrf.mxu0
        %v2027 = vadd.f32 %v2008, %v2026
        %v2028 = vpop.f32.mrf.mxu0
        %v2029 = vadd.f32 %v2010, %v2028
        %2030 = vdwg.mxu0
        %2031 = vmatpush.bf16.msra.mxu0 %v1679
        %2032 = vmatpush.bf16.msra.mxu0 %v1675
        %2033 = vmatpush.bf16.msra.mxu0 %v1671
        %2034 = vmatpush.bf16.msra.mxu0 %v1667
        %2035 = vmatpush.bf16.msra.mxu0 %v1663
        %2036 = vmatpush.bf16.msra.mxu0 %v1659
        %2037 = vmatpush.bf16.msra.mxu0 %v1655
        %2038 = vmatpush.bf16.msra.mxu0 %v1651
        %2039 = vmatmul.bf16.gmra.mxu0 %v1057
        %v2040 = vpop.f32.mrf.mxu0
        %v2041 = vadd.f32 %v2022, %v2040
        %v2042 = vpop.f32.mrf.mxu0
        %v2043 = vadd.f32 %v2024, %v2042
        %2044 = vmatmul.bf16.gmra.mxu0 %v1061
        %v2045 = vpop.f32.mrf.mxu0
        %v2046 = vadd.f32 %v2027, %v2045
        %v2047 = vpop.f32.mrf.mxu0
        %v2048 = vadd.f32 %v2029, %v2047
        %2049 = vdwg.mxu0
        %2050 = vmatpush.bf16.msra.mxu0 %v1711
        %2051 = vmatpush.bf16.msra.mxu0 %v1707
        %2052 = vmatpush.bf16.msra.mxu0 %v1703
        %2053 = vmatpush.bf16.msra.mxu0 %v1699
        %2054 = vmatpush.bf16.msra.mxu0 %v1695
        %2055 = vmatpush.bf16.msra.mxu0 %v1691
        %2056 = vmatpush.bf16.msra.mxu0 %v1687
        %2057 = vmatpush.bf16.msra.mxu0 %v1683
        %2058 = vmatmul.bf16.gmra.mxu0 %v1058
        %v2059 = vpop.f32.mrf.mxu0
        %v2060 = vadd.f32 %v2041, %v2059
        %v2061 = vpop.f32.mrf.mxu0
        %v2062 = vadd.f32 %v2043, %v2061
        %2063 = vmatmul.bf16.gmra.mxu0 %v1062
        %v2064 = vpop.f32.mrf.mxu0
        %v2065 = vadd.f32 %v2046, %v2064
        %v2066 = vpop.f32.mrf.mxu0
        %v2067 = vadd.f32 %v2048, %v2066
        %2068 = vdwg.mxu0
        %2069 = vmatpush.bf16.msra.mxu0 %v1616
        %2070 = vmatpush.bf16.msra.mxu0 %v1612
        %2071 = vmatpush.bf16.msra.mxu0 %v1608
        %2072 = vmatpush.bf16.msra.mxu0 %v1604
        %2073 = vmatpush.bf16.msra.mxu0 %v1600
        %2074 = vmatpush.bf16.msra.mxu0 %v1596
        %2075 = vmatpush.bf16.msra.mxu0 %v1592
        %2076 = vmatpush.bf16.msra.mxu0 %v1588
        %2077 = vmatmul.bf16.gmra.mxu0 %v1055
        %v2078 = vpop.f32.mrf.mxu0
        %v2079 = vadd.f32 %v1196, %v2078
        %v2080 = vpop.f32.mrf.mxu0
        %v2081 = vadd.f32 %v1196, %v2080
        %2082 = vmatmul.bf16.gmra.mxu0 %v1059
        %v2083 = vpop.f32.mrf.mxu0
        %v2084 = vadd.f32 %v1196, %v2083
        %v2085 = vpop.f32.mrf.mxu0
        %v2086 = vadd.f32 %v1196, %v2085
        %2087 = vdwg.mxu0
        %2088 = vmatpush.bf16.msra.mxu0 %v1648
        %2089 = vmatpush.bf16.msra.mxu0 %v1644
        %2090 = vmatpush.bf16.msra.mxu0 %v1640
        %2091 = vmatpush.bf16.msra.mxu0 %v1636
        %2092 = vmatpush.bf16.msra.mxu0 %v1632
        %2093 = vmatpush.bf16.msra.mxu0 %v1628
        %2094 = vmatpush.bf16.msra.mxu0 %v1624
        %2095 = vmatpush.bf16.msra.mxu0 %v1620
        %2096 = vmatmul.bf16.gmra.mxu0 %v1056
        %v2097 = vpop.f32.mrf.mxu0
        %v2098 = vadd.f32 %v2079, %v2097
        %v2099 = vpop.f32.mrf.mxu0
        %v2100 = vadd.f32 %v2081, %v2099
        %2101 = vmatmul.bf16.gmra.mxu0 %v1060
        %v2102 = vpop.f32.mrf.mxu0
        %v2103 = vadd.f32 %v2084, %v2102
        %v2104 = vpop.f32.mrf.mxu0
        %v2105 = vadd.f32 %v2086, %v2104
        %2106 = vdwg.mxu0
        %2107 = vmatpush.bf16.msra.mxu0 %v1680
        %2108 = vmatpush.bf16.msra.mxu0 %v1676
        %2109 = vmatpush.bf16.msra.mxu0 %v1672
        %2110 = vmatpush.bf16.msra.mxu0 %v1668
        %2111 = vmatpush.bf16.msra.mxu0 %v1664
        %2112 = vmatpush.bf16.msra.mxu0 %v1660
        %2113 = vmatpush.bf16.msra.mxu0 %v1656
        %2114 = vmatpush.bf16.msra.mxu0 %v1652
        %2115 = vmatmul.bf16.gmra.mxu0 %v1057
        %v2116 = vpop.f32.mrf.mxu0
        %v2117 = vadd.f32 %v2098, %v2116
        %v2118 = vpop.f32.mrf.mxu0
        %v2119 = vadd.f32 %v2100, %v2118
        %2120 = vmatmul.bf16.gmra.mxu0 %v1061
        %v2121 = vpop.f32.mrf.mxu0
        %v2122 = vadd.f32 %v2103, %v2121
        %v2123 = vpop.f32.mrf.mxu0
        %v2124 = vadd.f32 %v2105, %v2123
        %2125 = vdwg.mxu0
        %2126 = vmatpush.bf16.msra.mxu0 %v1712
        %2127 = vmatpush.bf16.msra.mxu0 %v1708
        %2128 = vmatpush.bf16.msra.mxu0 %v1704
        %2129 = vmatpush.bf16.msra.mxu0 %v1700
        %2130 = vmatpush.bf16.msra.mxu0 %v1696
        %2131 = vmatpush.bf16.msra.mxu0 %v1692
        %2132 = vmatpush.bf16.msra.mxu0 %v1688
        %2133 = vmatpush.bf16.msra.mxu0 %v1684
        %2134 = vmatmul.bf16.gmra.mxu0 %v1058
        %v2135 = vpop.f32.mrf.mxu0
        %v2136 = vadd.f32 %v2117, %v2135
        %v2137 = vpop.f32.mrf.mxu0
        %v2138 = vadd.f32 %v2119, %v2137
        %2139 = vmatmul.bf16.gmra.mxu0 %v1062
        %v2140 = vpop.f32.mrf.mxu0
        %v2141 = vadd.f32 %v2122, %v2140
        %v2142 = vpop.f32.mrf.mxu0
        %v2143 = vadd.f32 %v2124, %v2142
        %2144 = vdwg.mxu0
        %vm2145 = vcmp.gt.f32.partialorder %v1908, 0.0
        %vm2146 = vcmp.gt.f32.partialorder %v1984, 0.0
        %vm2147 = vcmp.gt.f32.partialorder %v2060, 0.0
        %vm2148 = vcmp.gt.f32.partialorder %v2136, 0.0
        %vm2149 = vcmp.gt.f32.partialorder %v1910, 0.0
        %vm2150 = vcmp.gt.f32.partialorder %v1986, 0.0
        %vm2151 = vcmp.gt.f32.partialorder %v2062, 0.0
        %vm2152 = vcmp.gt.f32.partialorder %v2138, 0.0
        %vm2153 = vcmp.gt.f32.partialorder %v1913, 0.0
        %vm2154 = vcmp.gt.f32.partialorder %v1989, 0.0
        %vm2155 = vcmp.gt.f32.partialorder %v2065, 0.0
        %vm2156 = vcmp.gt.f32.partialorder %v2141, 0.0
        %vm2157 = vcmp.gt.f32.partialorder %v1915, 0.0
        %vm2158 = vcmp.gt.f32.partialorder %v1991, 0.0
        %vm2159 = vcmp.gt.f32.partialorder %v2067, 0.0
        %vm2160 = vcmp.gt.f32.partialorder %v2143, 0.0
        %v2161 = vmin.f32 %v1908, 0.0
        %v2162 = vmin.f32 %v1984, 0.0
        %v2163 = vmin.f32 %v2060, 0.0
        %v2164 = vmin.f32 %v2136, 0.0
        %v2165 = vmin.f32 %v1910, 0.0
        %v2166 = vmin.f32 %v1986, 0.0
        %v2167 = vmin.f32 %v2062, 0.0
        %v2168 = vmin.f32 %v2138, 0.0
        %v2169 = vmin.f32 %v1913, 0.0
        %v2170 = vmin.f32 %v1989, 0.0
        %v2171 = vmin.f32 %v2065, 0.0
        %v2172 = vmin.f32 %v2141, 0.0
        %v2173 = vmin.f32 %v1915, 0.0
        %v2174 = vmin.f32 %v1991, 0.0
        %v2175 = vmin.f32 %v2067, 0.0
        %v2176 = vmin.f32 %v2143, 0.0
        %v2177 = vmul.f32 %v2161, 1.442695
        %v2178 = vpow.pop %v2177
        %v2179 = vmul.f32 %v2162, 1.442695
        %v2180 = vpow.pop %v2179
        %v2181 = vmul.f32 %v2163, 1.442695
        %v2182 = vpow.pop %v2181
        %v2183 = vmul.f32 %v2164, 1.442695
        %v2184 = vpow.pop %v2183
        %v2185 = vmul.f32 %v2165, 1.442695
        %v2186 = vpow.pop %v2185
        %v2187 = vmul.f32 %v2166, 1.442695
        %v2188 = vpow.pop %v2187
        %v2189 = vmul.f32 %v2167, 1.442695
        %v2190 = vpow.pop %v2189
        %v2191 = vmul.f32 %v2168, 1.442695
        %v2192 = vpow.pop %v2191
        %v2193 = vmul.f32 %v2169, 1.442695
        %v2194 = vpow.pop %v2193
        %v2195 = vmul.f32 %v2170, 1.442695
        %v2196 = vpow.pop %v2195
        %v2197 = vmul.f32 %v2171, 1.442695
        %v2198 = vpow.pop %v2197
        %v2199 = vmul.f32 %v2172, 1.442695
        %v2200 = vpow.pop %v2199
        %v2201 = vmul.f32 %v2173, 1.442695
        %v2202 = vpow.pop %v2201
        %v2203 = vmul.f32 %v2174, 1.442695
        %v2204 = vpow.pop %v2203
        %v2205 = vmul.f32 %v2175, 1.442695
        %v2206 = vpow.pop %v2205
        %v2207 = vmul.f32 %v2176, 1.442695
        %v2208 = vpow.pop %v2207
        %v2209 = vsub.f32 %v2178, 1.0
        %v2210 = vsub.f32 %v2180, 1.0
        %v2211 = vsub.f32 %v2182, 1.0
        %v2212 = vsub.f32 %v2184, 1.0
        %v2213 = vsub.f32 %v2186, 1.0
        %v2214 = vsub.f32 %v2188, 1.0
        %v2215 = vsub.f32 %v2190, 1.0
        %v2216 = vsub.f32 %v2192, 1.0
        %v2217 = vsub.f32 %v2194, 1.0
        %v2218 = vsub.f32 %v2196, 1.0
        %v2219 = vsub.f32 %v2198, 1.0
        %v2220 = vsub.f32 %v2200, 1.0
        %v2221 = vsub.f32 %v2202, 1.0
        %v2222 = vsub.f32 %v2204, 1.0
        %v2223 = vsub.f32 %v2206, 1.0
        %v2224 = vsub.f32 %v2208, 1.0
        %v2225 = vsel %vm2145, %v1908, %v2209
        %v2226 = vsel %vm2146, %v1984, %v2210
        %v2227 = vsel %vm2147, %v2060, %v2211
        %v2228 = vsel %vm2148, %v2136, %v2212
        %v2229 = vsel %vm2149, %v1910, %v2213
        %v2230 = vsel %vm2150, %v1986, %v2214
        %v2231 = vsel %vm2151, %v2062, %v2215
        %v2232 = vsel %vm2152, %v2138, %v2216
        %v2233 = vsel %vm2153, %v1913, %v2217
        %v2234 = vsel %vm2154, %v1989, %v2218
        %v2235 = vsel %vm2155, %v2065, %v2219
        %v2236 = vsel %vm2156, %v2141, %v2220
        %v2237 = vsel %vm2157, %v1915, %v2221
        %v2238 = vsel %vm2158, %v1991, %v2222
        %v2239 = vsel %vm2159, %v2067, %v2223
        %v2240 = vsel %vm2160, %v2143, %v2224
        %v2241 = vpack.c.bf16 %v2229, %v2225
        %v2242 = vpack.c.bf16 %v2230, %v2226
        %v2243 = vpack.c.bf16 %v2231, %v2227
        %v2244 = vpack.c.bf16 %v2232, %v2228
        %v2245 = vpack.c.bf16 %v2237, %v2233
        %v2246 = vpack.c.bf16 %v2238, %v2234
        %v2247 = vpack.c.bf16 %v2239, %v2235
        %v2248 = vpack.c.bf16 %v2240, %v2236
        %v2249 = vld [vmem:[#allocation6] sm:$0xff]
        %v2250 = vld [vmem:[#allocation6 + $0x8] sm:$0xff]
        %v2251 = vld [vmem:[#allocation6 + $0x10] sm:$0xff]
        %v2252 = vld [vmem:[#allocation6 + $0x18] sm:$0xff]
        %v2253 = vld [vmem:[#allocation6 + $0x20] sm:$0xff]
        %v2254 = vld [vmem:[#allocation6 + $0x28] sm:$0xff]
        %v2255 = vld [vmem:[#allocation6 + $0x30] sm:$0xff]
        %v2256 = vld [vmem:[#allocation6 + $0x38] sm:$0xff]
        %v2257 = vld [vmem:[#allocation6 + $0x40] sm:$0xff]
        %v2258 = vld [vmem:[#allocation6 + $0x48] sm:$0xff]
        %v2259 = vld [vmem:[#allocation6 + $0x50] sm:$0xff]
        %v2260 = vld [vmem:[#allocation6 + $0x58] sm:$0xff]
        %v2261 = vld [vmem:[#allocation6 + $0x60] sm:$0xff]
        %v2262 = vld [vmem:[#allocation6 + $0x68] sm:$0xff]
        %v2263 = vld [vmem:[#allocation6 + $0x70] sm:$0xff]
        %v2264 = vld [vmem:[#allocation6 + $0x78] sm:$0xff]
        %v2265 = vld [vmem:[#allocation6 + $0x80] sm:$0xff]
        %v2266 = vld [vmem:[#allocation6 + $0x88] sm:$0xff]
        %v2267 = vld [vmem:[#allocation6 + $0x90] sm:$0xff]
        %v2268 = vld [vmem:[#allocation6 + $0x98] sm:$0xff]
        %v2269 = vld [vmem:[#allocation6 + $0xa0] sm:$0xff]
        %v2270 = vld [vmem:[#allocation6 + $0xa8] sm:$0xff]
        %v2271 = vld [vmem:[#allocation6 + $0xb0] sm:$0xff]
        %v2272 = vld [vmem:[#allocation6 + $0xb8] sm:$0xff]
        %v2273 = vld [vmem:[#allocation6 + $0xc0] sm:$0xff]
        %v2274 = vld [vmem:[#allocation6 + $0xc8] sm:$0xff]
        %v2275 = vld [vmem:[#allocation6 + $0xd0] sm:$0xff]
        %v2276 = vld [vmem:[#allocation6 + $0xd8] sm:$0xff]
        %v2277 = vld [vmem:[#allocation6 + $0xe0] sm:$0xff]
        %v2278 = vld [vmem:[#allocation6 + $0xe8] sm:$0xff]
        %v2279 = vld [vmem:[#allocation6 + $0xf0] sm:$0xff]
        %v2280 = vld [vmem:[#allocation6 + $0xf8] sm:$0xff]
        %v2281 = vld [vmem:[#allocation6 + $0x100] sm:$0xff]
        %v2282 = vld [vmem:[#allocation6 + $0x108] sm:$0xff]
        %v2283 = vld [vmem:[#allocation6 + $0x110] sm:$0xff]
        %v2284 = vld [vmem:[#allocation6 + $0x118] sm:$0xff]
        %v2285 = vld [vmem:[#allocation6 + $0x120] sm:$0xff]
        %v2286 = vld [vmem:[#allocation6 + $0x128] sm:$0xff]
        %v2287 = vld [vmem:[#allocation6 + $0x130] sm:$0xff]
        %v2288 = vld [vmem:[#allocation6 + $0x138] sm:$0xff]
        %v2289 = vld [vmem:[#allocation6 + $0x140] sm:$0xff]
        %v2290 = vld [vmem:[#allocation6 + $0x148] sm:$0xff]
        %v2291 = vld [vmem:[#allocation6 + $0x150] sm:$0xff]
        %v2292 = vld [vmem:[#allocation6 + $0x158] sm:$0xff]
        %v2293 = vld [vmem:[#allocation6 + $0x160] sm:$0xff]
        %v2294 = vld [vmem:[#allocation6 + $0x168] sm:$0xff]
        %v2295 = vld [vmem:[#allocation6 + $0x170] sm:$0xff]
        %v2296 = vld [vmem:[#allocation6 + $0x178] sm:$0xff]
        %v2297 = vld [vmem:[#allocation6 + $0x180] sm:$0xff]
        %v2298 = vld [vmem:[#allocation6 + $0x188] sm:$0xff]
        %v2299 = vld [vmem:[#allocation6 + $0x190] sm:$0xff]
        %v2300 = vld [vmem:[#allocation6 + $0x198] sm:$0xff]
        %v2301 = vld [vmem:[#allocation6 + $0x1a0] sm:$0xff]
        %v2302 = vld [vmem:[#allocation6 + $0x1a8] sm:$0xff]
        %v2303 = vld [vmem:[#allocation6 + $0x1b0] sm:$0xff]
        %v2304 = vld [vmem:[#allocation6 + $0x1b8] sm:$0xff]
        %v2305 = vld [vmem:[#allocation6 + $0x1c0] sm:$0xff]
        %v2306 = vld [vmem:[#allocation6 + $0x1c8] sm:$0xff]
        %v2307 = vld [vmem:[#allocation6 + $0x1d0] sm:$0xff]
        %v2308 = vld [vmem:[#allocation6 + $0x1d8] sm:$0xff]
        %v2309 = vld [vmem:[#allocation6 + $0x1e0] sm:$0xff]
        %v2310 = vld [vmem:[#allocation6 + $0x1e8] sm:$0xff]
        %v2311 = vld [vmem:[#allocation6 + $0x1f0] sm:$0xff]
        %v2312 = vld [vmem:[#allocation6 + $0x1f8] sm:$0xff]
        %v2313 = vld [vmem:[#allocation6 + $0x200] sm:$0xff]
        %v2314 = vld [vmem:[#allocation6 + $0x208] sm:$0xff]
        %v2315 = vld [vmem:[#allocation6 + $0x210] sm:$0xff]
        %v2316 = vld [vmem:[#allocation6 + $0x218] sm:$0xff]
        %v2317 = vld [vmem:[#allocation6 + $0x220] sm:$0xff]
        %v2318 = vld [vmem:[#allocation6 + $0x228] sm:$0xff]
        %v2319 = vld [vmem:[#allocation6 + $0x230] sm:$0xff]
        %v2320 = vld [vmem:[#allocation6 + $0x238] sm:$0xff]
        %v2321 = vld [vmem:[#allocation6 + $0x240] sm:$0xff]
        %v2322 = vld [vmem:[#allocation6 + $0x248] sm:$0xff]
        %v2323 = vld [vmem:[#allocation6 + $0x250] sm:$0xff]
        %v2324 = vld [vmem:[#allocation6 + $0x258] sm:$0xff]
        %v2325 = vld [vmem:[#allocation6 + $0x260] sm:$0xff]
        %v2326 = vld [vmem:[#allocation6 + $0x268] sm:$0xff]
        %v2327 = vld [vmem:[#allocation6 + $0x270] sm:$0xff]
        %v2328 = vld [vmem:[#allocation6 + $0x278] sm:$0xff]
        %v2329 = vld [vmem:[#allocation6 + $0x280] sm:$0xff]
        %v2330 = vld [vmem:[#allocation6 + $0x288] sm:$0xff]
        %v2331 = vld [vmem:[#allocation6 + $0x290] sm:$0xff]
        %v2332 = vld [vmem:[#allocation6 + $0x298] sm:$0xff]
        %v2333 = vld [vmem:[#allocation6 + $0x2a0] sm:$0xff]
        %v2334 = vld [vmem:[#allocation6 + $0x2a8] sm:$0xff]
        %v2335 = vld [vmem:[#allocation6 + $0x2b0] sm:$0xff]
        %v2336 = vld [vmem:[#allocation6 + $0x2b8] sm:$0xff]
        %v2337 = vld [vmem:[#allocation6 + $0x2c0] sm:$0xff]
        %v2338 = vld [vmem:[#allocation6 + $0x2c8] sm:$0xff]
        %v2339 = vld [vmem:[#allocation6 + $0x2d0] sm:$0xff]
        %v2340 = vld [vmem:[#allocation6 + $0x2d8] sm:$0xff]
        %v2341 = vld [vmem:[#allocation6 + $0x2e0] sm:$0xff]
        %v2342 = vld [vmem:[#allocation6 + $0x2e8] sm:$0xff]
        %v2343 = vld [vmem:[#allocation6 + $0x2f0] sm:$0xff]
        %v2344 = vld [vmem:[#allocation6 + $0x2f8] sm:$0xff]
        %v2345 = vld [vmem:[#allocation6 + $0x300] sm:$0xff]
        %v2346 = vld [vmem:[#allocation6 + $0x308] sm:$0xff]
        %v2347 = vld [vmem:[#allocation6 + $0x310] sm:$0xff]
        %v2348 = vld [vmem:[#allocation6 + $0x318] sm:$0xff]
        %v2349 = vld [vmem:[#allocation6 + $0x320] sm:$0xff]
        %v2350 = vld [vmem:[#allocation6 + $0x328] sm:$0xff]
        %v2351 = vld [vmem:[#allocation6 + $0x330] sm:$0xff]
        %v2352 = vld [vmem:[#allocation6 + $0x338] sm:$0xff]
        %v2353 = vld [vmem:[#allocation6 + $0x340] sm:$0xff]
        %v2354 = vld [vmem:[#allocation6 + $0x348] sm:$0xff]
        %v2355 = vld [vmem:[#allocation6 + $0x350] sm:$0xff]
        %v2356 = vld [vmem:[#allocation6 + $0x358] sm:$0xff]
        %v2357 = vld [vmem:[#allocation6 + $0x360] sm:$0xff]
        %v2358 = vld [vmem:[#allocation6 + $0x368] sm:$0xff]
        %v2359 = vld [vmem:[#allocation6 + $0x370] sm:$0xff]
        %v2360 = vld [vmem:[#allocation6 + $0x378] sm:$0xff]
        %v2361 = vld [vmem:[#allocation6 + $0x380] sm:$0xff]
        %v2362 = vld [vmem:[#allocation6 + $0x388] sm:$0xff]
        %v2363 = vld [vmem:[#allocation6 + $0x390] sm:$0xff]
        %v2364 = vld [vmem:[#allocation6 + $0x398] sm:$0xff]
        %v2365 = vld [vmem:[#allocation6 + $0x3a0] sm:$0xff]
        %v2366 = vld [vmem:[#allocation6 + $0x3a8] sm:$0xff]
        %v2367 = vld [vmem:[#allocation6 + $0x3b0] sm:$0xff]
        %v2368 = vld [vmem:[#allocation6 + $0x3b8] sm:$0xff]
        %v2369 = vld [vmem:[#allocation6 + $0x3c0] sm:$0xff]
        %v2370 = vld [vmem:[#allocation6 + $0x3c8] sm:$0xff]
        %v2371 = vld [vmem:[#allocation6 + $0x3d0] sm:$0xff]
        %v2372 = vld [vmem:[#allocation6 + $0x3d8] sm:$0xff]
        %v2373 = vld [vmem:[#allocation6 + $0x3e0] sm:$0xff]
        %v2374 = vld [vmem:[#allocation6 + $0x3e8] sm:$0xff]
        %v2375 = vld [vmem:[#allocation6 + $0x3f0] sm:$0xff]
        %v2376 = vld [vmem:[#allocation6 + $0x3f8] sm:$0xff]
        %v2377 = vld [vmem:[%s6] sm:$0xf]
        %v2379 = vperm.slane %v2377, 0
        %v2380 = vperm.slane %v2377, 1
        %v2381 = vperm.slane %v2377, 2
        %v2382 = vperm.slane %v2377, 3
        %v2515 = vunpack.c.l.b16 %v2249
        %v2516 = vunpack.c.h.b16 %v2249
        %v2517 = vunpack.c.l.b16 %v2250
        %v2518 = vunpack.c.h.b16 %v2250
        %v2519 = vunpack.c.l.b16 %v2251
        %v2520 = vunpack.c.h.b16 %v2251
        %v2521 = vunpack.c.l.b16 %v2252
        %v2522 = vunpack.c.h.b16 %v2252
        %v2523 = vunpack.c.l.b16 %v2253
        %v2524 = vunpack.c.h.b16 %v2253
        %v2525 = vunpack.c.l.b16 %v2254
        %v2526 = vunpack.c.h.b16 %v2254
        %v2527 = vunpack.c.l.b16 %v2255
        %v2528 = vunpack.c.h.b16 %v2255
        %v2529 = vunpack.c.l.b16 %v2256
        %v2530 = vunpack.c.h.b16 %v2256
        %v2531 = vunpack.c.l.b16 %v2257
        %v2532 = vunpack.c.h.b16 %v2257
        %v2533 = vunpack.c.l.b16 %v2258
        %v2534 = vunpack.c.h.b16 %v2258
        %v2535 = vunpack.c.l.b16 %v2259
        %v2536 = vunpack.c.h.b16 %v2259
        %v2537 = vunpack.c.l.b16 %v2260
        %v2538 = vunpack.c.h.b16 %v2260
        %v2539 = vunpack.c.l.b16 %v2261
        %v2540 = vunpack.c.h.b16 %v2261
        %v2541 = vunpack.c.l.b16 %v2262
        %v2542 = vunpack.c.h.b16 %v2262
        %v2543 = vunpack.c.l.b16 %v2263
        %v2544 = vunpack.c.h.b16 %v2263
        %v2545 = vunpack.c.l.b16 %v2264
        %v2546 = vunpack.c.h.b16 %v2264
        %v2547 = vunpack.c.l.b16 %v2265
        %v2548 = vunpack.c.h.b16 %v2265
        %v2549 = vunpack.c.l.b16 %v2266
        %v2550 = vunpack.c.h.b16 %v2266
        %v2551 = vunpack.c.l.b16 %v2267
        %v2552 = vunpack.c.h.b16 %v2267
        %v2553 = vunpack.c.l.b16 %v2268
        %v2554 = vunpack.c.h.b16 %v2268
        %v2555 = vunpack.c.l.b16 %v2269
        %v2556 = vunpack.c.h.b16 %v2269
        %v2557 = vunpack.c.l.b16 %v2270
        %v2558 = vunpack.c.h.b16 %v2270
        %v2559 = vunpack.c.l.b16 %v2271
        %v2560 = vunpack.c.h.b16 %v2271
        %v2561 = vunpack.c.l.b16 %v2272
        %v2562 = vunpack.c.h.b16 %v2272
        %v2563 = vunpack.c.l.b16 %v2273
        %v2564 = vunpack.c.h.b16 %v2273
        %v2565 = vunpack.c.l.b16 %v2274
        %v2566 = vunpack.c.h.b16 %v2274
        %v2567 = vunpack.c.l.b16 %v2275
        %v2568 = vunpack.c.h.b16 %v2275
        %v2569 = vunpack.c.l.b16 %v2276
        %v2570 = vunpack.c.h.b16 %v2276
        %v2571 = vunpack.c.l.b16 %v2277
        %v2572 = vunpack.c.h.b16 %v2277
        %v2573 = vunpack.c.l.b16 %v2278
        %v2574 = vunpack.c.h.b16 %v2278
        %v2575 = vunpack.c.l.b16 %v2279
        %v2576 = vunpack.c.h.b16 %v2279
        %v2577 = vunpack.c.l.b16 %v2280
        %v2578 = vunpack.c.h.b16 %v2280
        %v2579 = vunpack.c.l.b16 %v2281
        %v2580 = vunpack.c.h.b16 %v2281
        %v2581 = vunpack.c.l.b16 %v2282
        %v2582 = vunpack.c.h.b16 %v2282
        %v2583 = vunpack.c.l.b16 %v2283
        %v2584 = vunpack.c.h.b16 %v2283
        %v2585 = vunpack.c.l.b16 %v2284
        %v2586 = vunpack.c.h.b16 %v2284
        %v2587 = vunpack.c.l.b16 %v2285
        %v2588 = vunpack.c.h.b16 %v2285
        %v2589 = vunpack.c.l.b16 %v2286
        %v2590 = vunpack.c.h.b16 %v2286
        %v2591 = vunpack.c.l.b16 %v2287
        %v2592 = vunpack.c.h.b16 %v2287
        %v2593 = vunpack.c.l.b16 %v2288
        %v2594 = vunpack.c.h.b16 %v2288
        %v2595 = vunpack.c.l.b16 %v2289
        %v2596 = vunpack.c.h.b16 %v2289
        %v2597 = vunpack.c.l.b16 %v2290
        %v2598 = vunpack.c.h.b16 %v2290
        %v2599 = vunpack.c.l.b16 %v2291
        %v2600 = vunpack.c.h.b16 %v2291
        %v2601 = vunpack.c.l.b16 %v2292
        %v2602 = vunpack.c.h.b16 %v2292
        %v2603 = vunpack.c.l.b16 %v2293
        %v2604 = vunpack.c.h.b16 %v2293
        %v2605 = vunpack.c.l.b16 %v2294
        %v2606 = vunpack.c.h.b16 %v2294
        %v2607 = vunpack.c.l.b16 %v2295
        %v2608 = vunpack.c.h.b16 %v2295
        %v2609 = vunpack.c.l.b16 %v2296
        %v2610 = vunpack.c.h.b16 %v2296
        %v2611 = vunpack.c.l.b16 %v2297
        %v2612 = vunpack.c.h.b16 %v2297
        %v2613 = vunpack.c.l.b16 %v2298
        %v2614 = vunpack.c.h.b16 %v2298
        %v2615 = vunpack.c.l.b16 %v2299
        %v2616 = vunpack.c.h.b16 %v2299
        %v2617 = vunpack.c.l.b16 %v2300
        %v2618 = vunpack.c.h.b16 %v2300
        %v2619 = vunpack.c.l.b16 %v2301
        %v2620 = vunpack.c.h.b16 %v2301
        %v2621 = vunpack.c.l.b16 %v2302
        %v2622 = vunpack.c.h.b16 %v2302
        %v2623 = vunpack.c.l.b16 %v2303
        %v2624 = vunpack.c.h.b16 %v2303
        %v2625 = vunpack.c.l.b16 %v2304
        %v2626 = vunpack.c.h.b16 %v2304
        %v2627 = vunpack.c.l.b16 %v2305
        %v2628 = vunpack.c.h.b16 %v2305
        %v2629 = vunpack.c.l.b16 %v2306
        %v2630 = vunpack.c.h.b16 %v2306
        %v2631 = vunpack.c.l.b16 %v2307
        %v2632 = vunpack.c.h.b16 %v2307
        %v2633 = vunpack.c.l.b16 %v2308
        %v2634 = vunpack.c.h.b16 %v2308
        %v2635 = vunpack.c.l.b16 %v2309
        %v2636 = vunpack.c.h.b16 %v2309
        %v2637 = vunpack.c.l.b16 %v2310
        %v2638 = vunpack.c.h.b16 %v2310
        %v2639 = vunpack.c.l.b16 %v2311
        %v2640 = vunpack.c.h.b16 %v2311
        %v2641 = vunpack.c.l.b16 %v2312
        %v2642 = vunpack.c.h.b16 %v2312
        %v2643 = vunpack.c.l.b16 %v2313
        %v2644 = vunpack.c.h.b16 %v2313
        %v2645 = vunpack.c.l.b16 %v2314
        %v2646 = vunpack.c.h.b16 %v2314
        %v2647 = vunpack.c.l.b16 %v2315
        %v2648 = vunpack.c.h.b16 %v2315
        %v2649 = vunpack.c.l.b16 %v2316
        %v2650 = vunpack.c.h.b16 %v2316
        %v2651 = vunpack.c.l.b16 %v2317
        %v2652 = vunpack.c.h.b16 %v2317
        %v2653 = vunpack.c.l.b16 %v2318
        %v2654 = vunpack.c.h.b16 %v2318
        %v2655 = vunpack.c.l.b16 %v2319
        %v2656 = vunpack.c.h.b16 %v2319
        %v2657 = vunpack.c.l.b16 %v2320
        %v2658 = vunpack.c.h.b16 %v2320
        %v2659 = vunpack.c.l.b16 %v2321
        %v2660 = vunpack.c.h.b16 %v2321
        %v2661 = vunpack.c.l.b16 %v2322
        %v2662 = vunpack.c.h.b16 %v2322
        %v2663 = vunpack.c.l.b16 %v2323
        %v2664 = vunpack.c.h.b16 %v2323
        %v2665 = vunpack.c.l.b16 %v2324
        %v2666 = vunpack.c.h.b16 %v2324
        %v2667 = vunpack.c.l.b16 %v2325
        %v2668 = vunpack.c.h.b16 %v2325
        %v2669 = vunpack.c.l.b16 %v2326
        %v2670 = vunpack.c.h.b16 %v2326
        %v2671 = vunpack.c.l.b16 %v2327
        %v2672 = vunpack.c.h.b16 %v2327
        %v2673 = vunpack.c.l.b16 %v2328
        %v2674 = vunpack.c.h.b16 %v2328
        %v2675 = vunpack.c.l.b16 %v2329
        %v2676 = vunpack.c.h.b16 %v2329
        %v2677 = vunpack.c.l.b16 %v2330
        %v2678 = vunpack.c.h.b16 %v2330
        %v2679 = vunpack.c.l.b16 %v2331
        %v2680 = vunpack.c.h.b16 %v2331
        %v2681 = vunpack.c.l.b16 %v2332
        %v2682 = vunpack.c.h.b16 %v2332
        %v2683 = vunpack.c.l.b16 %v2333
        %v2684 = vunpack.c.h.b16 %v2333
        %v2685 = vunpack.c.l.b16 %v2334
        %v2686 = vunpack.c.h.b16 %v2334
        %v2687 = vunpack.c.l.b16 %v2335
        %v2688 = vunpack.c.h.b16 %v2335
        %v2689 = vunpack.c.l.b16 %v2336
        %v2690 = vunpack.c.h.b16 %v2336
        %v2691 = vunpack.c.l.b16 %v2337
        %v2692 = vunpack.c.h.b16 %v2337
        %v2693 = vunpack.c.l.b16 %v2338
        %v2694 = vunpack.c.h.b16 %v2338
        %v2695 = vunpack.c.l.b16 %v2339
        %v2696 = vunpack.c.h.b16 %v2339
        %v2697 = vunpack.c.l.b16 %v2340
        %v2698 = vunpack.c.h.b16 %v2340
        %v2699 = vunpack.c.l.b16 %v2341
        %v2700 = vunpack.c.h.b16 %v2341
        %v2701 = vunpack.c.l.b16 %v2342
        %v2702 = vunpack.c.h.b16 %v2342
        %v2703 = vunpack.c.l.b16 %v2343
        %v2704 = vunpack.c.h.b16 %v2343
        %v2705 = vunpack.c.l.b16 %v2344
        %v2706 = vunpack.c.h.b16 %v2344
        %v2707 = vunpack.c.l.b16 %v2345
        %v2708 = vunpack.c.h.b16 %v2345
        %v2709 = vunpack.c.l.b16 %v2346
        %v2710 = vunpack.c.h.b16 %v2346
        %v2711 = vunpack.c.l.b16 %v2347
        %v2712 = vunpack.c.h.b16 %v2347
        %v2713 = vunpack.c.l.b16 %v2348
        %v2714 = vunpack.c.h.b16 %v2348
        %v2715 = vunpack.c.l.b16 %v2349
        %v2716 = vunpack.c.h.b16 %v2349
        %v2717 = vunpack.c.l.b16 %v2350
        %v2718 = vunpack.c.h.b16 %v2350
        %v2719 = vunpack.c.l.b16 %v2351
        %v2720 = vunpack.c.h.b16 %v2351
        %v2721 = vunpack.c.l.b16 %v2352
        %v2722 = vunpack.c.h.b16 %v2352
        %v2723 = vunpack.c.l.b16 %v2353
        %v2724 = vunpack.c.h.b16 %v2353
        %v2725 = vunpack.c.l.b16 %v2354
        %v2726 = vunpack.c.h.b16 %v2354
        %v2727 = vunpack.c.l.b16 %v2355
        %v2728 = vunpack.c.h.b16 %v2355
        %v2729 = vunpack.c.l.b16 %v2356
        %v2730 = vunpack.c.h.b16 %v2356
        %v2731 = vunpack.c.l.b16 %v2357
        %v2732 = vunpack.c.h.b16 %v2357
        %v2733 = vunpack.c.l.b16 %v2358
        %v2734 = vunpack.c.h.b16 %v2358
        %v2735 = vunpack.c.l.b16 %v2359
        %v2736 = vunpack.c.h.b16 %v2359
        %v2737 = vunpack.c.l.b16 %v2360
        %v2738 = vunpack.c.h.b16 %v2360
        %v2739 = vunpack.c.l.b16 %v2361
        %v2740 = vunpack.c.h.b16 %v2361
        %v2741 = vunpack.c.l.b16 %v2362
        %v2742 = vunpack.c.h.b16 %v2362
        %v2743 = vunpack.c.l.b16 %v2363
        %v2744 = vunpack.c.h.b16 %v2363
        %v2745 = vunpack.c.l.b16 %v2364
        %v2746 = vunpack.c.h.b16 %v2364
        %v2747 = vunpack.c.l.b16 %v2365
        %v2748 = vunpack.c.h.b16 %v2365
        %v2749 = vunpack.c.l.b16 %v2366
        %v2750 = vunpack.c.h.b16 %v2366
        %v2751 = vunpack.c.l.b16 %v2367
        %v2752 = vunpack.c.h.b16 %v2367
        %v2753 = vunpack.c.l.b16 %v2368
        %v2754 = vunpack.c.h.b16 %v2368
        %v2755 = vunpack.c.l.b16 %v2369
        %v2756 = vunpack.c.h.b16 %v2369
        %v2757 = vunpack.c.l.b16 %v2370
        %v2758 = vunpack.c.h.b16 %v2370
        %v2759 = vunpack.c.l.b16 %v2371
        %v2760 = vunpack.c.h.b16 %v2371
        %v2761 = vunpack.c.l.b16 %v2372
        %v2762 = vunpack.c.h.b16 %v2372
        %v2763 = vunpack.c.l.b16 %v2373
        %v2764 = vunpack.c.h.b16 %v2373
        %v2765 = vunpack.c.l.b16 %v2374
        %v2766 = vunpack.c.h.b16 %v2374
        %v2767 = vunpack.c.l.b16 %v2375
        %v2768 = vunpack.c.h.b16 %v2375
        %v2769 = vunpack.c.l.b16 %v2376
        %v2770 = vunpack.c.h.b16 %v2376
        %v2771 = vpack.c.b16 %v2519, %v2515
        %v2772 = vpack.c.b16 %v2520, %v2516
        %v2773 = vpack.c.b16 %v2521, %v2517
        %v2774 = vpack.c.b16 %v2522, %v2518
        %v2775 = vpack.c.b16 %v2527, %v2523
        %v2776 = vpack.c.b16 %v2528, %v2524
        %v2777 = vpack.c.b16 %v2529, %v2525
        %v2778 = vpack.c.b16 %v2530, %v2526
        %v2779 = vpack.c.b16 %v2535, %v2531
        %v2780 = vpack.c.b16 %v2536, %v2532
        %v2781 = vpack.c.b16 %v2537, %v2533
        %v2782 = vpack.c.b16 %v2538, %v2534
        %v2783 = vpack.c.b16 %v2543, %v2539
        %v2784 = vpack.c.b16 %v2544, %v2540
        %v2785 = vpack.c.b16 %v2545, %v2541
        %v2786 = vpack.c.b16 %v2546, %v2542
        %v2787 = vpack.c.b16 %v2551, %v2547
        %v2788 = vpack.c.b16 %v2552, %v2548
        %v2789 = vpack.c.b16 %v2553, %v2549
        %v2790 = vpack.c.b16 %v2554, %v2550
        %v2791 = vpack.c.b16 %v2559, %v2555
        %v2792 = vpack.c.b16 %v2560, %v2556
        %v2793 = vpack.c.b16 %v2561, %v2557
        %v2794 = vpack.c.b16 %v2562, %v2558
        %v2795 = vpack.c.b16 %v2567, %v2563
        %v2796 = vpack.c.b16 %v2568, %v2564
        %v2797 = vpack.c.b16 %v2569, %v2565
        %v2798 = vpack.c.b16 %v2570, %v2566
        %v2799 = vpack.c.b16 %v2575, %v2571
        %v2800 = vpack.c.b16 %v2576, %v2572
        %v2801 = vpack.c.b16 %v2577, %v2573
        %v2802 = vpack.c.b16 %v2578, %v2574
        %v2803 = vpack.c.b16 %v2583, %v2579
        %v2804 = vpack.c.b16 %v2584, %v2580
        %v2805 = vpack.c.b16 %v2585, %v2581
        %v2806 = vpack.c.b16 %v2586, %v2582
        %v2807 = vpack.c.b16 %v2591, %v2587
        %v2808 = vpack.c.b16 %v2592, %v2588
        %v2809 = vpack.c.b16 %v2593, %v2589
        %v2810 = vpack.c.b16 %v2594, %v2590
        %v2811 = vpack.c.b16 %v2599, %v2595
        %v2812 = vpack.c.b16 %v2600, %v2596
        %v2813 = vpack.c.b16 %v2601, %v2597
        %v2814 = vpack.c.b16 %v2602, %v2598
        %v2815 = vpack.c.b16 %v2607, %v2603
        %v2816 = vpack.c.b16 %v2608, %v2604
        %v2817 = vpack.c.b16 %v2609, %v2605
        %v2818 = vpack.c.b16 %v2610, %v2606
        %v2819 = vpack.c.b16 %v2615, %v2611
        %v2820 = vpack.c.b16 %v2616, %v2612
        %v2821 = vpack.c.b16 %v2617, %v2613
        %v2822 = vpack.c.b16 %v2618, %v2614
        %v2823 = vpack.c.b16 %v2623, %v2619
        %v2824 = vpack.c.b16 %v2624, %v2620
        %v2825 = vpack.c.b16 %v2625, %v2621
        %v2826 = vpack.c.b16 %v2626, %v2622
        %v2827 = vpack.c.b16 %v2631, %v2627
        %v2828 = vpack.c.b16 %v2632, %v2628
        %v2829 = vpack.c.b16 %v2633, %v2629
        %v2830 = vpack.c.b16 %v2634, %v2630
        %v2831 = vpack.c.b16 %v2639, %v2635
        %v2832 = vpack.c.b16 %v2640, %v2636
        %v2833 = vpack.c.b16 %v2641, %v2637
        %v2834 = vpack.c.b16 %v2642, %v2638
        %v2835 = vpack.c.b16 %v2647, %v2643
        %v2836 = vpack.c.b16 %v2648, %v2644
        %v2837 = vpack.c.b16 %v2649, %v2645
        %v2838 = vpack.c.b16 %v2650, %v2646
        %v2839 = vpack.c.b16 %v2655, %v2651
        %v2840 = vpack.c.b16 %v2656, %v2652
        %v2841 = vpack.c.b16 %v2657, %v2653
        %v2842 = vpack.c.b16 %v2658, %v2654
        %v2843 = vpack.c.b16 %v2663, %v2659
        %v2844 = vpack.c.b16 %v2664, %v2660
        %v2845 = vpack.c.b16 %v2665, %v2661
        %v2846 = vpack.c.b16 %v2666, %v2662
        %v2847 = vpack.c.b16 %v2671, %v2667
        %v2848 = vpack.c.b16 %v2672, %v2668
        %v2849 = vpack.c.b16 %v2673, %v2669
        %v2850 = vpack.c.b16 %v2674, %v2670
        %v2851 = vpack.c.b16 %v2679, %v2675
        %v2852 = vpack.c.b16 %v2680, %v2676
        %v2853 = vpack.c.b16 %v2681, %v2677
        %v2854 = vpack.c.b16 %v2682, %v2678
        %v2855 = vpack.c.b16 %v2687, %v2683
        %v2856 = vpack.c.b16 %v2688, %v2684
        %v2857 = vpack.c.b16 %v2689, %v2685
        %v2858 = vpack.c.b16 %v2690, %v2686
        %v2859 = vpack.c.b16 %v2695, %v2691
        %v2860 = vpack.c.b16 %v2696, %v2692
        %v2861 = vpack.c.b16 %v2697, %v2693
        %v2862 = vpack.c.b16 %v2698, %v2694
        %v2863 = vpack.c.b16 %v2703, %v2699
        %v2864 = vpack.c.b16 %v2704, %v2700
        %v2865 = vpack.c.b16 %v2705, %v2701
        %v2866 = vpack.c.b16 %v2706, %v2702
        %v2867 = vpack.c.b16 %v2711, %v2707
        %v2868 = vpack.c.b16 %v2712, %v2708
        %v2869 = vpack.c.b16 %v2713, %v2709
        %v2870 = vpack.c.b16 %v2714, %v2710
        %v2871 = vpack.c.b16 %v2719, %v2715
        %v2872 = vpack.c.b16 %v2720, %v2716
        %v2873 = vpack.c.b16 %v2721, %v2717
        %v2874 = vpack.c.b16 %v2722, %v2718
        %v2875 = vpack.c.b16 %v2727, %v2723
        %v2876 = vpack.c.b16 %v2728, %v2724
        %v2877 = vpack.c.b16 %v2729, %v2725
        %v2878 = vpack.c.b16 %v2730, %v2726
        %v2879 = vpack.c.b16 %v2735, %v2731
        %v2880 = vpack.c.b16 %v2736, %v2732
        %v2881 = vpack.c.b16 %v2737, %v2733
        %v2882 = vpack.c.b16 %v2738, %v2734
        %v2883 = vpack.c.b16 %v2743, %v2739
        %v2884 = vpack.c.b16 %v2744, %v2740
        %v2885 = vpack.c.b16 %v2745, %v2741
        %v2886 = vpack.c.b16 %v2746, %v2742
        %v2887 = vpack.c.b16 %v2751, %v2747
        %v2888 = vpack.c.b16 %v2752, %v2748
        %v2889 = vpack.c.b16 %v2753, %v2749
        %v2890 = vpack.c.b16 %v2754, %v2750
        %v2891 = vpack.c.b16 %v2759, %v2755
        %v2892 = vpack.c.b16 %v2760, %v2756
        %v2893 = vpack.c.b16 %v2761, %v2757
        %v2894 = vpack.c.b16 %v2762, %v2758
        %v2895 = vpack.c.b16 %v2767, %v2763
        %v2896 = vpack.c.b16 %v2768, %v2764
        %v2897 = vpack.c.b16 %v2769, %v2765
        %v2898 = vpack.c.b16 %v2770, %v2766
        %3027 = vmatpush.bf16.msra.mxu0 %v2799
        %3028 = vmatpush.bf16.msra.mxu0 %v2795
        %3029 = vmatpush.bf16.msra.mxu0 %v2791
        %3030 = vmatpush.bf16.msra.mxu0 %v2787
        %3031 = vmatpush.bf16.msra.mxu0 %v2783
        %3032 = vmatpush.bf16.msra.mxu0 %v2779
        %3033 = vmatpush.bf16.msra.mxu0 %v2775
        %3034 = vmatpush.bf16.msra.mxu0 %v2771
        %3035 = vmatmul.bf16.gmra.mxu0 %v2241
        %v3036 = vpop.f32.mrf.mxu0
        %v3037 = vadd.f32 %v2379, %v3036
        %v3038 = vpop.f32.mrf.mxu0
        %v3039 = vadd.f32 %v2379, %v3038
        %3040 = vmatmul.bf16.gmra.mxu0 %v2245
        %v3041 = vpop.f32.mrf.mxu0
        %v3042 = vadd.f32 %v2379, %v3041
        %v3043 = vpop.f32.mrf.mxu0
        %v3044 = vadd.f32 %v2379, %v3043
        %3045 = vdwg.mxu0
        %3046 = vmatpush.bf16.msra.mxu0 %v2831
        %3047 = vmatpush.bf16.msra.mxu0 %v2827
        %3048 = vmatpush.bf16.msra.mxu0 %v2823
        %3049 = vmatpush.bf16.msra.mxu0 %v2819
        %3050 = vmatpush.bf16.msra.mxu0 %v2815
        %3051 = vmatpush.bf16.msra.mxu0 %v2811
        %3052 = vmatpush.bf16.msra.mxu0 %v2807
        %3053 = vmatpush.bf16.msra.mxu0 %v2803
        %3054 = vmatmul.bf16.gmra.mxu0 %v2242
        %v3055 = vpop.f32.mrf.mxu0
        %v3056 = vadd.f32 %v3037, %v3055
        %v3057 = vpop.f32.mrf.mxu0
        %v3058 = vadd.f32 %v3039, %v3057
        %3059 = vmatmul.bf16.gmra.mxu0 %v2246
        %v3060 = vpop.f32.mrf.mxu0
        %v3061 = vadd.f32 %v3042, %v3060
        %v3062 = vpop.f32.mrf.mxu0
        %v3063 = vadd.f32 %v3044, %v3062
        %3064 = vdwg.mxu0
        %3065 = vmatpush.bf16.msra.mxu0 %v2863
        %3066 = vmatpush.bf16.msra.mxu0 %v2859
        %3067 = vmatpush.bf16.msra.mxu0 %v2855
        %3068 = vmatpush.bf16.msra.mxu0 %v2851
        %3069 = vmatpush.bf16.msra.mxu0 %v2847
        %3070 = vmatpush.bf16.msra.mxu0 %v2843
        %3071 = vmatpush.bf16.msra.mxu0 %v2839
        %3072 = vmatpush.bf16.msra.mxu0 %v2835
        %3073 = vmatmul.bf16.gmra.mxu0 %v2243
        %v3074 = vpop.f32.mrf.mxu0
        %v3075 = vadd.f32 %v3056, %v3074
        %v3076 = vpop.f32.mrf.mxu0
        %v3077 = vadd.f32 %v3058, %v3076
        %3078 = vmatmul.bf16.gmra.mxu0 %v2247
        %v3079 = vpop.f32.mrf.mxu0
        %v3080 = vadd.f32 %v3061, %v3079
        %v3081 = vpop.f32.mrf.mxu0
        %v3082 = vadd.f32 %v3063, %v3081
        %3083 = vdwg.mxu0
        %3084 = vmatpush.bf16.msra.mxu0 %v2895
        %3085 = vmatpush.bf16.msra.mxu0 %v2891
        %3086 = vmatpush.bf16.msra.mxu0 %v2887
        %3087 = vmatpush.bf16.msra.mxu0 %v2883
        %3088 = vmatpush.bf16.msra.mxu0 %v2879
        %3089 = vmatpush.bf16.msra.mxu0 %v2875
        %3090 = vmatpush.bf16.msra.mxu0 %v2871
        %3091 = vmatpush.bf16.msra.mxu0 %v2867
        %3092 = vmatmul.bf16.gmra.mxu0 %v2244
        %v3093 = vpop.f32.mrf.mxu0
        %v3094 = vadd.f32 %v3075, %v3093
        %v3095 = vpop.f32.mrf.mxu0
        %v3096 = vadd.f32 %v3077, %v3095
        %3097 = vmatmul.bf16.gmra.mxu0 %v2248
        %v3098 = vpop.f32.mrf.mxu0
        %v3099 = vadd.f32 %v3080, %v3098
        %v3100 = vpop.f32.mrf.mxu0
        %v3101 = vadd.f32 %v3082, %v3100
        %3102 = vdwg.mxu0
        %3103 = vmatpush.bf16.msra.mxu0 %v2800
        %3104 = vmatpush.bf16.msra.mxu0 %v2796
        %3105 = vmatpush.bf16.msra.mxu0 %v2792
        %3106 = vmatpush.bf16.msra.mxu0 %v2788
        %3107 = vmatpush.bf16.msra.mxu0 %v2784
        %3108 = vmatpush.bf16.msra.mxu0 %v2780
        %3109 = vmatpush.bf16.msra.mxu0 %v2776
        %3110 = vmatpush.bf16.msra.mxu0 %v2772
        %3111 = vmatmul.bf16.gmra.mxu0 %v2241
        %v3112 = vpop.f32.mrf.mxu0
        %v3113 = vadd.f32 %v2380, %v3112
        %v3114 = vpop.f32.mrf.mxu0
        %v3115 = vadd.f32 %v2380, %v3114
        %3116 = vmatmul.bf16.gmra.mxu0 %v2245
        %v3117 = vpop.f32.mrf.mxu0
        %v3118 = vadd.f32 %v2380, %v3117
        %v3119 = vpop.f32.mrf.mxu0
        %v3120 = vadd.f32 %v2380, %v3119
        %3121 = vdwg.mxu0
        %3122 = vmatpush.bf16.msra.mxu0 %v2832
        %3123 = vmatpush.bf16.msra.mxu0 %v2828
        %3124 = vmatpush.bf16.msra.mxu0 %v2824
        %3125 = vmatpush.bf16.msra.mxu0 %v2820
        %3126 = vmatpush.bf16.msra.mxu0 %v2816
        %3127 = vmatpush.bf16.msra.mxu0 %v2812
        %3128 = vmatpush.bf16.msra.mxu0 %v2808
        %3129 = vmatpush.bf16.msra.mxu0 %v2804
        %3130 = vmatmul.bf16.gmra.mxu0 %v2242
        %v3131 = vpop.f32.mrf.mxu0
        %v3132 = vadd.f32 %v3113, %v3131
        %v3133 = vpop.f32.mrf.mxu0
        %v3134 = vadd.f32 %v3115, %v3133
        %3135 = vmatmul.bf16.gmra.mxu0 %v2246
        %v3136 = vpop.f32.mrf.mxu0
        %v3137 = vadd.f32 %v3118, %v3136
        %v3138 = vpop.f32.mrf.mxu0
        %v3139 = vadd.f32 %v3120, %v3138
        %3140 = vdwg.mxu0
        %3141 = vmatpush.bf16.msra.mxu0 %v2864
        %3142 = vmatpush.bf16.msra.mxu0 %v2860
        %3143 = vmatpush.bf16.msra.mxu0 %v2856
        %3144 = vmatpush.bf16.msra.mxu0 %v2852
        %3145 = vmatpush.bf16.msra.mxu0 %v2848
        %3146 = vmatpush.bf16.msra.mxu0 %v2844
        %3147 = vmatpush.bf16.msra.mxu0 %v2840
        %3148 = vmatpush.bf16.msra.mxu0 %v2836
        %3149 = vmatmul.bf16.gmra.mxu0 %v2243
        %v3150 = vpop.f32.mrf.mxu0
        %v3151 = vadd.f32 %v3132, %v3150
        %v3152 = vpop.f32.mrf.mxu0
        %v3153 = vadd.f32 %v3134, %v3152
        %3154 = vmatmul.bf16.gmra.mxu0 %v2247
        %v3155 = vpop.f32.mrf.mxu0
        %v3156 = vadd.f32 %v3137, %v3155
        %v3157 = vpop.f32.mrf.mxu0
        %v3158 = vadd.f32 %v3139, %v3157
        %3159 = vdwg.mxu0
        %3160 = vmatpush.bf16.msra.mxu0 %v2896
        %3161 = vmatpush.bf16.msra.mxu0 %v2892
        %3162 = vmatpush.bf16.msra.mxu0 %v2888
        %3163 = vmatpush.bf16.msra.mxu0 %v2884
        %3164 = vmatpush.bf16.msra.mxu0 %v2880
        %3165 = vmatpush.bf16.msra.mxu0 %v2876
        %3166 = vmatpush.bf16.msra.mxu0 %v2872
        %3167 = vmatpush.bf16.msra.mxu0 %v2868
        %3168 = vmatmul.bf16.gmra.mxu0 %v2244
        %v3169 = vpop.f32.mrf.mxu0
        %v3170 = vadd.f32 %v3151, %v3169
        %v3171 = vpop.f32.mrf.mxu0
        %v3172 = vadd.f32 %v3153, %v3171
        %3173 = vmatmul.bf16.gmra.mxu0 %v2248
        %v3174 = vpop.f32.mrf.mxu0
        %v3175 = vadd.f32 %v3156, %v3174
        %v3176 = vpop.f32.mrf.mxu0
        %v3177 = vadd.f32 %v3158, %v3176
        %3178 = vdwg.mxu0
        %3179 = vmatpush.bf16.msra.mxu0 %v2801
        %3180 = vmatpush.bf16.msra.mxu0 %v2797
        %3181 = vmatpush.bf16.msra.mxu0 %v2793
        %3182 = vmatpush.bf16.msra.mxu0 %v2789
        %3183 = vmatpush.bf16.msra.mxu0 %v2785
        %3184 = vmatpush.bf16.msra.mxu0 %v2781
        %3185 = vmatpush.bf16.msra.mxu0 %v2777
        %3186 = vmatpush.bf16.msra.mxu0 %v2773
        %3187 = vmatmul.bf16.gmra.mxu0 %v2241
        %v3188 = vpop.f32.mrf.mxu0
        %v3189 = vadd.f32 %v2381, %v3188
        %v3190 = vpop.f32.mrf.mxu0
        %v3191 = vadd.f32 %v2381, %v3190
        %3192 = vmatmul.bf16.gmra.mxu0 %v2245
        %v3193 = vpop.f32.mrf.mxu0
        %v3194 = vadd.f32 %v2381, %v3193
        %v3195 = vpop.f32.mrf.mxu0
        %v3196 = vadd.f32 %v2381, %v3195
        %3197 = vdwg.mxu0
        %3198 = vmatpush.bf16.msra.mxu0 %v2833
        %3199 = vmatpush.bf16.msra.mxu0 %v2829
        %3200 = vmatpush.bf16.msra.mxu0 %v2825
        %3201 = vmatpush.bf16.msra.mxu0 %v2821
        %3202 = vmatpush.bf16.msra.mxu0 %v2817
        %3203 = vmatpush.bf16.msra.mxu0 %v2813
        %3204 = vmatpush.bf16.msra.mxu0 %v2809
        %3205 = vmatpush.bf16.msra.mxu0 %v2805
        %3206 = vmatmul.bf16.gmra.mxu0 %v2242
        %v3207 = vpop.f32.mrf.mxu0
        %v3208 = vadd.f32 %v3189, %v3207
        %v3209 = vpop.f32.mrf.mxu0
        %v3210 = vadd.f32 %v3191, %v3209
        %3211 = vmatmul.bf16.gmra.mxu0 %v2246
        %v3212 = vpop.f32.mrf.mxu0
        %v3213 = vadd.f32 %v3194, %v3212
        %v3214 = vpop.f32.mrf.mxu0
        %v3215 = vadd.f32 %v3196, %v3214
        %3216 = vdwg.mxu0
        %3217 = vmatpush.bf16.msra.mxu0 %v2865
        %3218 = vmatpush.bf16.msra.mxu0 %v2861
        %3219 = vmatpush.bf16.msra.mxu0 %v2857
        %3220 = vmatpush.bf16.msra.mxu0 %v2853
        %3221 = vmatpush.bf16.msra.mxu0 %v2849
        %3222 = vmatpush.bf16.msra.mxu0 %v2845
        %3223 = vmatpush.bf16.msra.mxu0 %v2841
        %3224 = vmatpush.bf16.msra.mxu0 %v2837
        %3225 = vmatmul.bf16.gmra.mxu0 %v2243
        %v3226 = vpop.f32.mrf.mxu0
        %v3227 = vadd.f32 %v3208, %v3226
        %v3228 = vpop.f32.mrf.mxu0
        %v3229 = vadd.f32 %v3210, %v3228
        %3230 = vmatmul.bf16.gmra.mxu0 %v2247
        %v3231 = vpop.f32.mrf.mxu0
        %v3232 = vadd.f32 %v3213, %v3231
        %v3233 = vpop.f32.mrf.mxu0
        %v3234 = vadd.f32 %v3215, %v3233
        %3235 = vdwg.mxu0
        %3236 = vmatpush.bf16.msra.mxu0 %v2897
        %3237 = vmatpush.bf16.msra.mxu0 %v2893
        %3238 = vmatpush.bf16.msra.mxu0 %v2889
        %3239 = vmatpush.bf16.msra.mxu0 %v2885
        %3240 = vmatpush.bf16.msra.mxu0 %v2881
        %3241 = vmatpush.bf16.msra.mxu0 %v2877
        %3242 = vmatpush.bf16.msra.mxu0 %v2873
        %3243 = vmatpush.bf16.msra.mxu0 %v2869
        %3244 = vmatmul.bf16.gmra.mxu0 %v2244
        %v3245 = vpop.f32.mrf.mxu0
        %v3246 = vadd.f32 %v3227, %v3245
        %v3247 = vpop.f32.mrf.mxu0
        %v3248 = vadd.f32 %v3229, %v3247
        %3249 = vmatmul.bf16.gmra.mxu0 %v2248
        %v3250 = vpop.f32.mrf.mxu0
        %v3251 = vadd.f32 %v3232, %v3250
        %v3252 = vpop.f32.mrf.mxu0
        %v3253 = vadd.f32 %v3234, %v3252
        %3254 = vdwg.mxu0
        %3255 = vmatpush.bf16.msra.mxu0 %v2802
        %3256 = vmatpush.bf16.msra.mxu0 %v2798
        %3257 = vmatpush.bf16.msra.mxu0 %v2794
        %3258 = vmatpush.bf16.msra.mxu0 %v2790
        %3259 = vmatpush.bf16.msra.mxu0 %v2786
        %3260 = vmatpush.bf16.msra.mxu0 %v2782
        %3261 = vmatpush.bf16.msra.mxu0 %v2778
        %3262 = vmatpush.bf16.msra.mxu0 %v2774
        %3263 = vmatmul.bf16.gmra.mxu0 %v2241
        %v3264 = vpop.f32.mrf.mxu0
        %v3265 = vadd.f32 %v2382, %v3264
        %v3266 = vpop.f32.mrf.mxu0
        %v3267 = vadd.f32 %v2382, %v3266
        %3268 = vmatmul.bf16.gmra.mxu0 %v2245
        %v3269 = vpop.f32.mrf.mxu0
        %v3270 = vadd.f32 %v2382, %v3269
        %v3271 = vpop.f32.mrf.mxu0
        %v3272 = vadd.f32 %v2382, %v3271
        %3273 = vdwg.mxu0
        %3274 = vmatpush.bf16.msra.mxu0 %v2834
        %3275 = vmatpush.bf16.msra.mxu0 %v2830
        %3276 = vmatpush.bf16.msra.mxu0 %v2826
        %3277 = vmatpush.bf16.msra.mxu0 %v2822
        %3278 = vmatpush.bf16.msra.mxu0 %v2818
        %3279 = vmatpush.bf16.msra.mxu0 %v2814
        %3280 = vmatpush.bf16.msra.mxu0 %v2810
        %3281 = vmatpush.bf16.msra.mxu0 %v2806
        %3282 = vmatmul.bf16.gmra.mxu0 %v2242
        %v3283 = vpop.f32.mrf.mxu0
        %v3284 = vadd.f32 %v3265, %v3283
        %v3285 = vpop.f32.mrf.mxu0
        %v3286 = vadd.f32 %v3267, %v3285
        %3287 = vmatmul.bf16.gmra.mxu0 %v2246
        %v3288 = vpop.f32.mrf.mxu0
        %v3289 = vadd.f32 %v3270, %v3288
        %v3290 = vpop.f32.mrf.mxu0
        %v3291 = vadd.f32 %v3272, %v3290
        %3292 = vdwg.mxu0
        %3293 = vmatpush.bf16.msra.mxu0 %v2866
        %3294 = vmatpush.bf16.msra.mxu0 %v2862
        %3295 = vmatpush.bf16.msra.mxu0 %v2858
        %3296 = vmatpush.bf16.msra.mxu0 %v2854
        %3297 = vmatpush.bf16.msra.mxu0 %v2850
        %3298 = vmatpush.bf16.msra.mxu0 %v2846
        %3299 = vmatpush.bf16.msra.mxu0 %v2842
        %3300 = vmatpush.bf16.msra.mxu0 %v2838
        %3301 = vmatmul.bf16.gmra.mxu0 %v2243
        %v3302 = vpop.f32.mrf.mxu0
        %v3303 = vadd.f32 %v3284, %v3302
        %v3304 = vpop.f32.mrf.mxu0
        %v3305 = vadd.f32 %v3286, %v3304
        %3306 = vmatmul.bf16.gmra.mxu0 %v2247
        %v3307 = vpop.f32.mrf.mxu0
        %v3308 = vadd.f32 %v3289, %v3307
        %v3309 = vpop.f32.mrf.mxu0
        %v3310 = vadd.f32 %v3291, %v3309
        %3311 = vdwg.mxu0
        %3312 = vmatpush.bf16.msra.mxu0 %v2898
        %3313 = vmatpush.bf16.msra.mxu0 %v2894
        %3314 = vmatpush.bf16.msra.mxu0 %v2890
        %3315 = vmatpush.bf16.msra.mxu0 %v2886
        %3316 = vmatpush.bf16.msra.mxu0 %v2882
        %3317 = vmatpush.bf16.msra.mxu0 %v2878
        %3318 = vmatpush.bf16.msra.mxu0 %v2874
        %3319 = vmatpush.bf16.msra.mxu0 %v2870
        %3320 = vmatmul.bf16.gmra.mxu0 %v2244
        %v3321 = vpop.f32.mrf.mxu0
        %v3322 = vadd.f32 %v3303, %v3321
        %v3323 = vpop.f32.mrf.mxu0
        %v3324 = vadd.f32 %v3305, %v3323
        %3325 = vmatmul.bf16.gmra.mxu0 %v2248
        %v3326 = vpop.f32.mrf.mxu0
        %v3327 = vadd.f32 %v3308, %v3326
        %v3328 = vpop.f32.mrf.mxu0
        %v3329 = vadd.f32 %v3310, %v3328
        %3330 = vdwg.mxu0
        %vm3331 = vcmp.gt.f32.partialorder %v3094, 0.0
        %vm3332 = vcmp.gt.f32.partialorder %v3170, 0.0
        %vm3333 = vcmp.gt.f32.partialorder %v3246, 0.0
        %vm3334 = vcmp.gt.f32.partialorder %v3322, 0.0
        %vm3335 = vcmp.gt.f32.partialorder %v3096, 0.0
        %vm3336 = vcmp.gt.f32.partialorder %v3172, 0.0
        %vm3337 = vcmp.gt.f32.partialorder %v3248, 0.0
        %vm3338 = vcmp.gt.f32.partialorder %v3324, 0.0
        %vm3339 = vcmp.gt.f32.partialorder %v3099, 0.0
        %vm3340 = vcmp.gt.f32.partialorder %v3175, 0.0
        %vm3341 = vcmp.gt.f32.partialorder %v3251, 0.0
        %vm3342 = vcmp.gt.f32.partialorder %v3327, 0.0
        %vm3343 = vcmp.gt.f32.partialorder %v3101, 0.0
        %vm3344 = vcmp.gt.f32.partialorder %v3177, 0.0
        %vm3345 = vcmp.gt.f32.partialorder %v3253, 0.0
        %vm3346 = vcmp.gt.f32.partialorder %v3329, 0.0
        %v3347 = vmin.f32 %v3094, 0.0
        %v3348 = vmin.f32 %v3170, 0.0
        %v3349 = vmin.f32 %v3246, 0.0
        %v3350 = vmin.f32 %v3322, 0.0
        %v3351 = vmin.f32 %v3096, 0.0
        %v3352 = vmin.f32 %v3172, 0.0
        %v3353 = vmin.f32 %v3248, 0.0
        %v3354 = vmin.f32 %v3324, 0.0
        %v3355 = vmin.f32 %v3099, 0.0
        %v3356 = vmin.f32 %v3175, 0.0
        %v3357 = vmin.f32 %v3251, 0.0
        %v3358 = vmin.f32 %v3327, 0.0
        %v3359 = vmin.f32 %v3101, 0.0
        %v3360 = vmin.f32 %v3177, 0.0
        %v3361 = vmin.f32 %v3253, 0.0
        %v3362 = vmin.f32 %v3329, 0.0
        %v3363 = vmul.f32 %v3347, 1.442695
        %v3364 = vpow.pop %v3363
        %v3365 = vmul.f32 %v3348, 1.442695
        %v3366 = vpow.pop %v3365
        %v3367 = vmul.f32 %v3349, 1.442695
        %v3368 = vpow.pop %v3367
        %v3369 = vmul.f32 %v3350, 1.442695
        %v3370 = vpow.pop %v3369
        %v3371 = vmul.f32 %v3351, 1.442695
        %v3372 = vpow.pop %v3371
        %v3373 = vmul.f32 %v3352, 1.442695
        %v3374 = vpow.pop %v3373
        %v3375 = vmul.f32 %v3353, 1.442695
        %v3376 = vpow.pop %v3375
        %v3377 = vmul.f32 %v3354, 1.442695
        %v3378 = vpow.pop %v3377
        %v3379 = vmul.f32 %v3355, 1.442695
        %v3380 = vpow.pop %v3379
        %v3381 = vmul.f32 %v3356, 1.442695
        %v3382 = vpow.pop %v3381
        %v3383 = vmul.f32 %v3357, 1.442695
        %v3384 = vpow.pop %v3383
        %v3385 = vmul.f32 %v3358, 1.442695
        %v3386 = vpow.pop %v3385
        %v3387 = vmul.f32 %v3359, 1.442695
        %v3388 = vpow.pop %v3387
        %v3389 = vmul.f32 %v3360, 1.442695
        %v3390 = vpow.pop %v3389
        %v3391 = vmul.f32 %v3361, 1.442695
        %v3392 = vpow.pop %v3391
        %v3393 = vmul.f32 %v3362, 1.442695
        %v3394 = vpow.pop %v3393
        %v3395 = vsub.f32 %v3364, 1.0
        %v3396 = vsub.f32 %v3366, 1.0
        %v3397 = vsub.f32 %v3368, 1.0
        %v3398 = vsub.f32 %v3370, 1.0
        %v3399 = vsub.f32 %v3372, 1.0
        %v3400 = vsub.f32 %v3374, 1.0
        %v3401 = vsub.f32 %v3376, 1.0
        %v3402 = vsub.f32 %v3378, 1.0
        %v3403 = vsub.f32 %v3380, 1.0
        %v3404 = vsub.f32 %v3382, 1.0
        %v3405 = vsub.f32 %v3384, 1.0
        %v3406 = vsub.f32 %v3386, 1.0
        %v3407 = vsub.f32 %v3388, 1.0
        %v3408 = vsub.f32 %v3390, 1.0
        %v3409 = vsub.f32 %v3392, 1.0
        %v3410 = vsub.f32 %v3394, 1.0
        %v3411 = vsel %vm3331, %v3094, %v3395
        %v3412 = vsel %vm3332, %v3170, %v3396
        %v3413 = vsel %vm3333, %v3246, %v3397
        %v3414 = vsel %vm3334, %v3322, %v3398
        %v3415 = vsel %vm3335, %v3096, %v3399
        %v3416 = vsel %vm3336, %v3172, %v3400
        %v3417 = vsel %vm3337, %v3248, %v3401
        %v3418 = vsel %vm3338, %v3324, %v3402
        %v3419 = vsel %vm3339, %v3099, %v3403
        %v3420 = vsel %vm3340, %v3175, %v3404
        %v3421 = vsel %vm3341, %v3251, %v3405
        %v3422 = vsel %vm3342, %v3327, %v3406
        %v3423 = vsel %vm3343, %v3101, %v3407
        %v3424 = vsel %vm3344, %v3177, %v3408
        %v3425 = vsel %vm3345, %v3253, %v3409
        %v3426 = vsel %vm3346, %v3329, %v3410
        %v3427 = vpack.c.bf16 %v3415, %v3411
        %v3428 = vpack.c.bf16 %v3416, %v3412
        %v3429 = vpack.c.bf16 %v3417, %v3413
        %v3430 = vpack.c.bf16 %v3418, %v3414
        %v3431 = vpack.c.bf16 %v3423, %v3419
        %v3432 = vpack.c.bf16 %v3424, %v3420
        %v3433 = vpack.c.bf16 %v3425, %v3421
        %v3434 = vpack.c.bf16 %v3426, %v3422
        %v3435 = vld [vmem:[%s7] sm:$0xf]
        %v3436 = vld [vmem:[%s7 + $0x4] sm:$0xf]
        %v3437 = vld [vmem:[%s7 + $0x8] sm:$0xf]
        %v3438 = vld [vmem:[%s7 + $0xc] sm:$0xf]
        %v3439 = vld [vmem:[%s7 + $0x10] sm:$0xf]
        %v3440 = vld [vmem:[%s7 + $0x14] sm:$0xf]
        %v3441 = vld [vmem:[%s7 + $0x18] sm:$0xf]
        %v3442 = vld [vmem:[%s7 + $0x1c] sm:$0xf]
        %v3443 = vld [vmem:[%s7 + $0x20] sm:$0xf]
        %v3444 = vld [vmem:[%s7 + $0x24] sm:$0xf]
        %v3445 = vld [vmem:[%s7 + $0x28] sm:$0xf]
        %v3446 = vld [vmem:[%s7 + $0x2c] sm:$0xf]
        %v3447 = vld [vmem:[%s7 + $0x30] sm:$0xf]
        %v3448 = vld [vmem:[%s7 + $0x34] sm:$0xf]
        %v3449 = vld [vmem:[%s7 + $0x38] sm:$0xf]
        %v3450 = vld [vmem:[%s7 + $0x3c] sm:$0xf]
        %v3451 = vld [vmem:[%s7 + $0x40] sm:$0xf]
        %v3452 = vld [vmem:[%s7 + $0x44] sm:$0xf]
        %v3453 = vld [vmem:[%s7 + $0x48] sm:$0xf]
        %v3454 = vld [vmem:[%s7 + $0x4c] sm:$0xf]
        %v3455 = vld [vmem:[%s7 + $0x50] sm:$0xf]
        %v3456 = vld [vmem:[%s7 + $0x54] sm:$0xf]
        %v3457 = vld [vmem:[%s7 + $0x58] sm:$0xf]
        %v3458 = vld [vmem:[%s7 + $0x5c] sm:$0xf]
        %v3459 = vld [vmem:[%s7 + $0x60] sm:$0xf]
        %v3460 = vld [vmem:[%s7 + $0x64] sm:$0xf]
        %v3461 = vld [vmem:[%s7 + $0x68] sm:$0xf]
        %v3462 = vld [vmem:[%s7 + $0x6c] sm:$0xf]
        %v3463 = vld [vmem:[%s7 + $0x70] sm:$0xf]
        %v3464 = vld [vmem:[%s7 + $0x74] sm:$0xf]
        %v3465 = vld [vmem:[%s7 + $0x78] sm:$0xf]
        %v3466 = vld [vmem:[%s7 + $0x7c] sm:$0xf]
        %v3467 = vld [vmem:[%s7 + $0x80] sm:$0xf]
        %v3468 = vld [vmem:[%s7 + $0x84] sm:$0xf]
        %v3469 = vld [vmem:[%s7 + $0x88] sm:$0xf]
        %v3470 = vld [vmem:[%s7 + $0x8c] sm:$0xf]
        %v3471 = vld [vmem:[%s7 + $0x90] sm:$0xf]
        %v3472 = vld [vmem:[%s7 + $0x94] sm:$0xf]
        %v3473 = vld [vmem:[%s7 + $0x98] sm:$0xf]
        %v3474 = vld [vmem:[%s7 + $0x9c] sm:$0xf]
        %v3475 = vld [vmem:[%s7 + $0xa0] sm:$0xf]
        %v3476 = vld [vmem:[%s7 + $0xa4] sm:$0xf]
        %v3477 = vld [vmem:[%s7 + $0xa8] sm:$0xf]
        %v3478 = vld [vmem:[%s7 + $0xac] sm:$0xf]
        %v3479 = vld [vmem:[%s7 + $0xb0] sm:$0xf]
        %v3480 = vld [vmem:[%s7 + $0xb4] sm:$0xf]
        %v3481 = vld [vmem:[%s7 + $0xb8] sm:$0xf]
        %v3482 = vld [vmem:[%s7 + $0xbc] sm:$0xf]
        %v3483 = vld [vmem:[%s7 + $0xc0] sm:$0xf]
        %v3484 = vld [vmem:[%s7 + $0xc4] sm:$0xf]
        %v3485 = vld [vmem:[%s7 + $0xc8] sm:$0xf]
        %v3486 = vld [vmem:[%s7 + $0xcc] sm:$0xf]
        %v3487 = vld [vmem:[%s7 + $0xd0] sm:$0xf]
        %v3488 = vld [vmem:[%s7 + $0xd4] sm:$0xf]
        %v3489 = vld [vmem:[%s7 + $0xd8] sm:$0xf]
        %v3490 = vld [vmem:[%s7 + $0xdc] sm:$0xf]
        %v3491 = vld [vmem:[%s7 + $0xe0] sm:$0xf]
        %v3492 = vld [vmem:[%s7 + $0xe4] sm:$0xf]
        %v3493 = vld [vmem:[%s7 + $0xe8] sm:$0xf]
        %v3494 = vld [vmem:[%s7 + $0xec] sm:$0xf]
        %v3495 = vld [vmem:[%s7 + $0xf0] sm:$0xf]
        %v3496 = vld [vmem:[%s7 + $0xf4] sm:$0xf]
        %v3497 = vld [vmem:[%s7 + $0xf8] sm:$0xf]
        %v3498 = vld [vmem:[%s7 + $0xfc] sm:$0xf]
        %v3499 = vld [vmem:[%s8] sm:$0x1]
        %v3501 = vperm.slane %v3499, 0
        %v3567 = vunpack.c.l.b16 %v3435
        %v3568 = vunpack.c.l.b16 %v3436
        %v3569 = vunpack.c.l.b16 %v3437
        %v3570 = vunpack.c.l.b16 %v3438
        %v3571 = vunpack.c.l.b16 %v3439
        %v3572 = vunpack.c.l.b16 %v3440
        %v3573 = vunpack.c.l.b16 %v3441
        %v3574 = vunpack.c.l.b16 %v3442
        %v3575 = vunpack.c.l.b16 %v3443
        %v3576 = vunpack.c.l.b16 %v3444
        %v3577 = vunpack.c.l.b16 %v3445
        %v3578 = vunpack.c.l.b16 %v3446
        %v3579 = vunpack.c.l.b16 %v3447
        %v3580 = vunpack.c.l.b16 %v3448
        %v3581 = vunpack.c.l.b16 %v3449
        %v3582 = vunpack.c.l.b16 %v3450
        %v3583 = vunpack.c.l.b16 %v3451
        %v3584 = vunpack.c.l.b16 %v3452
        %v3585 = vunpack.c.l.b16 %v3453
        %v3586 = vunpack.c.l.b16 %v3454
        %v3587 = vunpack.c.l.b16 %v3455
        %v3588 = vunpack.c.l.b16 %v3456
        %v3589 = vunpack.c.l.b16 %v3457
        %v3590 = vunpack.c.l.b16 %v3458
        %v3591 = vunpack.c.l.b16 %v3459
        %v3592 = vunpack.c.l.b16 %v3460
        %v3593 = vunpack.c.l.b16 %v3461
        %v3594 = vunpack.c.l.b16 %v3462
        %v3595 = vunpack.c.l.b16 %v3463
        %v3596 = vunpack.c.l.b16 %v3464
        %v3597 = vunpack.c.l.b16 %v3465
        %v3598 = vunpack.c.l.b16 %v3466
        %v3599 = vunpack.c.l.b16 %v3467
        %v3600 = vunpack.c.l.b16 %v3468
        %v3601 = vunpack.c.l.b16 %v3469
        %v3602 = vunpack.c.l.b16 %v3470
        %v3603 = vunpack.c.l.b16 %v3471
        %v3604 = vunpack.c.l.b16 %v3472
        %v3605 = vunpack.c.l.b16 %v3473
        %v3606 = vunpack.c.l.b16 %v3474
        %v3607 = vunpack.c.l.b16 %v3475
        %v3608 = vunpack.c.l.b16 %v3476
        %v3609 = vunpack.c.l.b16 %v3477
        %v3610 = vunpack.c.l.b16 %v3478
        %v3611 = vunpack.c.l.b16 %v3479
        %v3612 = vunpack.c.l.b16 %v3480
        %v3613 = vunpack.c.l.b16 %v3481
        %v3614 = vunpack.c.l.b16 %v3482
        %v3615 = vunpack.c.l.b16 %v3483
        %v3616 = vunpack.c.l.b16 %v3484
        %v3617 = vunpack.c.l.b16 %v3485
        %v3618 = vunpack.c.l.b16 %v3486
        %v3619 = vunpack.c.l.b16 %v3487
        %v3620 = vunpack.c.l.b16 %v3488
        %v3621 = vunpack.c.l.b16 %v3489
        %v3622 = vunpack.c.l.b16 %v3490
        %v3623 = vunpack.c.l.b16 %v3491
        %v3624 = vunpack.c.l.b16 %v3492
        %v3625 = vunpack.c.l.b16 %v3493
        %v3626 = vunpack.c.l.b16 %v3494
        %v3627 = vunpack.c.l.b16 %v3495
        %v3628 = vunpack.c.l.b16 %v3496
        %v3629 = vunpack.c.l.b16 %v3497
        %v3630 = vunpack.c.l.b16 %v3498
        %v3631 = vpack.c.b16 %v3568, %v3567
        %v3632 = vpack.c.b16 %v3570, %v3569
        %v3633 = vpack.c.b16 %v3572, %v3571
        %v3634 = vpack.c.b16 %v3574, %v3573
        %v3635 = vpack.c.b16 %v3576, %v3575
        %v3636 = vpack.c.b16 %v3578, %v3577
        %v3637 = vpack.c.b16 %v3580, %v3579
        %v3638 = vpack.c.b16 %v3582, %v3581
        %v3639 = vpack.c.b16 %v3584, %v3583
        %v3640 = vpack.c.b16 %v3586, %v3585
        %v3641 = vpack.c.b16 %v3588, %v3587
        %v3642 = vpack.c.b16 %v3590, %v3589
        %v3643 = vpack.c.b16 %v3592, %v3591
        %v3644 = vpack.c.b16 %v3594, %v3593
        %v3645 = vpack.c.b16 %v3596, %v3595
        %v3646 = vpack.c.b16 %v3598, %v3597
        %v3647 = vpack.c.b16 %v3600, %v3599
        %v3648 = vpack.c.b16 %v3602, %v3601
        %v3649 = vpack.c.b16 %v3604, %v3603
        %v3650 = vpack.c.b16 %v3606, %v3605
        %v3651 = vpack.c.b16 %v3608, %v3607
        %v3652 = vpack.c.b16 %v3610, %v3609
        %v3653 = vpack.c.b16 %v3612, %v3611
        %v3654 = vpack.c.b16 %v3614, %v3613
        %v3655 = vpack.c.b16 %v3616, %v3615
        %v3656 = vpack.c.b16 %v3618, %v3617
        %v3657 = vpack.c.b16 %v3620, %v3619
        %v3658 = vpack.c.b16 %v3622, %v3621
        %v3659 = vpack.c.b16 %v3624, %v3623
        %v3660 = vpack.c.b16 %v3626, %v3625
        %v3661 = vpack.c.b16 %v3628, %v3627
        %v3662 = vpack.c.b16 %v3630, %v3629
        %3695 = vmatpush.bf16.msra.mxu0 %v3638
        %3696 = vmatpush.bf16.msra.mxu0 %v3637
        %3697 = vmatpush.bf16.msra.mxu0 %v3636
        %3698 = vmatpush.bf16.msra.mxu0 %v3635
        %3699 = vmatpush.bf16.msra.mxu0 %v3634
        %3700 = vmatpush.bf16.msra.mxu0 %v3633
        %3701 = vmatpush.bf16.msra.mxu0 %v3632
        %3702 = vmatpush.bf16.msra.mxu0 %v3631
        %3703 = vmatmul.bf16.gmra.mxu0 %v3427
        %v3704 = vpop.f32.mrf.mxu0
        %v3705 = vadd.f32 %v3501, %v3704
        %v3706 = vpop.f32.mrf.mxu0
        %v3707 = vadd.f32 %v3501, %v3706
        %3708 = vmatmul.bf16.gmra.mxu0 %v3431
        %v3709 = vpop.f32.mrf.mxu0
        %v3710 = vadd.f32 %v3501, %v3709
        %v3711 = vpop.f32.mrf.mxu0
        %v3712 = vadd.f32 %v3501, %v3711
        %3713 = vdwg.mxu0
        %3714 = vmatpush.bf16.msra.mxu0 %v3646
        %3715 = vmatpush.bf16.msra.mxu0 %v3645
        %3716 = vmatpush.bf16.msra.mxu0 %v3644
        %3717 = vmatpush.bf16.msra.mxu0 %v3643
        %3718 = vmatpush.bf16.msra.mxu0 %v3642
        %3719 = vmatpush.bf16.msra.mxu0 %v3641
        %3720 = vmatpush.bf16.msra.mxu0 %v3640
        %3721 = vmatpush.bf16.msra.mxu0 %v3639
        %3722 = vmatmul.bf16.gmra.mxu0 %v3428
        %v3723 = vpop.f32.mrf.mxu0
        %v3724 = vadd.f32 %v3705, %v3723
        %v3725 = vpop.f32.mrf.mxu0
        %v3726 = vadd.f32 %v3707, %v3725
        %3727 = vmatmul.bf16.gmra.mxu0 %v3432
        %v3728 = vpop.f32.mrf.mxu0
        %v3729 = vadd.f32 %v3710, %v3728
        %v3730 = vpop.f32.mrf.mxu0
        %v3731 = vadd.f32 %v3712, %v3730
        %3732 = vdwg.mxu0
        %3733 = vmatpush.bf16.msra.mxu0 %v3654
        %3734 = vmatpush.bf16.msra.mxu0 %v3653
        %3735 = vmatpush.bf16.msra.mxu0 %v3652
        %3736 = vmatpush.bf16.msra.mxu0 %v3651
        %3737 = vmatpush.bf16.msra.mxu0 %v3650
        %3738 = vmatpush.bf16.msra.mxu0 %v3649
        %3739 = vmatpush.bf16.msra.mxu0 %v3648
        %3740 = vmatpush.bf16.msra.mxu0 %v3647
        %3741 = vmatmul.bf16.gmra.mxu0 %v3429
        %v3742 = vpop.f32.mrf.mxu0
        %v3743 = vadd.f32 %v3724, %v3742
        %v3744 = vpop.f32.mrf.mxu0
        %v3745 = vadd.f32 %v3726, %v3744
        %3746 = vmatmul.bf16.gmra.mxu0 %v3433
        %v3747 = vpop.f32.mrf.mxu0
        %v3748 = vadd.f32 %v3729, %v3747
        %v3749 = vpop.f32.mrf.mxu0
        %v3750 = vadd.f32 %v3731, %v3749
        %3751 = vdwg.mxu0
        %3752 = vmatpush.bf16.msra.mxu0 %v3662
        %3753 = vmatpush.bf16.msra.mxu0 %v3661
        %3754 = vmatpush.bf16.msra.mxu0 %v3660
        %3755 = vmatpush.bf16.msra.mxu0 %v3659
        %3756 = vmatpush.bf16.msra.mxu0 %v3658
        %3757 = vmatpush.bf16.msra.mxu0 %v3657
        %3758 = vmatpush.bf16.msra.mxu0 %v3656
        %3759 = vmatpush.bf16.msra.mxu0 %v3655
        %3760 = vmatmul.bf16.gmra.mxu0 %v3430
        %v3761 = vpop.f32.mrf.mxu0
        %v3762 = vadd.f32 %v3743, %v3761
        %v3763 = vpop.f32.mrf.mxu0
        %v3764 = vadd.f32 %v3745, %v3763
        %3765 = vmatmul.bf16.gmra.mxu0 %v3434
        %v3766 = vpop.f32.mrf.mxu0
        %v3767 = vadd.f32 %v3748, %v3766
        %v3768 = vpop.f32.mrf.mxu0
        %v3769 = vadd.f32 %v3750, %v3768
        %3770 = vdwg.mxu0
        %3771 = vst [vmem:[%s387] sm:$0xff] %v3762
        %3772 = vst [vmem:[%s387 + $0x8] sm:$0xff] %v3764
        %3773 = vst [vmem:[%s387 + $0x10] sm:$0xff] %v3767
        %3774 = vst [vmem:[%s387 + $0x18] sm:$0xff] %v3769
        %s3775 = smul.u32 4, %s22
        %p3776 = scmp.lt.s32.totalorder %s3775, 7
        %s3777 = scalar_select %p3776, %s3775, 7
        %s3778 = smul.addr %s3777, 8
        %s3779 = scalar_lea.vmem %s9, %s3778
        // Predicated region
        $region69: #{reward_forward.1} parent=55 // pred_check
          %p3780 = pneg %p234
        $region70: #{reward_forward.1} parent=55 // pred_check_branch
          %3782 = sbr.rel (%p3780) target = $region72
        $region71: #{reward_forward.1} parent=55 // pred_region
          %s3783 = smul.u32 4, %s22
        $region72: #{reward_forward.1} parent=55 // pred_fallthru
          _
      $region56: #{reward_forward.1} parent=5 // pred_fallthru
        _
      %p3784 = scmp.le.s32.totalorder 2, %s17
      // Predicated region
      $region73: #{reward_forward.1} parent=5 // pred_check
        %p3785 = pneg %p3784
      $region74: #{reward_forward.1} parent=5 // pred_check_branch
        %3787 = sbr.rel (%p3785) target = $region76
      $region75: #{reward_forward.1} parent=5 // pred_region
        %s3788 = ssub.s32 %s17, 2
        // Predicated region
        $region77: #{reward_forward.1} parent=75 // pred_check
          %p3789 = pneg %p240
        $region78: #{reward_forward.1} parent=75 // pred_check_branch
          %3791 = sbr.rel (%p3789) target = $region80
        $region79: #{reward_forward.1} parent=75 // pred_region
          %s3792 = smul.u32 4, %s23
          %p3793 = scmp.lt.s32.totalorder %s3792, 7
          %s3794 = scalar_select %p3793, %s3792, 7
          %s3795 = smul.addr %s3794, 8
          %s3796 = scalar_lea.vmem %s9, %s3795
        $region80: #{reward_forward.1} parent=75 // pred_fallthru
          _
      $region76: #{reward_forward.1} parent=5 // pred_fallthru
        _
    $region6: #{reward_forward.1} parent=1 // loop_footer
      %s21 = sadd.s32 1, %s17
    $region7: #{reward_forward.1} parent=1 // loop_footer_branch
      %16 = sbr.rel target = $region3
    $region8: #{reward_forward.1} parent=1 // loop_exit
      _
    %3797 = vsyncpa [#allocation3], 1
    %s3798 = scalar_lea.sflag [#allocation3], 1
    %3799 = vsyncpa %s3798, 1
    %3800 = vsyncpa [#allocation5], 1

</llo_original>
